<compile_context>
chip_gen: v7x
topology: tpu7x:2x2x1
jax: 0.10.0
libtpu: 0.0.40
codegen_flags: <defaults>
</compile_context>

<pallas_src>
import numpy as np
import jax
import jax.numpy as jnp
from jax.experimental import pallas as pl
from jax.experimental.pallas import tpu as pltpu

EPS = 1e-5  # nn.InstanceNorm2d default eps


# ---------------------------------------------------------------------------
# Fused Pallas kernel (one batch element per grid step)
# ---------------------------------------------------------------------------
def _build_kernel(C, H, W, d, Wpc, Lp, compute_dtype):
    inv_cnt = 1.0 / float(H * W)

    def shift(v, off):
        # result[..., q] = v[..., (q + off) % Lp]; off is a static Python int.
        # (circular; all positions we actually consume never wrap)
        off = off % Lp
        if off == 0:
            return v
        return jnp.concatenate([v[:, off:], v[:, :off]], axis=1)

    def conv3x3(src, w_ref, step):
        # 3x3 conv with dilation `step`, expressed as 9 accumulating matmuls
        # over lane-shifted views of the flattened canvas. f32 accumulation.
        acc = None
        for ky in range(3):
            for kx in range(3):
                off = (ky - 1) * step * Wpc + (kx - 1) * step
                tap = shift(src, off).astype(compute_dtype)
                y = jnp.dot(w_ref[ky * 3 + kx], tap,
                            preferred_element_type=jnp.float32)
                acc = y if acc is None else acc + y
        return acc

    def kernel(xc_ref, kind_ref, w1_ref, w2_ref, o_ref):
        xc = xc_ref[...]        # (C, Lp) f32: reflect-padded canvas of x
        kind = kind_ref[...]    # (1, Lp) i32: canvas-cell classification
        vm = (kind == 1).astype(jnp.float32)   # interior (the H*W real pixels)

        def inst_norm(y):
            # masked one-pass InstanceNorm over the H*W interior pixels
            s1 = jnp.sum(y * vm, axis=-1, keepdims=True)
            s2 = jnp.sum(y * y * vm, axis=-1, keepdims=True)
            mean = s1 * inv_cnt
            var = s2 * inv_cnt - mean * mean
            return (y - mean) * jax.lax.rsqrt(var + EPS)

        # stage 1: Conv2d(3x3, dilation=d) -> InstanceNorm -> ReLU
        # (conv bias omitted: exactly cancelled by the IN mean subtraction)
        h = jnp.maximum(inst_norm(conv3x3(xc, w1_ref, d)), 0.0)

        # in-kernel ReflectionPad2d(1) of h: fill the 1-pixel ring of the
        # canvas with reflected interior values (rows first, then columns so
        # the corners pick up the already-filled ring rows).
        h = jnp.where(kind == 2, shift(h, 2 * Wpc), h)    # top ring    <- 2 rows below
        h = jnp.where(kind == 3, shift(h, -2 * Wpc), h)   # bottom ring <- 2 rows above
        h = jnp.where(kind == 4, shift(h, 2), h)          # left ring   <- 2 cols right
        h = jnp.where(kind == 5, shift(h, -2), h)         # right ring  <- 2 cols left

        # stage 2: Conv2d(3x3, dilation=1) -> InstanceNorm, then residual add
        y2 = inst_norm(conv3x3(h, w2_ref, 1))
        o_ref[...] = (y2 + xc).astype(o_ref.dtype)   # xc == x on interior cells

    return kernel


# ---------------------------------------------------------------------------
# Wrapper
# ---------------------------------------------------------------------------
def resnet_block_forward(x, w1, b1, w2, b2, dilation=1,
                         compute_dtype=jnp.float32):
    """x: (N, C, H, W) f32 -> (N, C, H, W) f32.

    b1/b2 are accepted to mirror the PyTorch module but are unused: a
    per-channel conv bias is exactly cancelled by InstanceNorm2d's mean
    subtraction (validated against the biased pure-JAX reference below).
    """
    del b1, b2
    N, C, H, W = x.shape
    d = int(dilation)
    assert d >= 1 and H > d and W > d and H >= 2 and W >= 2
    Hpc, Wpc = H + 2 * d, W + 2 * d          # shared canvas = reflect-pad-d(x)
    L = Hpc * Wpc
    Lp = ((L + 127) // 128) * 128            # lane-dense canvas length

    # host-side: reflect-pad x by d (cheap XLA pad), flatten into the canvas
    xp = jnp.pad(x, ((0, 0), (0, 0), (d, d), (d, d)), mode="reflect")
    xp = xp.reshape(N, C, L)
    xp = jnp.pad(xp, ((0, 0), (0, 0), (0, Lp - L)))

    # canvas-cell classification: 1 = interior (valid HxW pixels),
    # 2/3 = top/bottom reflection-ring rows, 4/5 = left/right ring columns
    # (including corners), 0 = unused padding.
    km = np.zeros((Hpc, Wpc), dtype=np.int32)
    km[d:d + H, d:d + W] = 1
    km[d - 1, d:d + W] = 2
    km[d + H, d:d + W] = 3
    km[d - 1:d + H + 1, d - 1] = 4
    km[d - 1:d + H + 1, d + W] = 5
    kind = np.zeros((1, Lp), dtype=np.int32)
    kind[0, :L] = km.reshape(-1)
    kind = jnp.asarray(kind)

    # per-tap weight matrices: (9, Cout, Cin), tap index = ky*3 + kx
    w1t = jnp.transpose(w1, (2, 3, 0, 1)).reshape(9, C, C).astype(compute_dtype)
    w2t = jnp.transpose(w2, (2, 3, 0, 1)).reshape(9, C, C).astype(compute_dtype)

    kernel = _build_kernel(C, H, W, d, Wpc, Lp, compute_dtype)

    # TODO(synk): for very large C*H*W (v7x's 64 MiB VMEM) add an HW tile axis
    # with a two-pass instance norm, and pack multiple batch images per grid
    # step when C is tiny; not needed at these sizes.
    out = pl.pallas_call(
        kernel,
        out_shape=jax.ShapeDtypeStruct((N, C, Lp), jnp.float32),
        grid=(N,),
        in_specs=[
            pl.BlockSpec((None, C, Lp), lambda n: (n, 0, 0)),   # x canvas
            pl.BlockSpec((1, Lp), lambda n: (0, 0)),            # kind map
            pl.BlockSpec((9, C, C), lambda n: (0, 0, 0)),       # w1 taps
            pl.BlockSpec((9, C, C), lambda n: (0, 0, 0)),       # w2 taps
        ],
        out_specs=pl.BlockSpec((None, C, Lp), lambda n: (n, 0, 0)),
        compiler_params=pltpu.CompilerParams(
            dimension_semantics=("parallel",),
            vmem_limit_bytes=64 * 1024 * 1024,
        ),
    )(xp, kind, w1t, w2t)

    # drop lane padding and the canvas ring: back to (N, C, H, W)
    return out[:, :, :L].reshape(N, C, Hpc, Wpc)[:, :, d:d + H, d:d + W]


# ---------------------------------------------------------------------------
# Pure-JAX reference (keeps the bias -> also validates the bias cancellation)
# ---------------------------------------------------------------------------
def _ref_forward(x, w1, b1, w2, b2, dilation=1):
    def conv(x_, w, b, dd):
        xp = jnp.pad(x_, ((0, 0), (0, 0), (dd, dd), (dd, dd)), mode="reflect")
        y = jax.lax.conv_general_dilated(
            xp, w, window_strides=(1, 1), padding="VALID",
            rhs_dilation=(dd, dd), dimension_numbers=("NCHW", "OIHW", "NCHW"))
        return y + b[None, :, None, None]

    def inorm(y):
        m = jnp.mean(y, axis=(2, 3), keepdims=True)
        v = jnp.mean((y - m) ** 2, axis=(2, 3), keepdims=True)
        return (y - m) * jax.lax.rsqrt(v + EPS)

    h = jnp.maximum(inorm(conv(x, w1, b1, dilation)), 0.0)
    return x + inorm(conv(h, w2, b2, 1))


# ---------------------------------------------------------------------------
if __name__ == "__main__":
    N, C, H, W = 2, 4, 16, 16   # dim = 4
    key = jax.random.PRNGKey(0)
    kx, kw1, kb1, kw2, kb2 = jax.random.split(key, 5)

    x = jax.random.normal(kx, (N, C, H, W), dtype=jnp.float32)

    fan_in = C * 3 * 3
    bound = 1.0 / (fan_in ** 0.5)
    w1 = jax.random.uniform(kw1, (C, C, 3, 3), jnp.float32, -bound, bound)
    b1 = jax.random.uniform(kb1, (C,), jnp.float32, -bound, bound)
    w2 = jax.random.uniform(kw2, (C, C, 3, 3), jnp.float32, -bound, bound)
    b2 = jax.random.uniform(kb2, (C,), jnp.float32, -bound, bound)

    # f32 MXU path, dilation=1
    out = jax.block_until_ready(resnet_block_forward(x, w1, b1, w2, b2, 1))
    ref = jax.block_until_ready(_ref_forward(x, w1, b1, w2, b2, 1))
    assert out.shape == (N, C, H, W)
    assert jnp.allclose(out, ref, atol=1e-4, rtol=1e-4), "f32 d=1 mismatch"

    # f32 path, dilation=2 (exercises the d>1 canvas geometry)
    out2 = jax.block_until_ready(resnet_block_forward(x, w1, b1, w2, b2, 2))
    ref2 = jax.block_until_ready(_ref_forward(x, w1, b1, w2, b2, 2))
    assert jnp.allclose(out2, ref2, atol=1e-4, rtol=1e-4), "f32 d=2 mismatch"

    # bf16 MXU inputs (v6e/v7x fast path); accumulation / IN stay in f32
    out_bf16 = jax.block_until_ready(
        resnet_block_forward(x, w1, b1, w2, b2, 1, compute_dtype=jnp.bfloat16))
    assert jnp.allclose(out_bf16, ref, atol=1e-1, rtol=1e-1), "bf16 mismatch"

    print("KERNEL_OK")
</pallas_src>

<mosaic_0001>
module attributes {stable_mosaic.version = 11 : i64} {
  func.func @kernel(%arg0: i32, %arg1: memref<1x4x384xf32, #tpu.memory_space<vmem>>, %arg2: memref<1x384xi32, #tpu.memory_space<vmem>>, %arg3: memref<9x4x4xf32, #tpu.memory_space<vmem>>, %arg4: memref<9x4x4xf32, #tpu.memory_space<vmem>>, %arg5: memref<1x4x384xf32, #tpu.memory_space<vmem>>) attributes {dimension_semantics = [#tpu.dimension_semantics<parallel>], iteration_bounds = array<i64: 2>, scalar_prefetch = 0 : i64, scratch_operands = 0 : i64, tpu.core_type = #tpu.core_type<tc>, window_params = [{transform_indices = @transform_0, window_bounds = array<i64: 1, 4, 384>}, {pipeline_mode = #tpu.pipeline_mode<synchronous>, transform_indices = @transform_1, window_bounds = array<i64: 1, 384>}, {pipeline_mode = #tpu.pipeline_mode<synchronous>, transform_indices = @transform_2, window_bounds = array<i64: 9, 4, 4>}, {pipeline_mode = #tpu.pipeline_mode<synchronous>, transform_indices = @transform_3, window_bounds = array<i64: 9, 4, 4>}, {transform_indices = @transform_4, window_bounds = array<i64: 1, 4, 384>}]} {
    %c0 = arith.constant 0 : index
    %c0_0 = arith.constant 0 : index
    %c0_1 = arith.constant 0 : index
    %0 = vector.load %arg1[%c0, %c0_0, %c0_1] : memref<1x4x384xf32, #tpu.memory_space<vmem>>, vector<1x4x384xf32>
    %1 = vector.shape_cast %0 : vector<1x4x384xf32> to vector<4x384xf32>
    %c0_2 = arith.constant 0 : index
    %c0_3 = arith.constant 0 : index
    %2 = vector.load %arg2[%c0_2, %c0_3] : memref<1x384xi32, #tpu.memory_space<vmem>>, vector<1x384xi32>
    %c1_i32 = arith.constant 1 : i32
    %3 = vector.broadcast %c1_i32 : i32 to vector<1x384xi32>
    %4 = arith.cmpi eq, %2, %3 : vector<1x384xi32>
    %5 = arith.extui %4 : vector<1x384xi1> to vector<1x384xi32>
    %6 = arith.sitofp %5 : vector<1x384xi32> to vector<1x384xf32>
    %7 = vector.extract_strided_slice %1 {offsets = [0, 365], sizes = [4, 19], strides = [1, 1]} : vector<4x384xf32> to vector<4x19xf32>
    %8 = vector.extract_strided_slice %1 {offsets = [0, 0], sizes = [4, 365], strides = [1, 1]} : vector<4x384xf32> to vector<4x365xf32>
    %9 = tpu.concatenate %7, %8 in 1 : vector<4x19xf32>, vector<4x365xf32> -> vector<4x384xf32>
    %c0_4 = arith.constant 0 : index
    %c0_5 = arith.constant 0 : index
    %c0_6 = arith.constant 0 : index
    %10 = vector.load %arg3[%c0_4, %c0_5, %c0_6] : memref<9x4x4xf32, #tpu.memory_space<vmem>>, vector<1x4x4xf32>
    %11 = vector.shape_cast %10 : vector<1x4x4xf32> to vector<4x4xf32>
    %cst = arith.constant dense<0.000000e+00> : vector<4x384xf32>
    %12 = tpu.matmul %11, %9, %cst {dimension_numbers = #tpu.dot_dimension_numbers<[1], [0], [0], [1], [0, 0, 1, 1], [], []>} : vector<4x4xf32>, vector<4x384xf32>, vector<4x384xf32> -> vector<4x384xf32>
    %13 = vector.extract_strided_slice %1 {offsets = [0, 366], sizes = [4, 18], strides = [1, 1]} : vector<4x384xf32> to vector<4x18xf32>
    %14 = vector.extract_strided_slice %1 {offsets = [0, 0], sizes = [4, 366], strides = [1, 1]} : vector<4x384xf32> to vector<4x366xf32>
    %15 = tpu.concatenate %13, %14 in 1 : vector<4x18xf32>, vector<4x366xf32> -> vector<4x384xf32>
    %c1 = arith.constant 1 : index
    %c0_7 = arith.constant 0 : index
    %c0_8 = arith.constant 0 : index
    %16 = vector.load %arg3[%c1, %c0_7, %c0_8] : memref<9x4x4xf32, #tpu.memory_space<vmem>>, vector<1x4x4xf32>
    %17 = vector.shape_cast %16 : vector<1x4x4xf32> to vector<4x4xf32>
    %cst_9 = arith.constant dense<0.000000e+00> : vector<4x384xf32>
    %18 = tpu.matmul %17, %15, %cst_9 {dimension_numbers = #tpu.dot_dimension_numbers<[1], [0], [0], [1], [0, 0, 1, 1], [], []>} : vector<4x4xf32>, vector<4x384xf32>, vector<4x384xf32> -> vector<4x384xf32>
    %19 = arith.addf %12, %18 : vector<4x384xf32>
    %20 = vector.extract_strided_slice %1 {offsets = [0, 367], sizes = [4, 17], strides = [1, 1]} : vector<4x384xf32> to vector<4x17xf32>
    %21 = vector.extract_strided_slice %1 {offsets = [0, 0], sizes = [4, 367], strides = [1, 1]} : vector<4x384xf32> to vector<4x367xf32>
    %22 = tpu.concatenate %20, %21 in 1 : vector<4x17xf32>, vector<4x367xf32> -> vector<4x384xf32>
    %c2 = arith.constant 2 : index
    %c0_10 = arith.constant 0 : index
    %c0_11 = arith.constant 0 : index
    %23 = vector.load %arg3[%c2, %c0_10, %c0_11] : memref<9x4x4xf32, #tpu.memory_space<vmem>>, vector<1x4x4xf32>
    %24 = vector.shape_cast %23 : vector<1x4x4xf32> to vector<4x4xf32>
    %cst_12 = arith.constant dense<0.000000e+00> : vector<4x384xf32>
    %25 = tpu.matmul %24, %22, %cst_12 {dimension_numbers = #tpu.dot_dimension_numbers<[1], [0], [0], [1], [0, 0, 1, 1], [], []>} : vector<4x4xf32>, vector<4x384xf32>, vector<4x384xf32> -> vector<4x384xf32>
    %26 = arith.addf %19, %25 : vector<4x384xf32>
    %27 = vector.extract_strided_slice %1 {offsets = [0, 383], sizes = [4, 1], strides = [1, 1]} : vector<4x384xf32> to vector<4x1xf32>
    %28 = vector.extract_strided_slice %1 {offsets = [0, 0], sizes = [4, 383], strides = [1, 1]} : vector<4x384xf32> to vector<4x383xf32>
    %29 = tpu.concatenate %27, %28 in 1 : vector<4x1xf32>, vector<4x383xf32> -> vector<4x384xf32>
    %c3 = arith.constant 3 : index
    %c0_13 = arith.constant 0 : index
    %c0_14 = arith.constant 0 : index
    %30 = vector.load %arg3[%c3, %c0_13, %c0_14] : memref<9x4x4xf32, #tpu.memory_space<vmem>>, vector<1x4x4xf32>
    %31 = vector.shape_cast %30 : vector<1x4x4xf32> to vector<4x4xf32>
    %cst_15 = arith.constant dense<0.000000e+00> : vector<4x384xf32>
    %32 = tpu.matmul %31, %29, %cst_15 {dimension_numbers = #tpu.dot_dimension_numbers<[1], [0], [0], [1], [0, 0, 1, 1], [], []>} : vector<4x4xf32>, vector<4x384xf32>, vector<4x384xf32> -> vector<4x384xf32>
    %33 = arith.addf %26, %32 : vector<4x384xf32>
    %c4 = arith.constant 4 : index
    %c0_16 = arith.constant 0 : index
    %c0_17 = arith.constant 0 : index
    %34 = vector.load %arg3[%c4, %c0_16, %c0_17] : memref<9x4x4xf32, #tpu.memory_space<vmem>>, vector<1x4x4xf32>
    %35 = vector.shape_cast %34 : vector<1x4x4xf32> to vector<4x4xf32>
    %cst_18 = arith.constant dense<0.000000e+00> : vector<4x384xf32>
    %36 = tpu.matmul %35, %1, %cst_18 {dimension_numbers = #tpu.dot_dimension_numbers<[1], [0], [0], [1], [0, 0, 1, 1], [], []>} : vector<4x4xf32>, vector<4x384xf32>, vector<4x384xf32> -> vector<4x384xf32>
    %37 = arith.addf %33, %36 : vector<4x384xf32>
    %38 = vector.extract_strided_slice %1 {offsets = [0, 1], sizes = [4, 383], strides = [1, 1]} : vector<4x384xf32> to vector<4x383xf32>
    %39 = vector.extract_strided_slice %1 {offsets = [0, 0], sizes = [4, 1], strides = [1, 1]} : vector<4x384xf32> to vector<4x1xf32>
    %40 = tpu.concatenate %38, %39 in 1 : vector<4x383xf32>, vector<4x1xf32> -> vector<4x384xf32>
    %c5 = arith.constant 5 : index
    %c0_19 = arith.constant 0 : index
    %c0_20 = arith.constant 0 : index
    %41 = vector.load %arg3[%c5, %c0_19, %c0_20] : memref<9x4x4xf32, #tpu.memory_space<vmem>>, vector<1x4x4xf32>
    %42 = vector.shape_cast %41 : vector<1x4x4xf32> to vector<4x4xf32>
    %cst_21 = arith.constant dense<0.000000e+00> : vector<4x384xf32>
    %43 = tpu.matmul %42, %40, %cst_21 {dimension_numbers = #tpu.dot_dimension_numbers<[1], [0], [0], [1], [0, 0, 1, 1], [], []>} : vector<4x4xf32>, vector<4x384xf32>, vector<4x384xf32> -> vector<4x384xf32>
    %44 = arith.addf %37, %43 : vector<4x384xf32>
    %45 = vector.extract_strided_slice %1 {offsets = [0, 17], sizes = [4, 367], strides = [1, 1]} : vector<4x384xf32> to vector<4x367xf32>
    %46 = vector.extract_strided_slice %1 {offsets = [0, 0], sizes = [4, 17], strides = [1, 1]} : vector<4x384xf32> to vector<4x17xf32>
    %47 = tpu.concatenate %45, %46 in 1 : vector<4x367xf32>, vector<4x17xf32> -> vector<4x384xf32>
    %c6 = arith.constant 6 : index
    %c0_22 = arith.constant 0 : index
    %c0_23 = arith.constant 0 : index
    %48 = vector.load %arg3[%c6, %c0_22, %c0_23] : memref<9x4x4xf32, #tpu.memory_space<vmem>>, vector<1x4x4xf32>
    %49 = vector.shape_cast %48 : vector<1x4x4xf32> to vector<4x4xf32>
    %cst_24 = arith.constant dense<0.000000e+00> : vector<4x384xf32>
    %50 = tpu.matmul %49, %47, %cst_24 {dimension_numbers = #tpu.dot_dimension_numbers<[1], [0], [0], [1], [0, 0, 1, 1], [], []>} : vector<4x4xf32>, vector<4x384xf32>, vector<4x384xf32> -> vector<4x384xf32>
    %51 = arith.addf %44, %50 : vector<4x384xf32>
    %52 = vector.extract_strided_slice %1 {offsets = [0, 18], sizes = [4, 366], strides = [1, 1]} : vector<4x384xf32> to vector<4x366xf32>
    %53 = vector.extract_strided_slice %1 {offsets = [0, 0], sizes = [4, 18], strides = [1, 1]} : vector<4x384xf32> to vector<4x18xf32>
    %54 = tpu.concatenate %52, %53 in 1 : vector<4x366xf32>, vector<4x18xf32> -> vector<4x384xf32>
    %c7 = arith.constant 7 : index
    %c0_25 = arith.constant 0 : index
    %c0_26 = arith.constant 0 : index
    %55 = vector.load %arg3[%c7, %c0_25, %c0_26] : memref<9x4x4xf32, #tpu.memory_space<vmem>>, vector<1x4x4xf32>
    %56 = vector.shape_cast %55 : vector<1x4x4xf32> to vector<4x4xf32>
    %cst_27 = arith.constant dense<0.000000e+00> : vector<4x384xf32>
    %57 = tpu.matmul %56, %54, %cst_27 {dimension_numbers = #tpu.dot_dimension_numbers<[1], [0], [0], [1], [0, 0, 1, 1], [], []>} : vector<4x4xf32>, vector<4x384xf32>, vector<4x384xf32> -> vector<4x384xf32>
    %58 = arith.addf %51, %57 : vector<4x384xf32>
    %59 = vector.extract_strided_slice %1 {offsets = [0, 19], sizes = [4, 365], strides = [1, 1]} : vector<4x384xf32> to vector<4x365xf32>
    %60 = vector.extract_strided_slice %1 {offsets = [0, 0], sizes = [4, 19], strides = [1, 1]} : vector<4x384xf32> to vector<4x19xf32>
    %61 = tpu.concatenate %59, %60 in 1 : vector<4x365xf32>, vector<4x19xf32> -> vector<4x384xf32>
    %c8 = arith.constant 8 : index
    %c0_28 = arith.constant 0 : index
    %c0_29 = arith.constant 0 : index
    %62 = vector.load %arg3[%c8, %c0_28, %c0_29] : memref<9x4x4xf32, #tpu.memory_space<vmem>>, vector<1x4x4xf32>
    %63 = vector.shape_cast %62 : vector<1x4x4xf32> to vector<4x4xf32>
    %cst_30 = arith.constant dense<0.000000e+00> : vector<4x384xf32>
    %64 = tpu.matmul %63, %61, %cst_30 {dimension_numbers = #tpu.dot_dimension_numbers<[1], [0], [0], [1], [0, 0, 1, 1], [], []>} : vector<4x4xf32>, vector<4x384xf32>, vector<4x384xf32> -> vector<4x384xf32>
    %65 = arith.addf %58, %64 : vector<4x384xf32>
    %66 = vector.broadcast %6 : vector<1x384xf32> to vector<4x384xf32>
    %67 = arith.mulf %65, %66 : vector<4x384xf32>
    %cst_31 = arith.constant dense<0.000000e+00> : vector<4xf32>
    %68 = vector.multi_reduction <add>, %67, %cst_31 [1] : vector<4x384xf32> to vector<4xf32>
    %69 = vector.shape_cast %68 : vector<4xf32> to vector<4x1xf32>
    %70 = arith.mulf %65, %65 : vector<4x384xf32>
    %71 = vector.broadcast %6 : vector<1x384xf32> to vector<4x384xf32>
    %72 = arith.mulf %70, %71 : vector<4x384xf32>
    %cst_32 = arith.constant dense<0.000000e+00> : vector<4xf32>
    %73 = vector.multi_reduction <add>, %72, %cst_32 [1] : vector<4x384xf32> to vector<4xf32>
    %74 = vector.shape_cast %73 : vector<4xf32> to vector<4x1xf32>
    %cst_33 = arith.constant 3.906250e-03 : f32
    %75 = vector.broadcast %cst_33 : f32 to vector<4x1xf32>
    %76 = arith.mulf %69, %75 : vector<4x1xf32>
    %cst_34 = arith.constant 3.906250e-03 : f32
    %77 = vector.broadcast %cst_34 : f32 to vector<4x1xf32>
    %78 = arith.mulf %74, %77 : vector<4x1xf32>
    %79 = arith.mulf %76, %76 : vector<4x1xf32>
    %80 = arith.subf %78, %79 : vector<4x1xf32>
    %81 = vector.broadcast %76 : vector<4x1xf32> to vector<4x384xf32>
    %82 = arith.subf %65, %81 : vector<4x384xf32>
    %cst_35 = arith.constant 9.99999974E-6 : f32
    %83 = vector.broadcast %cst_35 : f32 to vector<4x1xf32>
    %84 = arith.addf %80, %83 : vector<4x1xf32>
    %85 = math.rsqrt %84 : vector<4x1xf32>
    %86 = vector.broadcast %85 : vector<4x1xf32> to vector<4x384xf32>
    %87 = arith.mulf %82, %86 : vector<4x384xf32>
    %cst_36 = arith.constant 0.000000e+00 : f32
    %88 = vector.broadcast %cst_36 : f32 to vector<4x384xf32>
    %89 = arith.maximumf %87, %88 : vector<4x384xf32>
    %c2_i32 = arith.constant 2 : i32
    %90 = vector.broadcast %c2_i32 : i32 to vector<1x384xi32>
    %91 = arith.cmpi eq, %2, %90 : vector<1x384xi32>
    %92 = vector.extract_strided_slice %89 {offsets = [0, 36], sizes = [4, 348], strides = [1, 1]} : vector<4x384xf32> to vector<4x348xf32>
    %93 = vector.extract_strided_slice %89 {offsets = [0, 0], sizes = [4, 36], strides = [1, 1]} : vector<4x384xf32> to vector<4x36xf32>
    %94 = tpu.concatenate %92, %93 in 1 : vector<4x348xf32>, vector<4x36xf32> -> vector<4x384xf32>
    %95 = vector.shape_cast %91 : vector<1x384xi1> to vector<1x384xi1>
    %96 = vector.broadcast %95 : vector<1x384xi1> to vector<4x384xi1>
    %97 = arith.select %96, %94, %89 : vector<4x384xi1>, vector<4x384xf32>
    %c3_i32 = arith.constant 3 : i32
    %98 = vector.broadcast %c3_i32 : i32 to vector<1x384xi32>
    %99 = arith.cmpi eq, %2, %98 : vector<1x384xi32>
    %100 = vector.extract_strided_slice %97 {offsets = [0, 348], sizes = [4, 36], strides = [1, 1]} : vector<4x384xf32> to vector<4x36xf32>
    %101 = vector.extract_strided_slice %97 {offsets = [0, 0], sizes = [4, 348], strides = [1, 1]} : vector<4x384xf32> to vector<4x348xf32>
    %102 = tpu.concatenate %100, %101 in 1 : vector<4x36xf32>, vector<4x348xf32> -> vector<4x384xf32>
    %103 = vector.shape_cast %99 : vector<1x384xi1> to vector<1x384xi1>
    %104 = vector.broadcast %103 : vector<1x384xi1> to vector<4x384xi1>
    %105 = arith.select %104, %102, %97 : vector<4x384xi1>, vector<4x384xf32>
    %c4_i32 = arith.constant 4 : i32
    %106 = vector.broadcast %c4_i32 : i32 to vector<1x384xi32>
    %107 = arith.cmpi eq, %2, %106 : vector<1x384xi32>
    %108 = vector.extract_strided_slice %105 {offsets = [0, 2], sizes = [4, 382], strides = [1, 1]} : vector<4x384xf32> to vector<4x382xf32>
    %109 = vector.extract_strided_slice %105 {offsets = [0, 0], sizes = [4, 2], strides = [1, 1]} : vector<4x384xf32> to vector<4x2xf32>
    %110 = tpu.concatenate %108, %109 in 1 : vector<4x382xf32>, vector<4x2xf32> -> vector<4x384xf32>
    %111 = vector.shape_cast %107 : vector<1x384xi1> to vector<1x384xi1>
    %112 = vector.broadcast %111 : vector<1x384xi1> to vector<4x384xi1>
    %113 = arith.select %112, %110, %105 : vector<4x384xi1>, vector<4x384xf32>
    %c5_i32 = arith.constant 5 : i32
    %114 = vector.broadcast %c5_i32 : i32 to vector<1x384xi32>
    %115 = arith.cmpi eq, %2, %114 : vector<1x384xi32>
    %116 = vector.extract_strided_slice %113 {offsets = [0, 382], sizes = [4, 2], strides = [1, 1]} : vector<4x384xf32> to vector<4x2xf32>
    %117 = vector.extract_strided_slice %113 {offsets = [0, 0], sizes = [4, 382], strides = [1, 1]} : vector<4x384xf32> to vector<4x382xf32>
    %118 = tpu.concatenate %116, %117 in 1 : vector<4x2xf32>, vector<4x382xf32> -> vector<4x384xf32>
    %119 = vector.shape_cast %115 : vector<1x384xi1> to vector<1x384xi1>
    %120 = vector.broadcast %119 : vector<1x384xi1> to vector<4x384xi1>
    %121 = arith.select %120, %118, %113 : vector<4x384xi1>, vector<4x384xf32>
    %122 = vector.extract_strided_slice %121 {offsets = [0, 365], sizes = [4, 19], strides = [1, 1]} : vector<4x384xf32> to vector<4x19xf32>
    %123 = vector.extract_strided_slice %121 {offsets = [0, 0], sizes = [4, 365], strides = [1, 1]} : vector<4x384xf32> to vector<4x365xf32>
    %124 = tpu.concatenate %122, %123 in 1 : vector<4x19xf32>, vector<4x365xf32> -> vector<4x384xf32>
    %c0_37 = arith.constant 0 : index
    %c0_38 = arith.constant 0 : index
    %c0_39 = arith.constant 0 : index
    %125 = vector.load %arg4[%c0_37, %c0_38, %c0_39] : memref<9x4x4xf32, #tpu.memory_space<vmem>>, vector<1x4x4xf32>
    %126 = vector.shape_cast %125 : vector<1x4x4xf32> to vector<4x4xf32>
    %cst_40 = arith.constant dense<0.000000e+00> : vector<4x384xf32>
    %127 = tpu.matmul %126, %124, %cst_40 {dimension_numbers = #tpu.dot_dimension_numbers<[1], [0], [0], [1], [0, 0, 1, 1], [], []>} : vector<4x4xf32>, vector<4x384xf32>, vector<4x384xf32> -> vector<4x384xf32>
    %128 = vector.extract_strided_slice %121 {offsets = [0, 366], sizes = [4, 18], strides = [1, 1]} : vector<4x384xf32> to vector<4x18xf32>
    %129 = vector.extract_strided_slice %121 {offsets = [0, 0], sizes = [4, 366], strides = [1, 1]} : vector<4x384xf32> to vector<4x366xf32>
    %130 = tpu.concatenate %128, %129 in 1 : vector<4x18xf32>, vector<4x366xf32> -> vector<4x384xf32>
    %c1_41 = arith.constant 1 : index
    %c0_42 = arith.constant 0 : index
    %c0_43 = arith.constant 0 : index
    %131 = vector.load %arg4[%c1_41, %c0_42, %c0_43] : memref<9x4x4xf32, #tpu.memory_space<vmem>>, vector<1x4x4xf32>
    %132 = vector.shape_cast %131 : vector<1x4x4xf32> to vector<4x4xf32>
    %cst_44 = arith.constant dense<0.000000e+00> : vector<4x384xf32>
    %133 = tpu.matmul %132, %130, %cst_44 {dimension_numbers = #tpu.dot_dimension_numbers<[1], [0], [0], [1], [0, 0, 1, 1], [], []>} : vector<4x4xf32>, vector<4x384xf32>, vector<4x384xf32> -> vector<4x384xf32>
    %134 = arith.addf %127, %133 : vector<4x384xf32>
    %135 = vector.extract_strided_slice %121 {offsets = [0, 367], sizes = [4, 17], strides = [1, 1]} : vector<4x384xf32> to vector<4x17xf32>
    %136 = vector.extract_strided_slice %121 {offsets = [0, 0], sizes = [4, 367], strides = [1, 1]} : vector<4x384xf32> to vector<4x367xf32>
    %137 = tpu.concatenate %135, %136 in 1 : vector<4x17xf32>, vector<4x367xf32> -> vector<4x384xf32>
    %c2_45 = arith.constant 2 : index
    %c0_46 = arith.constant 0 : index
    %c0_47 = arith.constant 0 : index
    %138 = vector.load %arg4[%c2_45, %c0_46, %c0_47] : memref<9x4x4xf32, #tpu.memory_space<vmem>>, vector<1x4x4xf32>
    %139 = vector.shape_cast %138 : vector<1x4x4xf32> to vector<4x4xf32>
    %cst_48 = arith.constant dense<0.000000e+00> : vector<4x384xf32>
    %140 = tpu.matmul %139, %137, %cst_48 {dimension_numbers = #tpu.dot_dimension_numbers<[1], [0], [0], [1], [0, 0, 1, 1], [], []>} : vector<4x4xf32>, vector<4x384xf32>, vector<4x384xf32> -> vector<4x384xf32>
    %141 = arith.addf %134, %140 : vector<4x384xf32>
    %142 = vector.extract_strided_slice %121 {offsets = [0, 383], sizes = [4, 1], strides = [1, 1]} : vector<4x384xf32> to vector<4x1xf32>
    %143 = vector.extract_strided_slice %121 {offsets = [0, 0], sizes = [4, 383], strides = [1, 1]} : vector<4x384xf32> to vector<4x383xf32>
    %144 = tpu.concatenate %142, %143 in 1 : vector<4x1xf32>, vector<4x383xf32> -> vector<4x384xf32>
    %c3_49 = arith.constant 3 : index
    %c0_50 = arith.constant 0 : index
    %c0_51 = arith.constant 0 : index
    %145 = vector.load %arg4[%c3_49, %c0_50, %c0_51] : memref<9x4x4xf32, #tpu.memory_space<vmem>>, vector<1x4x4xf32>
    %146 = vector.shape_cast %145 : vector<1x4x4xf32> to vector<4x4xf32>
    %cst_52 = arith.constant dense<0.000000e+00> : vector<4x384xf32>
    %147 = tpu.matmul %146, %144, %cst_52 {dimension_numbers = #tpu.dot_dimension_numbers<[1], [0], [0], [1], [0, 0, 1, 1], [], []>} : vector<4x4xf32>, vector<4x384xf32>, vector<4x384xf32> -> vector<4x384xf32>
    %148 = arith.addf %141, %147 : vector<4x384xf32>
    %c4_53 = arith.constant 4 : index
    %c0_54 = arith.constant 0 : index
    %c0_55 = arith.constant 0 : index
    %149 = vector.load %arg4[%c4_53, %c0_54, %c0_55] : memref<9x4x4xf32, #tpu.memory_space<vmem>>, vector<1x4x4xf32>
    %150 = vector.shape_cast %149 : vector<1x4x4xf32> to vector<4x4xf32>
    %cst_56 = arith.constant dense<0.000000e+00> : vector<4x384xf32>
    %151 = tpu.matmul %150, %121, %cst_56 {dimension_numbers = #tpu.dot_dimension_numbers<[1], [0], [0], [1], [0, 0, 1, 1], [], []>} : vector<4x4xf32>, vector<4x384xf32>, vector<4x384xf32> -> vector<4x384xf32>
    %152 = arith.addf %148, %151 : vector<4x384xf32>
    %153 = vector.extract_strided_slice %121 {offsets = [0, 1], sizes = [4, 383], strides = [1, 1]} : vector<4x384xf32> to vector<4x383xf32>
    %154 = vector.extract_strided_slice %121 {offsets = [0, 0], sizes = [4, 1], strides = [1, 1]} : vector<4x384xf32> to vector<4x1xf32>
    %155 = tpu.concatenate %153, %154 in 1 : vector<4x383xf32>, vector<4x1xf32> -> vector<4x384xf32>
    %c5_57 = arith.constant 5 : index
    %c0_58 = arith.constant 0 : index
    %c0_59 = arith.constant 0 : index
    %156 = vector.load %arg4[%c5_57, %c0_58, %c0_59] : memref<9x4x4xf32, #tpu.memory_space<vmem>>, vector<1x4x4xf32>
    %157 = vector.shape_cast %156 : vector<1x4x4xf32> to vector<4x4xf32>
    %cst_60 = arith.constant dense<0.000000e+00> : vector<4x384xf32>
    %158 = tpu.matmul %157, %155, %cst_60 {dimension_numbers = #tpu.dot_dimension_numbers<[1], [0], [0], [1], [0, 0, 1, 1], [], []>} : vector<4x4xf32>, vector<4x384xf32>, vector<4x384xf32> -> vector<4x384xf32>
    %159 = arith.addf %152, %158 : vector<4x384xf32>
    %160 = vector.extract_strided_slice %121 {offsets = [0, 17], sizes = [4, 367], strides = [1, 1]} : vector<4x384xf32> to vector<4x367xf32>
    %161 = vector.extract_strided_slice %121 {offsets = [0, 0], sizes = [4, 17], strides = [1, 1]} : vector<4x384xf32> to vector<4x17xf32>
    %162 = tpu.concatenate %160, %161 in 1 : vector<4x367xf32>, vector<4x17xf32> -> vector<4x384xf32>
    %c6_61 = arith.constant 6 : index
    %c0_62 = arith.constant 0 : index
    %c0_63 = arith.constant 0 : index
    %163 = vector.load %arg4[%c6_61, %c0_62, %c0_63] : memref<9x4x4xf32, #tpu.memory_space<vmem>>, vector<1x4x4xf32>
    %164 = vector.shape_cast %163 : vector<1x4x4xf32> to vector<4x4xf32>
    %cst_64 = arith.constant dense<0.000000e+00> : vector<4x384xf32>
    %165 = tpu.matmul %164, %162, %cst_64 {dimension_numbers = #tpu.dot_dimension_numbers<[1], [0], [0], [1], [0, 0, 1, 1], [], []>} : vector<4x4xf32>, vector<4x384xf32>, vector<4x384xf32> -> vector<4x384xf32>
    %166 = arith.addf %159, %165 : vector<4x384xf32>
    %167 = vector.extract_strided_slice %121 {offsets = [0, 18], sizes = [4, 366], strides = [1, 1]} : vector<4x384xf32> to vector<4x366xf32>
    %168 = vector.extract_strided_slice %121 {offsets = [0, 0], sizes = [4, 18], strides = [1, 1]} : vector<4x384xf32> to vector<4x18xf32>
    %169 = tpu.concatenate %167, %168 in 1 : vector<4x366xf32>, vector<4x18xf32> -> vector<4x384xf32>
    %c7_65 = arith.constant 7 : index
    %c0_66 = arith.constant 0 : index
    %c0_67 = arith.constant 0 : index
    %170 = vector.load %arg4[%c7_65, %c0_66, %c0_67] : memref<9x4x4xf32, #tpu.memory_space<vmem>>, vector<1x4x4xf32>
    %171 = vector.shape_cast %170 : vector<1x4x4xf32> to vector<4x4xf32>
    %cst_68 = arith.constant dense<0.000000e+00> : vector<4x384xf32>
    %172 = tpu.matmul %171, %169, %cst_68 {dimension_numbers = #tpu.dot_dimension_numbers<[1], [0], [0], [1], [0, 0, 1, 1], [], []>} : vector<4x4xf32>, vector<4x384xf32>, vector<4x384xf32> -> vector<4x384xf32>
    %173 = arith.addf %166, %172 : vector<4x384xf32>
    %174 = vector.extract_strided_slice %121 {offsets = [0, 19], sizes = [4, 365], strides = [1, 1]} : vector<4x384xf32> to vector<4x365xf32>
    %175 = vector.extract_strided_slice %121 {offsets = [0, 0], sizes = [4, 19], strides = [1, 1]} : vector<4x384xf32> to vector<4x19xf32>
    %176 = tpu.concatenate %174, %175 in 1 : vector<4x365xf32>, vector<4x19xf32> -> vector<4x384xf32>
    %c8_69 = arith.constant 8 : index
    %c0_70 = arith.constant 0 : index
    %c0_71 = arith.constant 0 : index
    %177 = vector.load %arg4[%c8_69, %c0_70, %c0_71] : memref<9x4x4xf32, #tpu.memory_space<vmem>>, vector<1x4x4xf32>
    %178 = vector.shape_cast %177 : vector<1x4x4xf32> to vector<4x4xf32>
    %cst_72 = arith.constant dense<0.000000e+00> : vector<4x384xf32>
    %179 = tpu.matmul %178, %176, %cst_72 {dimension_numbers = #tpu.dot_dimension_numbers<[1], [0], [0], [1], [0, 0, 1, 1], [], []>} : vector<4x4xf32>, vector<4x384xf32>, vector<4x384xf32> -> vector<4x384xf32>
    %180 = arith.addf %173, %179 : vector<4x384xf32>
    %181 = vector.broadcast %6 : vector<1x384xf32> to vector<4x384xf32>
    %182 = arith.mulf %180, %181 : vector<4x384xf32>
    %cst_73 = arith.constant dense<0.000000e+00> : vector<4xf32>
    %183 = vector.multi_reduction <add>, %182, %cst_73 [1] : vector<4x384xf32> to vector<4xf32>
    %184 = vector.shape_cast %183 : vector<4xf32> to vector<4x1xf32>
    %185 = arith.mulf %180, %180 : vector<4x384xf32>
    %186 = vector.broadcast %6 : vector<1x384xf32> to vector<4x384xf32>
    %187 = arith.mulf %185, %186 : vector<4x384xf32>
    %cst_74 = arith.constant dense<0.000000e+00> : vector<4xf32>
    %188 = vector.multi_reduction <add>, %187, %cst_74 [1] : vector<4x384xf32> to vector<4xf32>
    %189 = vector.shape_cast %188 : vector<4xf32> to vector<4x1xf32>
    %cst_75 = arith.constant 3.906250e-03 : f32
    %190 = vector.broadcast %cst_75 : f32 to vector<4x1xf32>
    %191 = arith.mulf %184, %190 : vector<4x1xf32>
    %cst_76 = arith.constant 3.906250e-03 : f32
    %192 = vector.broadcast %cst_76 : f32 to vector<4x1xf32>
    %193 = arith.mulf %189, %192 : vector<4x1xf32>
    %194 = arith.mulf %191, %191 : vector<4x1xf32>
    %195 = arith.subf %193, %194 : vector<4x1xf32>
    %196 = vector.broadcast %191 : vector<4x1xf32> to vector<4x384xf32>
    %197 = arith.subf %180, %196 : vector<4x384xf32>
    %cst_77 = arith.constant 9.99999974E-6 : f32
    %198 = vector.broadcast %cst_77 : f32 to vector<4x1xf32>
    %199 = arith.addf %195, %198 : vector<4x1xf32>
    %200 = math.rsqrt %199 : vector<4x1xf32>
    %201 = vector.broadcast %200 : vector<4x1xf32> to vector<4x384xf32>
    %202 = arith.mulf %197, %201 : vector<4x384xf32>
    %203 = arith.addf %202, %1 : vector<4x384xf32>
    %c0_78 = arith.constant 0 : index
    %c0_79 = arith.constant 0 : index
    %c0_80 = arith.constant 0 : index
    %204 = vector.load %arg5[%c0_78, %c0_79, %c0_80] : memref<1x4x384xf32, #tpu.memory_space<vmem>>, vector<1x4x384xf32>
    %205 = vector.shape_cast %204 : vector<1x4x384xf32> to vector<4x384xf32>
    %206 = vector.shape_cast %203 : vector<4x384xf32> to vector<1x4x384xf32>
    tpu.vector_store %arg5[%c0_78, %c0_79, %c0_80], %206 {strides = array<i32>} : memref<1x4x384xf32, #tpu.memory_space<vmem>>, vector<1x4x384xf32>,
    return
  }
  func.func @transform_0(%arg0: i32) -> (i32, i32, i32) {
    %c0_i32 = arith.constant 0 : i32
    %c0_i32_0 = arith.constant 0 : i32
    %c0_i32_1 = arith.constant 0 : i32
    return %arg0, %c0_i32, %c0_i32_0 : i32, i32, i32
  }
  func.func @transform_1(%arg0: i32) -> (i32, i32) {
    %c0_i32 = arith.constant 0 : i32
    %c0_i32_0 = arith.constant 0 : i32
    %c0_i32_1 = arith.constant 0 : i32
    return %c0_i32, %c0_i32_0 : i32, i32
  }
  func.func @transform_2(%arg0: i32) -> (i32, i32, i32) {
    %c0_i32 = arith.constant 0 : i32
    %c0_i32_0 = arith.constant 0 : i32
    %c0_i32_1 = arith.constant 0 : i32
    %c0_i32_2 = arith.constant 0 : i32
    return %c0_i32, %c0_i32_0, %c0_i32_1 : i32, i32, i32
  }
  func.func @transform_3(%arg0: i32) -> (i32, i32, i32) {
    %c0_i32 = arith.constant 0 : i32
    %c0_i32_0 = arith.constant 0 : i32
    %c0_i32_1 = arith.constant 0 : i32
    %c0_i32_2 = arith.constant 0 : i32
    return %c0_i32, %c0_i32_0, %c0_i32_1 : i32, i32, i32
  }
  func.func @transform_4(%arg0: i32) -> (i32, i32, i32) {
    %c0_i32 = arith.constant 0 : i32
    %c0_i32_0 = arith.constant 0 : i32
    %c0_i32_1 = arith.constant 0 : i32
    return %arg0, %c0_i32, %c0_i32_0 : i32, i32, i32
  }
}

</mosaic_0001>

<llo_original>
// kernel: tpu_custom_call.1
$region0: #{tpu_custom_call.1}
  #allocation0 [shape = 'u32[]', space=smem, size = 0x4, offset = 0x4, fixed_abs, tag = 'smem constant byte address 0x4 - core index']
  #allocation1 [shape = 'u32[144,128]{1,0:T(1,128)}', space=vmem, size = 0x12000, scoped, tag = 'internal scratch']
  %s0 = inlined_call_operand.hbm [shape: f32[2,4,384], index: 0, kind: input, shape index: {}]
  %s1 = inlined_call_operand.hbm [shape: s32[1,384], index: 1, kind: input, shape index: {}]
  %s2 = inlined_call_operand.hbm [shape: f32[9,4,4], index: 2, kind: input, shape index: {}]
  %s3 = inlined_call_operand.hbm [shape: f32[9,4,4], index: 3, kind: input, shape index: {}]
  %s4 = inlined_call_operand.hbm [shape: f32[2,4,384], index: 4, kind: output, shape index: {}]
  %s5 = sld [smem:[#allocation0]]
  $region65: #{tpu_custom_call.1} parent=0
    _
  %s7 = ssub.s32 1, %s5
  %s8 = scalar_select 0, %s7, %s5
  $region1: #{tpu_custom_call.1} parent=0
    #allocation2 [shape = 'u8[12288]{0}', space=vmem, size = 0x3000, scoped, tag = 'input window, operand 0']
    #allocation3 [shape = 's32[2]{0}', space=sflag, size = 0x8, scoped, tag = 'scoped memory for tpu_custom_call.1']
    #allocation4 [shape = 's32[2]{0}', space=sflag, size = 0x8, scoped, tag = 'scoped memory for tpu_custom_call.1']
    #allocation5 [shape = 'u8[1536]{0}', space=vmem, size = 0x800, scoped, tag = 'input window, operand 1, single buffered']
    #allocation6 [shape = 's32[1]{0}', space=sflag, size = 0x4, scoped, tag = 'scoped memory for tpu_custom_call.1']
    #allocation7 [shape = 'u8[18432]{0}', space=vmem, size = 0x4800, scoped, tag = 'input window, operand 2, single buffered']
    #allocation8 [shape = 'u8[18432]{0}', space=vmem, size = 0x4800, scoped, tag = 'input window, operand 3, single buffered']
    #allocation9 [shape = 's32[1]{0}', space=sflag, size = 0x4, scoped, tag = 'scoped memory for tpu_custom_call.1']
    #allocation10 [shape = 'u8[12288]{0}', space=vmem, size = 0x3000, scoped, tag = 'output window, operand 0']
    %9 = vsyncpa [#allocation3], 0
    %s10 = scalar_lea.sflag [#allocation3], 1
    %11 = vsyncpa %s10, 0
    %12 = vsyncpa [#allocation6], 0
    %13 = vsyncpa [#allocation9], 0
    %14 = vsyncpa [#allocation4], 0
    %s15 = scalar_lea.sflag [#allocation4], 1
    %16 = vsyncpa %s15, 0
    loop: start=0, step=1, limit=4
    $region2: #{tpu_custom_call.1} parent=1 // loop_pre_header
      _
    $region3: #{tpu_custom_call.1} parent=1 // loop_header
      %s18 = sphi 0, %s22
      %p19 = scmp.ge.s32.totalorder %s18, 4
      %s28 = sphi 0, %s30
      %s31 = sphi 0, %s28
      %s32 = sphi 0, %s31
      %s48 = sphi 0, %s32
      %s52 = sphi 0, %s52
      %s54 = sphi 0, %s52
      %s55 = sphi 0, %s54
      %s69 = sphi 0, %s55
      %s73 = sphi 0, %s73
      %s75 = sphi 0, %s73
      %s76 = sphi 0, %s75
      %s90 = sphi 0, %s76
      %s94 = sphi 0, %s94
      %s96 = sphi 0, %s94
      %s97 = sphi 0, %s96
      %s111 = sphi 0, %s97
      %s117 = sphi 0, %s119
      %s120 = sphi 0, %s117
      %s121 = sphi 0, %s120
      %s137 = sphi 0, %s121
    $region4: #{tpu_custom_call.1} parent=1 // loop_header_branch
      %21 = sbr.rel (%p19) target = $region8
    $region5: #{tpu_custom_call.1} parent=1 // loop_body
      %s23 = ssub.s32 %s18, 1
      %s24 = ssub.s32 %s18, 2
      %s25 = sadd.s32 %s18, 1
      %s26 = ssub.s32 %s18, %s25
      %p27 = scmp.eq.s32.totalorder %s26, 0
      %s29 = sadd.s32 %s28, 1
      %s30 = scalar_select %p27, %s28, %s29
      %p33 = pneg %p27
      %p34 = scmp.eq.s32.totalorder %s18, 1
      %p35 = por %p33, %p34
      %p36 = scmp.ne.s32.totalorder %s28, %s31
      %p37 = scmp.eq.s32.totalorder %s18, 0
      %p38 = por %p36, %p37
      %p39 = scmp.ne.s32.totalorder %s28, %s31
      %p40 = scmp.eq.s32.totalorder %s23, 1
      %p41 = por %p39, %p40
      %p42 = scmp.ne.s32.totalorder %s31, %s32
      %p43 = scmp.eq.s32.totalorder %s23, 0
      %p44 = por %p42, %p43
      %p45 = scmp.ne.s32.totalorder %s31, %s32
      %p46 = scmp.eq.s32.totalorder %s24, 1
      %p47 = por %p45, %p46
      %p49 = scmp.ne.s32.totalorder %s32, %s48
      %p50 = scmp.eq.s32.totalorder %s24, 0
      %p51 = por %p49, %p50
      %s53 = sadd.s32 %s52, 1
      %p56 = scmp.eq.s32.totalorder %s18, 1
      %p57 = scmp.ne.s32.totalorder %s52, %s54
      %p58 = scmp.eq.s32.totalorder %s18, 0
      %p59 = por %p57, %p58
      %p60 = scmp.ne.s32.totalorder %s52, %s54
      %p61 = scmp.eq.s32.totalorder %s23, 1
      %p62 = por %p60, %p61
      %p63 = scmp.ne.s32.totalorder %s54, %s55
      %p64 = scmp.eq.s32.totalorder %s23, 0
      %p65 = por %p63, %p64
      %p66 = scmp.ne.s32.totalorder %s54, %s55
      %p67 = scmp.eq.s32.totalorder %s24, 1
      %p68 = por %p66, %p67
      %p70 = scmp.ne.s32.totalorder %s55, %s69
      %p71 = scmp.eq.s32.totalorder %s24, 0
      %p72 = por %p70, %p71
      %s74 = sadd.s32 %s73, 1
      %p77 = scmp.eq.s32.totalorder %s18, 1
      %p78 = scmp.ne.s32.totalorder %s73, %s75
      %p79 = scmp.eq.s32.totalorder %s18, 0
      %p80 = por %p78, %p79
      %p81 = scmp.ne.s32.totalorder %s73, %s75
      %p82 = scmp.eq.s32.totalorder %s23, 1
      %p83 = por %p81, %p82
      %p84 = scmp.ne.s32.totalorder %s75, %s76
      %p85 = scmp.eq.s32.totalorder %s23, 0
      %p86 = por %p84, %p85
      %p87 = scmp.ne.s32.totalorder %s75, %s76
      %p88 = scmp.eq.s32.totalorder %s24, 1
      %p89 = por %p87, %p88
      %p91 = scmp.ne.s32.totalorder %s76, %s90
      %p92 = scmp.eq.s32.totalorder %s24, 0
      %p93 = por %p91, %p92
      %s95 = sadd.s32 %s94, 1
      %p98 = scmp.eq.s32.totalorder %s18, 1
      %p99 = scmp.ne.s32.totalorder %s94, %s96
      %p100 = scmp.eq.s32.totalorder %s18, 0
      %p101 = por %p99, %p100
      %p102 = scmp.ne.s32.totalorder %s94, %s96
      %p103 = scmp.eq.s32.totalorder %s23, 1
      %p104 = por %p102, %p103
      %p105 = scmp.ne.s32.totalorder %s96, %s97
      %p106 = scmp.eq.s32.totalorder %s23, 0
      %p107 = por %p105, %p106
      %p108 = scmp.ne.s32.totalorder %s96, %s97
      %p109 = scmp.eq.s32.totalorder %s24, 1
      %p110 = por %p108, %p109
      %p112 = scmp.ne.s32.totalorder %s97, %s111
      %p113 = scmp.eq.s32.totalorder %s24, 0
      %p114 = por %p112, %p113
      %s115 = ssub.s32 %s18, %s25
      %p116 = scmp.eq.s32.totalorder %s115, 0
      %s118 = sadd.s32 %s117, 1
      %s119 = scalar_select %p116, %s117, %s118
      %p122 = pneg %p116
      %p123 = scmp.eq.s32.totalorder %s18, 1
      %p124 = por %p122, %p123
      %p125 = scmp.ne.s32.totalorder %s117, %s120
      %p126 = scmp.eq.s32.totalorder %s18, 0
      %p127 = por %p125, %p126
      %p128 = scmp.ne.s32.totalorder %s117, %s120
      %p129 = scmp.eq.s32.totalorder %s23, 1
      %p130 = por %p128, %p129
      %p131 = scmp.ne.s32.totalorder %s120, %s121
      %p132 = scmp.eq.s32.totalorder %s23, 0
      %p133 = por %p131, %p132
      %p134 = scmp.ne.s32.totalorder %s120, %s121
      %p135 = scmp.eq.s32.totalorder %s24, 1
      %p136 = por %p134, %p135
      %p138 = scmp.ne.s32.totalorder %s121, %s137
      %p139 = scmp.eq.s32.totalorder %s24, 0
      %p140 = por %p138, %p139
      %p141 = scmp.le.s32.totalorder 1, %s18
      %p142 = scmp.lt.s32.totalorder %s18, 3
      %p143 = pnand %p141, %p142
      %p144 = pneg %p143
      // Predicated region
      $region9: #{tpu_custom_call.1} parent=5 // pred_check
        _
      $region10: #{tpu_custom_call.1} parent=5 // pred_check_branch
        %146 = sbr.rel (%p143) target = $region12
      $region11: #{tpu_custom_call.1} parent=5 // pred_region
        %s147 = ssub.s32 %s18, 1
        // Predicated region
        $region13: #{tpu_custom_call.1} parent=11 // pred_check
          %p148 = pneg %p65
        $region14: #{tpu_custom_call.1} parent=11 // pred_check_branch
          %150 = sbr.rel (%p148) target = $region16
        $region15: #{tpu_custom_call.1} parent=11 // pred_region
          %s152 = ssub.s32 48, 48
          %153 = vsyncadd [#allocation6], %s152
          %s155 = sshll.u32 [#allocation5], 4
          %s156 = int_to_ptr.vmem [resolvable:$true] %s155
          %158 = dma.hbm_to_vmem [thread:$0]  %s1, 48, %s156, [#allocation6]
        $region16: #{tpu_custom_call.1} parent=11 // pred_fallthru
          _
        // Predicated region
        $region17: #{tpu_custom_call.1} parent=11 // pred_check
          %p159 = pneg %p86
        $region18: #{tpu_custom_call.1} parent=11 // pred_check_branch
          %161 = sbr.rel (%p159) target = $region20
        $region19: #{tpu_custom_call.1} parent=11 // pred_region
          %s163 = ssub.s32 576, 576
          %164 = vsyncadd [#allocation6], %s163
          %s165 = sshll.u32 [#allocation7], 4
          %s166 = int_to_ptr.vmem [resolvable:$true] %s165
          %171 = dma.hbm_to_vmem [thread:$0]  %s2, 576, %s166, [#allocation6], 64, 64, 4
        $region20: #{tpu_custom_call.1} parent=11 // pred_fallthru
          _
        // Predicated region
        $region21: #{tpu_custom_call.1} parent=11 // pred_check
          %p172 = pneg %p107
        $region22: #{tpu_custom_call.1} parent=11 // pred_check_branch
          %174 = sbr.rel (%p172) target = $region24
        $region23: #{tpu_custom_call.1} parent=11 // pred_region
          %s176 = ssub.s32 576, 576
          %177 = vsyncadd [#allocation9], %s176
          %s178 = sshll.u32 [#allocation8], 4
          %s179 = int_to_ptr.vmem [resolvable:$true] %s178
          %184 = dma.hbm_to_vmem [thread:$0]  %s3, 576, %s179, [#allocation9], 64, 64, 4
        $region24: #{tpu_custom_call.1} parent=11 // pred_fallthru
          _
      $region12: #{tpu_custom_call.1} parent=5 // pred_fallthru
        _
      %p185 = scmp.lt.s32.totalorder %s18, 2
      // Predicated region
      $region25: #{tpu_custom_call.1} parent=5 // pred_check
        %p186 = pneg %p185
      $region26: #{tpu_custom_call.1} parent=5 // pred_check_branch
        %188 = sbr.rel (%p186) target = $region28
      $region27: #{tpu_custom_call.1} parent=5 // pred_region
        // Predicated region
        $region29: #{tpu_custom_call.1} parent=27 // pred_check
          %p189 = pneg %p38
        $region30: #{tpu_custom_call.1} parent=27 // pred_check_branch
          %191 = sbr.rel (%p189) target = $region32
        $region31: #{tpu_custom_call.1} parent=27 // pred_region
          %s192 = sand.u32 %s28, 1
          %s193 = scalar_lea.sflag [#allocation3], %s192
          %s194 = sand.u32 %s28, 1
          %s195 = smul.addr %s194, 12
          %s196 = scalar_lea.vmem [#allocation2], %s195
          %s198 = ssub.s32 192, 192
          %199 = vsyncadd %s193, %s198
          %s200 = smul.addr %s18, 3
          %s201 = smul.addr %s200, 64
          %s202 = scalar_lea.hbm %s0, %s201
          %s204 = sshll.u32 %s196, 4
          %s205 = int_to_ptr.vmem [resolvable:$true] %s204
          %207 = dma.hbm_to_vmem [thread:$0]  %s202, 192, %s205, %s193
        $region32: #{tpu_custom_call.1} parent=27 // pred_fallthru
          _
      $region28: #{tpu_custom_call.1} parent=5 // pred_fallthru
        _
      %p208 = scmp.le.s32.totalorder 1, %s18
      %p209 = scmp.lt.s32.totalorder %s18, 3
      %p210 = pnand %p208, %p209
      %p211 = pneg %p210
      // Predicated region
      $region33: #{tpu_custom_call.1} parent=5 // pred_check
        _
      $region34: #{tpu_custom_call.1} parent=5 // pred_check_branch
        %213 = sbr.rel (%p210) target = $region36
      $region35: #{tpu_custom_call.1} parent=5 // pred_region
        %s214 = ssub.s32 %s18, 1
        %s215 = sand.u32 %s31, 1
        %s216 = scalar_lea.sflag [#allocation3], %s215
        %s217 = sand.u32 %s31, 1
        %s218 = smul.addr %s217, 12
        %s219 = scalar_lea.vmem [#allocation2], %s218
        // Predicated region
        $region37: #{tpu_custom_call.1} parent=35 // pred_check
          %p220 = pneg %p44
        $region38: #{tpu_custom_call.1} parent=35 // pred_check_branch
          %222 = sbr.rel (%p220) target = $region40
        $region39: #{tpu_custom_call.1} parent=35 // pred_region
          %223 = dma.done %s216, 192
        $region40: #{tpu_custom_call.1} parent=35 // pred_fallthru
          _
        // Predicated region
        $region41: #{tpu_custom_call.1} parent=35 // pred_check
          %p224 = pneg %p65
        $region42: #{tpu_custom_call.1} parent=35 // pred_check_branch
          %226 = sbr.rel (%p224) target = $region44
        $region43: #{tpu_custom_call.1} parent=35 // pred_region
          %227 = dma.done [#allocation6], 48
        $region44: #{tpu_custom_call.1} parent=35 // pred_fallthru
          _
        // Predicated region
        $region45: #{tpu_custom_call.1} parent=35 // pred_check
          %p228 = pneg %p86
        $region46: #{tpu_custom_call.1} parent=35 // pred_check_branch
          %230 = sbr.rel (%p228) target = $region48
        $region47: #{tpu_custom_call.1} parent=35 // pred_region
          %231 = dma.done [#allocation6], 576
        $region48: #{tpu_custom_call.1} parent=35 // pred_fallthru
          _
        // Predicated region
        $region49: #{tpu_custom_call.1} parent=35 // pred_check
          %p232 = pneg %p107
        $region50: #{tpu_custom_call.1} parent=35 // pred_check_branch
          %234 = sbr.rel (%p232) target = $region52
        $region51: #{tpu_custom_call.1} parent=35 // pred_region
          %235 = dma.done [#allocation9], 576
        $region52: #{tpu_custom_call.1} parent=35 // pred_fallthru
          _
        %s236 = sand.u32 %s31, 1
        %s237 = scalar_lea.sflag [#allocation3], %s236
        %s238 = sand.u32 %s31, 1
        %s239 = smul.addr %s238, 12
        %s240 = scalar_lea.vmem [#allocation2], %s239
        %p241 = pneg %p44
        %p242 = pneg %p41
        %p243 = pneg %p65
        %p244 = pneg %p62
        %p245 = pneg %p86
        %p246 = pneg %p83
        %p247 = pneg %p107
        %p248 = pneg %p104
        %p249 = pneg %p133
        %p250 = pneg %p130
        %s251 = sand.u32 %s120, 1
        %s252 = scalar_lea.sflag [#allocation4], %s251
        %s253 = sand.u32 %s120, 1
        %s254 = smul.addr %s253, 12
        %s255 = scalar_lea.vmem [#allocation10], %s254
        %v256 = vld [vmem:[%s219] sm:$0xff]
        %v257 = vld [vmem:[%s219 + $0x8] sm:$0xf]
        %v258 = vld [vmem:[#allocation5] sm:$0x7]
        %vm259 = vcmp.eq.s32.totalorder %v258, 1
        %v260 = vsel %vm259, 1, 0
        %v261 = vcvt.s32.f32 %v260
        %263 = vrot.lane.b32.xlu0 %v257, 19
        %v264 = vpop.permute.xlu0 %263
        %v267 = vcombine.high %v256, %v256
        %268 = vrot.lane.b32.xlu0 %v256, 19
        %v269 = vpop.permute.xlu0 %268
        %270 = vrot.lane.b32.xlu0 %v267, 19
        %v271 = vpop.permute.xlu0 %270
        %vm272 = vcmask 154624
        %v273 = vsel %vm272, %v269, %v271
        %v274 = vsel %vm272, %v271, %v264
        %v276 = vsel %vm272, %v264, %v269
        %v277 = vld [vmem:[#allocation7] sm:$0xf]
        %278 = vrot.lane.b32.xlu0 %v257, 18
        %v279 = vpop.permute.xlu0 %278
        %281 = vrot.lane.b32.xlu0 %v256, 18
        %v282 = vpop.permute.xlu0 %281
        %283 = vrot.lane.b32.xlu0 %v267, 18
        %v284 = vpop.permute.xlu0 %283
        %vm285 = vcmask 146432
        %v286 = vsel %vm285, %v282, %v284
        %v287 = vsel %vm285, %v284, %v279
        %v289 = vsel %vm285, %v279, %v282
        %s290 = scalar_lea.vmem [#allocation7], 4
        %v291 = vld [vmem:[%s290] sm:$0xf]
        %vm292 = vcmask 31744
        %v294 = vsel %vm292, %v291, 0
        %vm296 = vcmask 1043456
        %v298 = vsel %vm296, %v289, 0
        %v300 = vsel %vm296, %v286, 0
        %v302 = vsel %vm296, %v287, 0
        %304 = vmatprep.subr.mxu0 %v300
        %305 = vmatpush1.msra.mxu0 %v298
        %306 = vmatprep.subr.mxu0 0.0
        %307 = vmatpush1.msra.mxu0 0.0
        %308 = vmatprep.subr.mxu0 0.0
        %309 = vmatpush1.msra.mxu0 0.0
        %310 = vmatprep.subr.mxu0 0.0
        %311 = vmatpush1.msra.mxu0 0.0
        %312 = vmatprep.subr.mxu0 0.0
        %313 = vmatpush1.msra.mxu0 0.0
        %314 = vmatprep.subr.mxu0 0.0
        %315 = vmatpush1.msra.mxu0 0.0
        %316 = vmatprep.subr.mxu0 0.0
        %317 = vmatpush1.msra.mxu0 0.0
        %318 = vmatprep.subr.mxu0 0.0
        %319 = vmatpush1.msra.mxu0 0.0
        %320 = vmatprep.subr.mxu0 0.0
        %321 = vmatpush1.msra.mxu0 0.0
        %322 = vmatprep.subr.mxu0 0.0
        %323 = vmatpush1.msra.mxu0 0.0
        %324 = vmatprep.subr.mxu0 0.0
        %325 = vmatpush1.msra.mxu0 0.0
        %326 = vmatprep.subr.mxu0 0.0
        %327 = vmatpush1.msra.mxu0 0.0
        %328 = vmatprep.subr.mxu0 0.0
        %329 = vmatpush1.msra.mxu0 0.0
        %330 = vmatprep.subr.mxu0 0.0
        %331 = vmatpush1.msra.mxu0 0.0
        %332 = vmatprep.subr.mxu0 0.0
        %333 = vmatpush1.msra.mxu0 0.0
        %334 = vmatprep.subr.mxu0 0.0
        %335 = vmatpush1.msra.mxu0 0.0
        %336 = vmatprep.subr.mxu0 0.0
        %337 = vmatpush1.msra.mxu0 0.0
        %338 = vmatprep.subr.mxu0 0.0
        %339 = vmatpush1.msra.mxu0 0.0
        %340 = vmatprep.subr.mxu0 0.0
        %341 = vmatpush1.msra.mxu0 0.0
        %342 = vmatprep.subr.mxu0 0.0
        %343 = vmatpush1.msra.mxu0 0.0
        %344 = vmatprep.subr.mxu0 0.0
        %345 = vmatpush1.msra.mxu0 0.0
        %346 = vmatprep.subr.mxu0 0.0
        %347 = vmatpush1.msra.mxu0 0.0
        %348 = vmatprep.subr.mxu0 0.0
        %349 = vmatpush1.msra.mxu0 0.0
        %350 = vmatprep.subr.mxu0 0.0
        %351 = vmatpush1.msra.mxu0 0.0
        %352 = vmatprep.subr.mxu0 0.0
        %353 = vmatpush1.msra.mxu0 0.0
        %354 = vmatprep.subr.mxu0 0.0
        %355 = vmatpush1.msra.mxu0 0.0
        %356 = vmatprep.subr.mxu0 0.0
        %357 = vmatpush1.msra.mxu0 0.0
        %358 = vmatprep.subr.mxu0 0.0
        %359 = vmatpush1.msra.mxu0 0.0
        %360 = vmatprep.subr.mxu0 0.0
        %361 = vmatpush1.msra.mxu0 0.0
        %362 = vmatprep.subr.mxu0 0.0
        %363 = vmatpush1.msra.mxu0 0.0
        %364 = vmatprep.subr.mxu0 0.0
        %365 = vmatpush1.msra.mxu0 0.0
        %366 = vmatprep.subr.mxu0 0.0
        %367 = vmatpush1.msra.mxu0 0.0
        %368 = vmatprep.mubr.f32.mxu0 0.0
        %369 = vmatmul.mubr.f32.gmra.mrb[0].mxu0 %v294
        %v370 = vpop.f32.mrb[0].mxu0
        %v371 = vadd.f32 0.0, %v370
        %v372 = vpop.f32.mrb[0].mxu0
        %v373 = vadd.f32 0.0, %v372
        %374 = vdwg.mxu0
        %375 = vmatprep.subr.mxu0 0.0
        %376 = vmatpush1.msra.mxu0 %v302
        %377 = vmatprep.subr.mxu0 0.0
        %378 = vmatpush1.msra.mxu0 0.0
        %379 = vmatprep.subr.mxu0 0.0
        %380 = vmatpush1.msra.mxu0 0.0
        %381 = vmatprep.subr.mxu0 0.0
        %382 = vmatpush1.msra.mxu0 0.0
        %383 = vmatprep.subr.mxu0 0.0
        %384 = vmatpush1.msra.mxu0 0.0
        %385 = vmatprep.subr.mxu0 0.0
        %386 = vmatpush1.msra.mxu0 0.0
        %387 = vmatprep.subr.mxu0 0.0
        %388 = vmatpush1.msra.mxu0 0.0
        %389 = vmatprep.subr.mxu0 0.0
        %390 = vmatpush1.msra.mxu0 0.0
        %391 = vmatprep.subr.mxu0 0.0
        %392 = vmatpush1.msra.mxu0 0.0
        %393 = vmatprep.subr.mxu0 0.0
        %394 = vmatpush1.msra.mxu0 0.0
        %395 = vmatprep.subr.mxu0 0.0
        %396 = vmatpush1.msra.mxu0 0.0
        %397 = vmatprep.subr.mxu0 0.0
        %398 = vmatpush1.msra.mxu0 0.0
        %399 = vmatprep.subr.mxu0 0.0
        %400 = vmatpush1.msra.mxu0 0.0
        %401 = vmatprep.subr.mxu0 0.0
        %402 = vmatpush1.msra.mxu0 0.0
        %403 = vmatprep.subr.mxu0 0.0
        %404 = vmatpush1.msra.mxu0 0.0
        %405 = vmatprep.subr.mxu0 0.0
        %406 = vmatpush1.msra.mxu0 0.0
        %407 = vmatprep.subr.mxu0 0.0
        %408 = vmatpush1.msra.mxu0 0.0
        %409 = vmatprep.subr.mxu0 0.0
        %410 = vmatpush1.msra.mxu0 0.0
        %411 = vmatprep.subr.mxu0 0.0
        %412 = vmatpush1.msra.mxu0 0.0
        %413 = vmatprep.subr.mxu0 0.0
        %414 = vmatpush1.msra.mxu0 0.0
        %415 = vmatprep.subr.mxu0 0.0
        %416 = vmatpush1.msra.mxu0 0.0
        %417 = vmatprep.subr.mxu0 0.0
        %418 = vmatpush1.msra.mxu0 0.0
        %419 = vmatprep.subr.mxu0 0.0
        %420 = vmatpush1.msra.mxu0 0.0
        %421 = vmatprep.subr.mxu0 0.0
        %422 = vmatpush1.msra.mxu0 0.0
        %423 = vmatprep.subr.mxu0 0.0
        %424 = vmatpush1.msra.mxu0 0.0
        %425 = vmatprep.subr.mxu0 0.0
        %426 = vmatpush1.msra.mxu0 0.0
        %427 = vmatprep.subr.mxu0 0.0
        %428 = vmatpush1.msra.mxu0 0.0
        %429 = vmatprep.subr.mxu0 0.0
        %430 = vmatpush1.msra.mxu0 0.0
        %431 = vmatprep.subr.mxu0 0.0
        %432 = vmatpush1.msra.mxu0 0.0
        %433 = vmatprep.subr.mxu0 0.0
        %434 = vmatpush1.msra.mxu0 0.0
        %435 = vmatprep.subr.mxu0 0.0
        %436 = vmatpush1.msra.mxu0 0.0
        %437 = vmatprep.subr.mxu0 0.0
        %438 = vmatpush1.msra.mxu0 0.0
        %439 = vmatprep.mubr.f32.mxu0 0.0
        %440 = vmatmul.mubr.f32.gmra.mrb[0].mxu0 %v294
        %v441 = vpop.f32.mrb[0].mxu0
        %v442 = vadd.f32 0.0, %v441
        %v443 = vpop.f32.mrb[0].mxu0
        %444 = vdwg.mxu0
        %v446 = vsel %vm292, %v277, 0
        %v449 = vsel %vm296, %v276, 0
        %v451 = vsel %vm296, %v273, 0
        %v453 = vsel %vm296, %v274, 0
        %455 = vmatprep.subr.mxu0 %v451
        %456 = vmatpush1.msra.mxu0 %v449
        %457 = vmatprep.subr.mxu0 0.0
        %458 = vmatpush1.msra.mxu0 0.0
        %459 = vmatprep.subr.mxu0 0.0
        %460 = vmatpush1.msra.mxu0 0.0
        %461 = vmatprep.subr.mxu0 0.0
        %462 = vmatpush1.msra.mxu0 0.0
        %463 = vmatprep.subr.mxu0 0.0
        %464 = vmatpush1.msra.mxu0 0.0
        %465 = vmatprep.subr.mxu0 0.0
        %466 = vmatpush1.msra.mxu0 0.0
        %467 = vmatprep.subr.mxu0 0.0
        %468 = vmatpush1.msra.mxu0 0.0
        %469 = vmatprep.subr.mxu0 0.0
        %470 = vmatpush1.msra.mxu0 0.0
        %471 = vmatprep.subr.mxu0 0.0
        %472 = vmatpush1.msra.mxu0 0.0
        %473 = vmatprep.subr.mxu0 0.0
        %474 = vmatpush1.msra.mxu0 0.0
        %475 = vmatprep.subr.mxu0 0.0
        %476 = vmatpush1.msra.mxu0 0.0
        %477 = vmatprep.subr.mxu0 0.0
        %478 = vmatpush1.msra.mxu0 0.0
        %479 = vmatprep.subr.mxu0 0.0
        %480 = vmatpush1.msra.mxu0 0.0
        %481 = vmatprep.subr.mxu0 0.0
        %482 = vmatpush1.msra.mxu0 0.0
        %483 = vmatprep.subr.mxu0 0.0
        %484 = vmatpush1.msra.mxu0 0.0
        %485 = vmatprep.subr.mxu0 0.0
        %486 = vmatpush1.msra.mxu0 0.0
        %487 = vmatprep.subr.mxu0 0.0
        %488 = vmatpush1.msra.mxu0 0.0
        %489 = vmatprep.subr.mxu0 0.0
        %490 = vmatpush1.msra.mxu0 0.0
        %491 = vmatprep.subr.mxu0 0.0
        %492 = vmatpush1.msra.mxu0 0.0
        %493 = vmatprep.subr.mxu0 0.0
        %494 = vmatpush1.msra.mxu0 0.0
        %495 = vmatprep.subr.mxu0 0.0
        %496 = vmatpush1.msra.mxu0 0.0
        %497 = vmatprep.subr.mxu0 0.0
        %498 = vmatpush1.msra.mxu0 0.0
        %499 = vmatprep.subr.mxu0 0.0
        %500 = vmatpush1.msra.mxu0 0.0
        %501 = vmatprep.subr.mxu0 0.0
        %502 = vmatpush1.msra.mxu0 0.0
        %503 = vmatprep.subr.mxu0 0.0
        %504 = vmatpush1.msra.mxu0 0.0
        %505 = vmatprep.subr.mxu0 0.0
        %506 = vmatpush1.msra.mxu0 0.0
        %507 = vmatprep.subr.mxu0 0.0
        %508 = vmatpush1.msra.mxu0 0.0
        %509 = vmatprep.subr.mxu0 0.0
        %510 = vmatpush1.msra.mxu0 0.0
        %511 = vmatprep.subr.mxu0 0.0
        %512 = vmatpush1.msra.mxu0 0.0
        %513 = vmatprep.subr.mxu0 0.0
        %514 = vmatpush1.msra.mxu0 0.0
        %515 = vmatprep.subr.mxu0 0.0
        %516 = vmatpush1.msra.mxu0 0.0
        %517 = vmatprep.subr.mxu0 0.0
        %518 = vmatpush1.msra.mxu0 0.0
        %519 = vmatprep.mubr.f32.mxu0 0.0
        %520 = vmatmul.mubr.f32.gmra.mrb[0].mxu0 %v446
        %v521 = vpop.f32.mrb[0].mxu0
        %v522 = vadd.f32 %v371, %v521
        %v523 = vpop.f32.mrb[0].mxu0
        %v524 = vadd.f32 %v373, %v523
        %525 = vdwg.mxu0
        %526 = vmatprep.subr.mxu0 0.0
        %527 = vmatpush1.msra.mxu0 %v453
        %528 = vmatprep.subr.mxu0 0.0
        %529 = vmatpush1.msra.mxu0 0.0
        %530 = vmatprep.subr.mxu0 0.0
        %531 = vmatpush1.msra.mxu0 0.0
        %532 = vmatprep.subr.mxu0 0.0
        %533 = vmatpush1.msra.mxu0 0.0
        %534 = vmatprep.subr.mxu0 0.0
        %535 = vmatpush1.msra.mxu0 0.0
        %536 = vmatprep.subr.mxu0 0.0
        %537 = vmatpush1.msra.mxu0 0.0
        %538 = vmatprep.subr.mxu0 0.0
        %539 = vmatpush1.msra.mxu0 0.0
        %540 = vmatprep.subr.mxu0 0.0
        %541 = vmatpush1.msra.mxu0 0.0
        %542 = vmatprep.subr.mxu0 0.0
        %543 = vmatpush1.msra.mxu0 0.0
        %544 = vmatprep.subr.mxu0 0.0
        %545 = vmatpush1.msra.mxu0 0.0
        %546 = vmatprep.subr.mxu0 0.0
        %547 = vmatpush1.msra.mxu0 0.0
        %548 = vmatprep.subr.mxu0 0.0
        %549 = vmatpush1.msra.mxu0 0.0
        %550 = vmatprep.subr.mxu0 0.0
        %551 = vmatpush1.msra.mxu0 0.0
        %552 = vmatprep.subr.mxu0 0.0
        %553 = vmatpush1.msra.mxu0 0.0
        %554 = vmatprep.subr.mxu0 0.0
        %555 = vmatpush1.msra.mxu0 0.0
        %556 = vmatprep.subr.mxu0 0.0
        %557 = vmatpush1.msra.mxu0 0.0
        %558 = vmatprep.subr.mxu0 0.0
        %559 = vmatpush1.msra.mxu0 0.0
        %560 = vmatprep.subr.mxu0 0.0
        %561 = vmatpush1.msra.mxu0 0.0
        %562 = vmatprep.subr.mxu0 0.0
        %563 = vmatpush1.msra.mxu0 0.0
        %564 = vmatprep.subr.mxu0 0.0
        %565 = vmatpush1.msra.mxu0 0.0
        %566 = vmatprep.subr.mxu0 0.0
        %567 = vmatpush1.msra.mxu0 0.0
        %568 = vmatprep.subr.mxu0 0.0
        %569 = vmatpush1.msra.mxu0 0.0
        %570 = vmatprep.subr.mxu0 0.0
        %571 = vmatpush1.msra.mxu0 0.0
        %572 = vmatprep.subr.mxu0 0.0
        %573 = vmatpush1.msra.mxu0 0.0
        %574 = vmatprep.subr.mxu0 0.0
        %575 = vmatpush1.msra.mxu0 0.0
        %576 = vmatprep.subr.mxu0 0.0
        %577 = vmatpush1.msra.mxu0 0.0
        %578 = vmatprep.subr.mxu0 0.0
        %579 = vmatpush1.msra.mxu0 0.0
        %580 = vmatprep.subr.mxu0 0.0
        %581 = vmatpush1.msra.mxu0 0.0
        %582 = vmatprep.subr.mxu0 0.0
        %583 = vmatpush1.msra.mxu0 0.0
        %584 = vmatprep.subr.mxu0 0.0
        %585 = vmatpush1.msra.mxu0 0.0
        %586 = vmatprep.subr.mxu0 0.0
        %587 = vmatpush1.msra.mxu0 0.0
        %588 = vmatprep.subr.mxu0 0.0
        %589 = vmatpush1.msra.mxu0 0.0
        %590 = vmatprep.mubr.f32.mxu0 0.0
        %591 = vmatmul.mubr.f32.gmra.mrb[0].mxu0 %v446
        %v592 = vpop.f32.mrb[0].mxu0
        %v593 = vadd.f32 %v442, %v592
        %v594 = vpop.f32.mrb[0].mxu0
        %595 = vdwg.mxu0
        %596 = vrot.lane.b32.xlu0 %v257, 17
        %v597 = vpop.permute.xlu0 %596
        %599 = vrot.lane.b32.xlu0 %v256, 17
        %v600 = vpop.permute.xlu0 %599
        %601 = vrot.lane.b32.xlu0 %v267, 17
        %v602 = vpop.permute.xlu0 %601
        %vm603 = vcmask 138240
        %v604 = vsel %vm603, %v600, %v602
        %v605 = vsel %vm603, %v602, %v597
        %v607 = vsel %vm603, %v597, %v600
        %s608 = scalar_lea.vmem [#allocation7], 8
        %v609 = vld [vmem:[%s608] sm:$0xf]
        %v611 = vsel %vm292, %v609, 0
        %v614 = vsel %vm296, %v607, 0
        %v616 = vsel %vm296, %v604, 0
        %v618 = vsel %vm296, %v605, 0
        %620 = vmatprep.subr.mxu0 %v616
        %621 = vmatpush1.msra.mxu0 %v614
        %622 = vmatprep.subr.mxu0 0.0
        %623 = vmatpush1.msra.mxu0 0.0
        %624 = vmatprep.subr.mxu0 0.0
        %625 = vmatpush1.msra.mxu0 0.0
        %626 = vmatprep.subr.mxu0 0.0
        %627 = vmatpush1.msra.mxu0 0.0
        %628 = vmatprep.subr.mxu0 0.0
        %629 = vmatpush1.msra.mxu0 0.0
        %630 = vmatprep.subr.mxu0 0.0
        %631 = vmatpush1.msra.mxu0 0.0
        %632 = vmatprep.subr.mxu0 0.0
        %633 = vmatpush1.msra.mxu0 0.0
        %634 = vmatprep.subr.mxu0 0.0
        %635 = vmatpush1.msra.mxu0 0.0
        %636 = vmatprep.subr.mxu0 0.0
        %637 = vmatpush1.msra.mxu0 0.0
        %638 = vmatprep.subr.mxu0 0.0
        %639 = vmatpush1.msra.mxu0 0.0
        %640 = vmatprep.subr.mxu0 0.0
        %641 = vmatpush1.msra.mxu0 0.0
        %642 = vmatprep.subr.mxu0 0.0
        %643 = vmatpush1.msra.mxu0 0.0
        %644 = vmatprep.subr.mxu0 0.0
        %645 = vmatpush1.msra.mxu0 0.0
        %646 = vmatprep.subr.mxu0 0.0
        %647 = vmatpush1.msra.mxu0 0.0
        %648 = vmatprep.subr.mxu0 0.0
        %649 = vmatpush1.msra.mxu0 0.0
        %650 = vmatprep.subr.mxu0 0.0
        %651 = vmatpush1.msra.mxu0 0.0
        %652 = vmatprep.subr.mxu0 0.0
        %653 = vmatpush1.msra.mxu0 0.0
        %654 = vmatprep.subr.mxu0 0.0
        %655 = vmatpush1.msra.mxu0 0.0
        %656 = vmatprep.subr.mxu0 0.0
        %657 = vmatpush1.msra.mxu0 0.0
        %658 = vmatprep.subr.mxu0 0.0
        %659 = vmatpush1.msra.mxu0 0.0
        %660 = vmatprep.subr.mxu0 0.0
        %661 = vmatpush1.msra.mxu0 0.0
        %662 = vmatprep.subr.mxu0 0.0
        %663 = vmatpush1.msra.mxu0 0.0
        %664 = vmatprep.subr.mxu0 0.0
        %665 = vmatpush1.msra.mxu0 0.0
        %666 = vmatprep.subr.mxu0 0.0
        %667 = vmatpush1.msra.mxu0 0.0
        %668 = vmatprep.subr.mxu0 0.0
        %669 = vmatpush1.msra.mxu0 0.0
        %670 = vmatprep.subr.mxu0 0.0
        %671 = vmatpush1.msra.mxu0 0.0
        %672 = vmatprep.subr.mxu0 0.0
        %673 = vmatpush1.msra.mxu0 0.0
        %674 = vmatprep.subr.mxu0 0.0
        %675 = vmatpush1.msra.mxu0 0.0
        %676 = vmatprep.subr.mxu0 0.0
        %677 = vmatpush1.msra.mxu0 0.0
        %678 = vmatprep.subr.mxu0 0.0
        %679 = vmatpush1.msra.mxu0 0.0
        %680 = vmatprep.subr.mxu0 0.0
        %681 = vmatpush1.msra.mxu0 0.0
        %682 = vmatprep.subr.mxu0 0.0
        %683 = vmatpush1.msra.mxu0 0.0
        %684 = vmatprep.mubr.f32.mxu0 0.0
        %685 = vmatmul.mubr.f32.gmra.mrb[0].mxu0 %v611
        %v686 = vpop.f32.mrb[0].mxu0
        %v687 = vadd.f32 0.0, %v686
        %v688 = vpop.f32.mrb[0].mxu0
        %v689 = vadd.f32 0.0, %v688
        %690 = vdwg.mxu0
        %691 = vmatprep.subr.mxu0 0.0
        %692 = vmatpush1.msra.mxu0 %v618
        %693 = vmatprep.subr.mxu0 0.0
        %694 = vmatpush1.msra.mxu0 0.0
        %695 = vmatprep.subr.mxu0 0.0
        %696 = vmatpush1.msra.mxu0 0.0
        %697 = vmatprep.subr.mxu0 0.0
        %698 = vmatpush1.msra.mxu0 0.0
        %699 = vmatprep.subr.mxu0 0.0
        %700 = vmatpush1.msra.mxu0 0.0
        %701 = vmatprep.subr.mxu0 0.0
        %702 = vmatpush1.msra.mxu0 0.0
        %703 = vmatprep.subr.mxu0 0.0
        %704 = vmatpush1.msra.mxu0 0.0
        %705 = vmatprep.subr.mxu0 0.0
        %706 = vmatpush1.msra.mxu0 0.0
        %707 = vmatprep.subr.mxu0 0.0
        %708 = vmatpush1.msra.mxu0 0.0
        %709 = vmatprep.subr.mxu0 0.0
        %710 = vmatpush1.msra.mxu0 0.0
        %711 = vmatprep.subr.mxu0 0.0
        %712 = vmatpush1.msra.mxu0 0.0
        %713 = vmatprep.subr.mxu0 0.0
        %714 = vmatpush1.msra.mxu0 0.0
        %715 = vmatprep.subr.mxu0 0.0
        %716 = vmatpush1.msra.mxu0 0.0
        %717 = vmatprep.subr.mxu0 0.0
        %718 = vmatpush1.msra.mxu0 0.0
        %719 = vmatprep.subr.mxu0 0.0
        %720 = vmatpush1.msra.mxu0 0.0
        %721 = vmatprep.subr.mxu0 0.0
        %722 = vmatpush1.msra.mxu0 0.0
        %723 = vmatprep.subr.mxu0 0.0
        %724 = vmatpush1.msra.mxu0 0.0
        %725 = vmatprep.subr.mxu0 0.0
        %726 = vmatpush1.msra.mxu0 0.0
        %727 = vmatprep.subr.mxu0 0.0
        %728 = vmatpush1.msra.mxu0 0.0
        %729 = vmatprep.subr.mxu0 0.0
        %730 = vmatpush1.msra.mxu0 0.0
        %731 = vmatprep.subr.mxu0 0.0
        %732 = vmatpush1.msra.mxu0 0.0
        %733 = vmatprep.subr.mxu0 0.0
        %734 = vmatpush1.msra.mxu0 0.0
        %735 = vmatprep.subr.mxu0 0.0
        %736 = vmatpush1.msra.mxu0 0.0
        %737 = vmatprep.subr.mxu0 0.0
        %738 = vmatpush1.msra.mxu0 0.0
        %739 = vmatprep.subr.mxu0 0.0
        %740 = vmatpush1.msra.mxu0 0.0
        %741 = vmatprep.subr.mxu0 0.0
        %742 = vmatpush1.msra.mxu0 0.0
        %743 = vmatprep.subr.mxu0 0.0
        %744 = vmatpush1.msra.mxu0 0.0
        %745 = vmatprep.subr.mxu0 0.0
        %746 = vmatpush1.msra.mxu0 0.0
        %747 = vmatprep.subr.mxu0 0.0
        %748 = vmatpush1.msra.mxu0 0.0
        %749 = vmatprep.subr.mxu0 0.0
        %750 = vmatpush1.msra.mxu0 0.0
        %751 = vmatprep.subr.mxu0 0.0
        %752 = vmatpush1.msra.mxu0 0.0
        %753 = vmatprep.subr.mxu0 0.0
        %754 = vmatpush1.msra.mxu0 0.0
        %755 = vmatprep.mubr.f32.mxu0 0.0
        %756 = vmatmul.mubr.f32.gmra.mrb[0].mxu0 %v611
        %v757 = vpop.f32.mrb[0].mxu0
        %v758 = vadd.f32 0.0, %v757
        %v759 = vpop.f32.mrb[0].mxu0
        %760 = vdwg.mxu0
        %v761 = vadd.f32 %v522, %v687
        %v762 = vadd.f32 %v524, %v689
        %v763 = vadd.f32 %v593, %v758
        %764 = vrot.lane.b32.xlu0 %v257, 1
        %v765 = vpop.permute.xlu0 %764
        %767 = vrot.lane.b32.xlu0 %v256, 1
        %v768 = vpop.permute.xlu0 %767
        %769 = vrot.lane.b32.xlu0 %v267, 1
        %v770 = vpop.permute.xlu0 %769
        %vm771 = vcmask 7168
        %v772 = vsel %vm771, %v768, %v770
        %v773 = vsel %vm771, %v770, %v765
        %v775 = vsel %vm771, %v765, %v768
        %s776 = scalar_lea.vmem [#allocation7], 12
        %v777 = vld [vmem:[%s776] sm:$0xf]
        %v779 = vsel %vm292, %v777, 0
        %v782 = vsel %vm296, %v775, 0
        %v784 = vsel %vm296, %v772, 0
        %v786 = vsel %vm296, %v773, 0
        %788 = vmatprep.subr.mxu0 %v784
        %789 = vmatpush1.msra.mxu0 %v782
        %790 = vmatprep.subr.mxu0 0.0
        %791 = vmatpush1.msra.mxu0 0.0
        %792 = vmatprep.subr.mxu0 0.0
        %793 = vmatpush1.msra.mxu0 0.0
        %794 = vmatprep.subr.mxu0 0.0
        %795 = vmatpush1.msra.mxu0 0.0
        %796 = vmatprep.subr.mxu0 0.0
        %797 = vmatpush1.msra.mxu0 0.0
        %798 = vmatprep.subr.mxu0 0.0
        %799 = vmatpush1.msra.mxu0 0.0
        %800 = vmatprep.subr.mxu0 0.0
        %801 = vmatpush1.msra.mxu0 0.0
        %802 = vmatprep.subr.mxu0 0.0
        %803 = vmatpush1.msra.mxu0 0.0
        %804 = vmatprep.subr.mxu0 0.0
        %805 = vmatpush1.msra.mxu0 0.0
        %806 = vmatprep.subr.mxu0 0.0
        %807 = vmatpush1.msra.mxu0 0.0
        %808 = vmatprep.subr.mxu0 0.0
        %809 = vmatpush1.msra.mxu0 0.0
        %810 = vmatprep.subr.mxu0 0.0
        %811 = vmatpush1.msra.mxu0 0.0
        %812 = vmatprep.subr.mxu0 0.0
        %813 = vmatpush1.msra.mxu0 0.0
        %814 = vmatprep.subr.mxu0 0.0
        %815 = vmatpush1.msra.mxu0 0.0
        %816 = vmatprep.subr.mxu0 0.0
        %817 = vmatpush1.msra.mxu0 0.0
        %818 = vmatprep.subr.mxu0 0.0
        %819 = vmatpush1.msra.mxu0 0.0
        %820 = vmatprep.subr.mxu0 0.0
        %821 = vmatpush1.msra.mxu0 0.0
        %822 = vmatprep.subr.mxu0 0.0
        %823 = vmatpush1.msra.mxu0 0.0
        %824 = vmatprep.subr.mxu0 0.0
        %825 = vmatpush1.msra.mxu0 0.0
        %826 = vmatprep.subr.mxu0 0.0
        %827 = vmatpush1.msra.mxu0 0.0
        %828 = vmatprep.subr.mxu0 0.0
        %829 = vmatpush1.msra.mxu0 0.0
        %830 = vmatprep.subr.mxu0 0.0
        %831 = vmatpush1.msra.mxu0 0.0
        %832 = vmatprep.subr.mxu0 0.0
        %833 = vmatpush1.msra.mxu0 0.0
        %834 = vmatprep.subr.mxu0 0.0
        %835 = vmatpush1.msra.mxu0 0.0
        %836 = vmatprep.subr.mxu0 0.0
        %837 = vmatpush1.msra.mxu0 0.0
        %838 = vmatprep.subr.mxu0 0.0
        %839 = vmatpush1.msra.mxu0 0.0
        %840 = vmatprep.subr.mxu0 0.0
        %841 = vmatpush1.msra.mxu0 0.0
        %842 = vmatprep.subr.mxu0 0.0
        %843 = vmatpush1.msra.mxu0 0.0
        %844 = vmatprep.subr.mxu0 0.0
        %845 = vmatpush1.msra.mxu0 0.0
        %846 = vmatprep.subr.mxu0 0.0
        %847 = vmatpush1.msra.mxu0 0.0
        %848 = vmatprep.subr.mxu0 0.0
        %849 = vmatpush1.msra.mxu0 0.0
        %850 = vmatprep.subr.mxu0 0.0
        %851 = vmatpush1.msra.mxu0 0.0
        %852 = vmatprep.mubr.f32.mxu0 0.0
        %853 = vmatmul.mubr.f32.gmra.mrb[0].mxu0 %v779
        %v854 = vpop.f32.mrb[0].mxu0
        %v855 = vadd.f32 0.0, %v854
        %v856 = vpop.f32.mrb[0].mxu0
        %v857 = vadd.f32 0.0, %v856
        %858 = vdwg.mxu0
        %859 = vmatprep.subr.mxu0 0.0
        %860 = vmatpush1.msra.mxu0 %v786
        %861 = vmatprep.subr.mxu0 0.0
        %862 = vmatpush1.msra.mxu0 0.0
        %863 = vmatprep.subr.mxu0 0.0
        %864 = vmatpush1.msra.mxu0 0.0
        %865 = vmatprep.subr.mxu0 0.0
        %866 = vmatpush1.msra.mxu0 0.0
        %867 = vmatprep.subr.mxu0 0.0
        %868 = vmatpush1.msra.mxu0 0.0
        %869 = vmatprep.subr.mxu0 0.0
        %870 = vmatpush1.msra.mxu0 0.0
        %871 = vmatprep.subr.mxu0 0.0
        %872 = vmatpush1.msra.mxu0 0.0
        %873 = vmatprep.subr.mxu0 0.0
        %874 = vmatpush1.msra.mxu0 0.0
        %875 = vmatprep.subr.mxu0 0.0
        %876 = vmatpush1.msra.mxu0 0.0
        %877 = vmatprep.subr.mxu0 0.0
        %878 = vmatpush1.msra.mxu0 0.0
        %879 = vmatprep.subr.mxu0 0.0
        %880 = vmatpush1.msra.mxu0 0.0
        %881 = vmatprep.subr.mxu0 0.0
        %882 = vmatpush1.msra.mxu0 0.0
        %883 = vmatprep.subr.mxu0 0.0
        %884 = vmatpush1.msra.mxu0 0.0
        %885 = vmatprep.subr.mxu0 0.0
        %886 = vmatpush1.msra.mxu0 0.0
        %887 = vmatprep.subr.mxu0 0.0
        %888 = vmatpush1.msra.mxu0 0.0
        %889 = vmatprep.subr.mxu0 0.0
        %890 = vmatpush1.msra.mxu0 0.0
        %891 = vmatprep.subr.mxu0 0.0
        %892 = vmatpush1.msra.mxu0 0.0
        %893 = vmatprep.subr.mxu0 0.0
        %894 = vmatpush1.msra.mxu0 0.0
        %895 = vmatprep.subr.mxu0 0.0
        %896 = vmatpush1.msra.mxu0 0.0
        %897 = vmatprep.subr.mxu0 0.0
        %898 = vmatpush1.msra.mxu0 0.0
        %899 = vmatprep.subr.mxu0 0.0
        %900 = vmatpush1.msra.mxu0 0.0
        %901 = vmatprep.subr.mxu0 0.0
        %902 = vmatpush1.msra.mxu0 0.0
        %903 = vmatprep.subr.mxu0 0.0
        %904 = vmatpush1.msra.mxu0 0.0
        %905 = vmatprep.subr.mxu0 0.0
        %906 = vmatpush1.msra.mxu0 0.0
        %907 = vmatprep.subr.mxu0 0.0
        %908 = vmatpush1.msra.mxu0 0.0
        %909 = vmatprep.subr.mxu0 0.0
        %910 = vmatpush1.msra.mxu0 0.0
        %911 = vmatprep.subr.mxu0 0.0
        %912 = vmatpush1.msra.mxu0 0.0
        %913 = vmatprep.subr.mxu0 0.0
        %914 = vmatpush1.msra.mxu0 0.0
        %915 = vmatprep.subr.mxu0 0.0
        %916 = vmatpush1.msra.mxu0 0.0
        %917 = vmatprep.subr.mxu0 0.0
        %918 = vmatpush1.msra.mxu0 0.0
        %919 = vmatprep.subr.mxu0 0.0
        %920 = vmatpush1.msra.mxu0 0.0
        %921 = vmatprep.subr.mxu0 0.0
        %922 = vmatpush1.msra.mxu0 0.0
        %923 = vmatprep.mubr.f32.mxu0 0.0
        %924 = vmatmul.mubr.f32.gmra.mrb[0].mxu0 %v779
        %v925 = vpop.f32.mrb[0].mxu0
        %v926 = vadd.f32 0.0, %v925
        %v927 = vpop.f32.mrb[0].mxu0
        %928 = vdwg.mxu0
        %v929 = vadd.f32 %v761, %v855
        %v930 = vadd.f32 %v762, %v857
        %v931 = vadd.f32 %v763, %v926
        %s932 = scalar_lea.vmem [#allocation7], 16
        %v933 = vld [vmem:[%s932] sm:$0xf]
        %v935 = vsel %vm292, %v933, 0
        %v937 = vsel %vm296, %v256, 0
        %v939 = vsel %vm296, %v267, 0
        %v941 = vsel %vm296, %v257, 0
        %943 = vmatprep.subr.mxu0 %v939
        %944 = vmatpush1.msra.mxu0 %v937
        %945 = vmatprep.subr.mxu0 0.0
        %946 = vmatpush1.msra.mxu0 0.0
        %947 = vmatprep.subr.mxu0 0.0
        %948 = vmatpush1.msra.mxu0 0.0
        %949 = vmatprep.subr.mxu0 0.0
        %950 = vmatpush1.msra.mxu0 0.0
        %951 = vmatprep.subr.mxu0 0.0
        %952 = vmatpush1.msra.mxu0 0.0
        %953 = vmatprep.subr.mxu0 0.0
        %954 = vmatpush1.msra.mxu0 0.0
        %955 = vmatprep.subr.mxu0 0.0
        %956 = vmatpush1.msra.mxu0 0.0
        %957 = vmatprep.subr.mxu0 0.0
        %958 = vmatpush1.msra.mxu0 0.0
        %959 = vmatprep.subr.mxu0 0.0
        %960 = vmatpush1.msra.mxu0 0.0
        %961 = vmatprep.subr.mxu0 0.0
        %962 = vmatpush1.msra.mxu0 0.0
        %963 = vmatprep.subr.mxu0 0.0
        %964 = vmatpush1.msra.mxu0 0.0
        %965 = vmatprep.subr.mxu0 0.0
        %966 = vmatpush1.msra.mxu0 0.0
        %967 = vmatprep.subr.mxu0 0.0
        %968 = vmatpush1.msra.mxu0 0.0
        %969 = vmatprep.subr.mxu0 0.0
        %970 = vmatpush1.msra.mxu0 0.0
        %971 = vmatprep.subr.mxu0 0.0
        %972 = vmatpush1.msra.mxu0 0.0
        %973 = vmatprep.subr.mxu0 0.0
        %974 = vmatpush1.msra.mxu0 0.0
        %975 = vmatprep.subr.mxu0 0.0
        %976 = vmatpush1.msra.mxu0 0.0
        %977 = vmatprep.subr.mxu0 0.0
        %978 = vmatpush1.msra.mxu0 0.0
        %979 = vmatprep.subr.mxu0 0.0
        %980 = vmatpush1.msra.mxu0 0.0
        %981 = vmatprep.subr.mxu0 0.0
        %982 = vmatpush1.msra.mxu0 0.0
        %983 = vmatprep.subr.mxu0 0.0
        %984 = vmatpush1.msra.mxu0 0.0
        %985 = vmatprep.subr.mxu0 0.0
        %986 = vmatpush1.msra.mxu0 0.0
        %987 = vmatprep.subr.mxu0 0.0
        %988 = vmatpush1.msra.mxu0 0.0
        %989 = vmatprep.subr.mxu0 0.0
        %990 = vmatpush1.msra.mxu0 0.0
        %991 = vmatprep.subr.mxu0 0.0
        %992 = vmatpush1.msra.mxu0 0.0
        %993 = vmatprep.subr.mxu0 0.0
        %994 = vmatpush1.msra.mxu0 0.0
        %995 = vmatprep.subr.mxu0 0.0
        %996 = vmatpush1.msra.mxu0 0.0
        %997 = vmatprep.subr.mxu0 0.0
        %998 = vmatpush1.msra.mxu0 0.0
        %999 = vmatprep.subr.mxu0 0.0
        %1000 = vmatpush1.msra.mxu0 0.0
        %1001 = vmatprep.subr.mxu0 0.0
        %1002 = vmatpush1.msra.mxu0 0.0
        %1003 = vmatprep.subr.mxu0 0.0
        %1004 = vmatpush1.msra.mxu0 0.0
        %1005 = vmatprep.subr.mxu0 0.0
        %1006 = vmatpush1.msra.mxu0 0.0
        %1007 = vmatprep.mubr.f32.mxu0 0.0
        %1008 = vmatmul.mubr.f32.gmra.mrb[0].mxu0 %v935
        %v1009 = vpop.f32.mrb[0].mxu0
        %v1010 = vadd.f32 0.0, %v1009
        %v1011 = vpop.f32.mrb[0].mxu0
        %v1012 = vadd.f32 0.0, %v1011
        %1013 = vdwg.mxu0
        %1014 = vmatprep.subr.mxu0 0.0
        %1015 = vmatpush1.msra.mxu0 %v941
        %1016 = vmatprep.subr.mxu0 0.0
        %1017 = vmatpush1.msra.mxu0 0.0
        %1018 = vmatprep.subr.mxu0 0.0
        %1019 = vmatpush1.msra.mxu0 0.0
        %1020 = vmatprep.subr.mxu0 0.0
        %1021 = vmatpush1.msra.mxu0 0.0
        %1022 = vmatprep.subr.mxu0 0.0
        %1023 = vmatpush1.msra.mxu0 0.0
        %1024 = vmatprep.subr.mxu0 0.0
        %1025 = vmatpush1.msra.mxu0 0.0
        %1026 = vmatprep.subr.mxu0 0.0
        %1027 = vmatpush1.msra.mxu0 0.0
        %1028 = vmatprep.subr.mxu0 0.0
        %1029 = vmatpush1.msra.mxu0 0.0
        %1030 = vmatprep.subr.mxu0 0.0
        %1031 = vmatpush1.msra.mxu0 0.0
        %1032 = vmatprep.subr.mxu0 0.0
        %1033 = vmatpush1.msra.mxu0 0.0
        %1034 = vmatprep.subr.mxu0 0.0
        %1035 = vmatpush1.msra.mxu0 0.0
        %1036 = vmatprep.subr.mxu0 0.0
        %1037 = vmatpush1.msra.mxu0 0.0
        %1038 = vmatprep.subr.mxu0 0.0
        %1039 = vmatpush1.msra.mxu0 0.0
        %1040 = vmatprep.subr.mxu0 0.0
        %1041 = vmatpush1.msra.mxu0 0.0
        %1042 = vmatprep.subr.mxu0 0.0
        %1043 = vmatpush1.msra.mxu0 0.0
        %1044 = vmatprep.subr.mxu0 0.0
        %1045 = vmatpush1.msra.mxu0 0.0
        %1046 = vmatprep.subr.mxu0 0.0
        %1047 = vmatpush1.msra.mxu0 0.0
        %1048 = vmatprep.subr.mxu0 0.0
        %1049 = vmatpush1.msra.mxu0 0.0
        %1050 = vmatprep.subr.mxu0 0.0
        %1051 = vmatpush1.msra.mxu0 0.0
        %1052 = vmatprep.subr.mxu0 0.0
        %1053 = vmatpush1.msra.mxu0 0.0
        %1054 = vmatprep.subr.mxu0 0.0
        %1055 = vmatpush1.msra.mxu0 0.0
        %1056 = vmatprep.subr.mxu0 0.0
        %1057 = vmatpush1.msra.mxu0 0.0
        %1058 = vmatprep.subr.mxu0 0.0
        %1059 = vmatpush1.msra.mxu0 0.0
        %1060 = vmatprep.subr.mxu0 0.0
        %1061 = vmatpush1.msra.mxu0 0.0
        %1062 = vmatprep.subr.mxu0 0.0
        %1063 = vmatpush1.msra.mxu0 0.0
        %1064 = vmatprep.subr.mxu0 0.0
        %1065 = vmatpush1.msra.mxu0 0.0
        %1066 = vmatprep.subr.mxu0 0.0
        %1067 = vmatpush1.msra.mxu0 0.0
        %1068 = vmatprep.subr.mxu0 0.0
        %1069 = vmatpush1.msra.mxu0 0.0
        %1070 = vmatprep.subr.mxu0 0.0
        %1071 = vmatpush1.msra.mxu0 0.0
        %1072 = vmatprep.subr.mxu0 0.0
        %1073 = vmatpush1.msra.mxu0 0.0
        %1074 = vmatprep.subr.mxu0 0.0
        %1075 = vmatpush1.msra.mxu0 0.0
        %1076 = vmatprep.subr.mxu0 0.0
        %1077 = vmatpush1.msra.mxu0 0.0
        %1078 = vmatprep.mubr.f32.mxu0 0.0
        %1079 = vmatmul.mubr.f32.gmra.mrb[0].mxu0 %v935
        %v1080 = vpop.f32.mrb[0].mxu0
        %v1081 = vadd.f32 0.0, %v1080
        %v1082 = vpop.f32.mrb[0].mxu0
        %1083 = vdwg.mxu0
        %v1084 = vadd.f32 %v929, %v1010
        %v1085 = vadd.f32 %v930, %v1012
        %v1086 = vadd.f32 %v931, %v1081
        %1087 = vrot.lane.b32.xlu0 %v256, 127
        %v1088 = vpop.permute.xlu0 %1087
        %1089 = vrot.lane.b32.xlu0 %v267, 127
        %v1090 = vpop.permute.xlu0 %1089
        %1091 = vrot.lane.b32.xlu0 %v257, 127
        %v1092 = vpop.permute.xlu0 %1091
        %vm1093 = vcmask 1039360
        %v1094 = vsel %vm1093, %v1088, %v1090
        %v1095 = vsel %vm1093, %v1090, %v1092
        %v1098 = vsel %vm1093, %v1092, %v1088
        %s1099 = scalar_lea.vmem [#allocation7], 20
        %v1100 = vld [vmem:[%s1099] sm:$0xf]
        %v1102 = vsel %vm292, %v1100, 0
        %v1104 = vsel %vm296, %v1094, 0
        %v1106 = vsel %vm296, %v1095, 0
        %v1109 = vsel %vm296, %v1098, 0
        %1111 = vmatprep.subr.mxu0 %v1106
        %1112 = vmatpush1.msra.mxu0 %v1104
        %1113 = vmatprep.subr.mxu0 0.0
        %1114 = vmatpush1.msra.mxu0 0.0
        %1115 = vmatprep.subr.mxu0 0.0
        %1116 = vmatpush1.msra.mxu0 0.0
        %1117 = vmatprep.subr.mxu0 0.0
        %1118 = vmatpush1.msra.mxu0 0.0
        %1119 = vmatprep.subr.mxu0 0.0
        %1120 = vmatpush1.msra.mxu0 0.0
        %1121 = vmatprep.subr.mxu0 0.0
        %1122 = vmatpush1.msra.mxu0 0.0
        %1123 = vmatprep.subr.mxu0 0.0
        %1124 = vmatpush1.msra.mxu0 0.0
        %1125 = vmatprep.subr.mxu0 0.0
        %1126 = vmatpush1.msra.mxu0 0.0
        %1127 = vmatprep.subr.mxu0 0.0
        %1128 = vmatpush1.msra.mxu0 0.0
        %1129 = vmatprep.subr.mxu0 0.0
        %1130 = vmatpush1.msra.mxu0 0.0
        %1131 = vmatprep.subr.mxu0 0.0
        %1132 = vmatpush1.msra.mxu0 0.0
        %1133 = vmatprep.subr.mxu0 0.0
        %1134 = vmatpush1.msra.mxu0 0.0
        %1135 = vmatprep.subr.mxu0 0.0
        %1136 = vmatpush1.msra.mxu0 0.0
        %1137 = vmatprep.subr.mxu0 0.0
        %1138 = vmatpush1.msra.mxu0 0.0
        %1139 = vmatprep.subr.mxu0 0.0
        %1140 = vmatpush1.msra.mxu0 0.0
        %1141 = vmatprep.subr.mxu0 0.0
        %1142 = vmatpush1.msra.mxu0 0.0
        %1143 = vmatprep.subr.mxu0 0.0
        %1144 = vmatpush1.msra.mxu0 0.0
        %1145 = vmatprep.subr.mxu0 0.0
        %1146 = vmatpush1.msra.mxu0 0.0
        %1147 = vmatprep.subr.mxu0 0.0
        %1148 = vmatpush1.msra.mxu0 0.0
        %1149 = vmatprep.subr.mxu0 0.0
        %1150 = vmatpush1.msra.mxu0 0.0
        %1151 = vmatprep.subr.mxu0 0.0
        %1152 = vmatpush1.msra.mxu0 0.0
        %1153 = vmatprep.subr.mxu0 0.0
        %1154 = vmatpush1.msra.mxu0 0.0
        %1155 = vmatprep.subr.mxu0 0.0
        %1156 = vmatpush1.msra.mxu0 0.0
        %1157 = vmatprep.subr.mxu0 0.0
        %1158 = vmatpush1.msra.mxu0 0.0
        %1159 = vmatprep.subr.mxu0 0.0
        %1160 = vmatpush1.msra.mxu0 0.0
        %1161 = vmatprep.subr.mxu0 0.0
        %1162 = vmatpush1.msra.mxu0 0.0
        %1163 = vmatprep.subr.mxu0 0.0
        %1164 = vmatpush1.msra.mxu0 0.0
        %1165 = vmatprep.subr.mxu0 0.0
        %1166 = vmatpush1.msra.mxu0 0.0
        %1167 = vmatprep.subr.mxu0 0.0
        %1168 = vmatpush1.msra.mxu0 0.0
        %1169 = vmatprep.subr.mxu0 0.0
        %1170 = vmatpush1.msra.mxu0 0.0
        %1171 = vmatprep.subr.mxu0 0.0
        %1172 = vmatpush1.msra.mxu0 0.0
        %1173 = vmatprep.subr.mxu0 0.0
        %1174 = vmatpush1.msra.mxu0 0.0
        %1175 = vmatprep.mubr.f32.mxu0 0.0
        %1176 = vmatmul.mubr.f32.gmra.mrb[0].mxu0 %v1102
        %v1177 = vpop.f32.mrb[0].mxu0
        %v1178 = vadd.f32 0.0, %v1177
        %v1179 = vpop.f32.mrb[0].mxu0
        %v1180 = vadd.f32 0.0, %v1179
        %1181 = vdwg.mxu0
        %1182 = vmatprep.subr.mxu0 0.0
        %1183 = vmatpush1.msra.mxu0 %v1109
        %1184 = vmatprep.subr.mxu0 0.0
        %1185 = vmatpush1.msra.mxu0 0.0
        %1186 = vmatprep.subr.mxu0 0.0
        %1187 = vmatpush1.msra.mxu0 0.0
        %1188 = vmatprep.subr.mxu0 0.0
        %1189 = vmatpush1.msra.mxu0 0.0
        %1190 = vmatprep.subr.mxu0 0.0
        %1191 = vmatpush1.msra.mxu0 0.0
        %1192 = vmatprep.subr.mxu0 0.0
        %1193 = vmatpush1.msra.mxu0 0.0
        %1194 = vmatprep.subr.mxu0 0.0
        %1195 = vmatpush1.msra.mxu0 0.0
        %1196 = vmatprep.subr.mxu0 0.0
        %1197 = vmatpush1.msra.mxu0 0.0
        %1198 = vmatprep.subr.mxu0 0.0
        %1199 = vmatpush1.msra.mxu0 0.0
        %1200 = vmatprep.subr.mxu0 0.0
        %1201 = vmatpush1.msra.mxu0 0.0
        %1202 = vmatprep.subr.mxu0 0.0
        %1203 = vmatpush1.msra.mxu0 0.0
        %1204 = vmatprep.subr.mxu0 0.0
        %1205 = vmatpush1.msra.mxu0 0.0
        %1206 = vmatprep.subr.mxu0 0.0
        %1207 = vmatpush1.msra.mxu0 0.0
        %1208 = vmatprep.subr.mxu0 0.0
        %1209 = vmatpush1.msra.mxu0 0.0
        %1210 = vmatprep.subr.mxu0 0.0
        %1211 = vmatpush1.msra.mxu0 0.0
        %1212 = vmatprep.subr.mxu0 0.0
        %1213 = vmatpush1.msra.mxu0 0.0
        %1214 = vmatprep.subr.mxu0 0.0
        %1215 = vmatpush1.msra.mxu0 0.0
        %1216 = vmatprep.subr.mxu0 0.0
        %1217 = vmatpush1.msra.mxu0 0.0
        %1218 = vmatprep.subr.mxu0 0.0
        %1219 = vmatpush1.msra.mxu0 0.0
        %1220 = vmatprep.subr.mxu0 0.0
        %1221 = vmatpush1.msra.mxu0 0.0
        %1222 = vmatprep.subr.mxu0 0.0
        %1223 = vmatpush1.msra.mxu0 0.0
        %1224 = vmatprep.subr.mxu0 0.0
        %1225 = vmatpush1.msra.mxu0 0.0
        %1226 = vmatprep.subr.mxu0 0.0
        %1227 = vmatpush1.msra.mxu0 0.0
        %1228 = vmatprep.subr.mxu0 0.0
        %1229 = vmatpush1.msra.mxu0 0.0
        %1230 = vmatprep.subr.mxu0 0.0
        %1231 = vmatpush1.msra.mxu0 0.0
        %1232 = vmatprep.subr.mxu0 0.0
        %1233 = vmatpush1.msra.mxu0 0.0
        %1234 = vmatprep.subr.mxu0 0.0
        %1235 = vmatpush1.msra.mxu0 0.0
        %1236 = vmatprep.subr.mxu0 0.0
        %1237 = vmatpush1.msra.mxu0 0.0
        %1238 = vmatprep.subr.mxu0 0.0
        %1239 = vmatpush1.msra.mxu0 0.0
        %1240 = vmatprep.subr.mxu0 0.0
        %1241 = vmatpush1.msra.mxu0 0.0
        %1242 = vmatprep.subr.mxu0 0.0
        %1243 = vmatpush1.msra.mxu0 0.0
        %1244 = vmatprep.subr.mxu0 0.0
        %1245 = vmatpush1.msra.mxu0 0.0
        %1246 = vmatprep.mubr.f32.mxu0 0.0
        %1247 = vmatmul.mubr.f32.gmra.mrb[0].mxu0 %v1102
        %v1248 = vpop.f32.mrb[0].mxu0
        %v1249 = vadd.f32 0.0, %v1248
        %v1250 = vpop.f32.mrb[0].mxu0
        %1251 = vdwg.mxu0
        %v1252 = vadd.f32 %v1084, %v1178
        %v1253 = vadd.f32 %v1085, %v1180
        %v1254 = vadd.f32 %v1086, %v1249
        %1255 = vrot.lane.b32.xlu0 %v256, 111
        %v1256 = vpop.permute.xlu0 %1255
        %1257 = vrot.lane.b32.xlu0 %v267, 111
        %v1258 = vpop.permute.xlu0 %1257
        %1259 = vrot.lane.b32.xlu0 %v257, 111
        %v1260 = vpop.permute.xlu0 %1259
        %vm1261 = vcmask 908288
        %v1262 = vsel %vm1261, %v1256, %v1258
        %v1263 = vsel %vm1261, %v1258, %v1260
        %v1266 = vsel %vm1261, %v1260, %v1256
        %s1267 = scalar_lea.vmem [#allocation7], 24
        %v1268 = vld [vmem:[%s1267] sm:$0xf]
        %v1270 = vsel %vm292, %v1268, 0
        %v1272 = vsel %vm296, %v1262, 0
        %v1274 = vsel %vm296, %v1263, 0
        %v1277 = vsel %vm296, %v1266, 0
        %1279 = vmatprep.subr.mxu0 %v1274
        %1280 = vmatpush1.msra.mxu0 %v1272
        %1281 = vmatprep.subr.mxu0 0.0
        %1282 = vmatpush1.msra.mxu0 0.0
        %1283 = vmatprep.subr.mxu0 0.0
        %1284 = vmatpush1.msra.mxu0 0.0
        %1285 = vmatprep.subr.mxu0 0.0
        %1286 = vmatpush1.msra.mxu0 0.0
        %1287 = vmatprep.subr.mxu0 0.0
        %1288 = vmatpush1.msra.mxu0 0.0
        %1289 = vmatprep.subr.mxu0 0.0
        %1290 = vmatpush1.msra.mxu0 0.0
        %1291 = vmatprep.subr.mxu0 0.0
        %1292 = vmatpush1.msra.mxu0 0.0
        %1293 = vmatprep.subr.mxu0 0.0
        %1294 = vmatpush1.msra.mxu0 0.0
        %1295 = vmatprep.subr.mxu0 0.0
        %1296 = vmatpush1.msra.mxu0 0.0
        %1297 = vmatprep.subr.mxu0 0.0
        %1298 = vmatpush1.msra.mxu0 0.0
        %1299 = vmatprep.subr.mxu0 0.0
        %1300 = vmatpush1.msra.mxu0 0.0
        %1301 = vmatprep.subr.mxu0 0.0
        %1302 = vmatpush1.msra.mxu0 0.0
        %1303 = vmatprep.subr.mxu0 0.0
        %1304 = vmatpush1.msra.mxu0 0.0
        %1305 = vmatprep.subr.mxu0 0.0
        %1306 = vmatpush1.msra.mxu0 0.0
        %1307 = vmatprep.subr.mxu0 0.0
        %1308 = vmatpush1.msra.mxu0 0.0
        %1309 = vmatprep.subr.mxu0 0.0
        %1310 = vmatpush1.msra.mxu0 0.0
        %1311 = vmatprep.subr.mxu0 0.0
        %1312 = vmatpush1.msra.mxu0 0.0
        %1313 = vmatprep.subr.mxu0 0.0
        %1314 = vmatpush1.msra.mxu0 0.0
        %1315 = vmatprep.subr.mxu0 0.0
        %1316 = vmatpush1.msra.mxu0 0.0
        %1317 = vmatprep.subr.mxu0 0.0
        %1318 = vmatpush1.msra.mxu0 0.0
        %1319 = vmatprep.subr.mxu0 0.0
        %1320 = vmatpush1.msra.mxu0 0.0
        %1321 = vmatprep.subr.mxu0 0.0
        %1322 = vmatpush1.msra.mxu0 0.0
        %1323 = vmatprep.subr.mxu0 0.0
        %1324 = vmatpush1.msra.mxu0 0.0
        %1325 = vmatprep.subr.mxu0 0.0
        %1326 = vmatpush1.msra.mxu0 0.0
        %1327 = vmatprep.subr.mxu0 0.0
        %1328 = vmatpush1.msra.mxu0 0.0
        %1329 = vmatprep.subr.mxu0 0.0
        %1330 = vmatpush1.msra.mxu0 0.0
        %1331 = vmatprep.subr.mxu0 0.0
        %1332 = vmatpush1.msra.mxu0 0.0
        %1333 = vmatprep.subr.mxu0 0.0
        %1334 = vmatpush1.msra.mxu0 0.0
        %1335 = vmatprep.subr.mxu0 0.0
        %1336 = vmatpush1.msra.mxu0 0.0
        %1337 = vmatprep.subr.mxu0 0.0
        %1338 = vmatpush1.msra.mxu0 0.0
        %1339 = vmatprep.subr.mxu0 0.0
        %1340 = vmatpush1.msra.mxu0 0.0
        %1341 = vmatprep.subr.mxu0 0.0
        %1342 = vmatpush1.msra.mxu0 0.0
        %1343 = vmatprep.mubr.f32.mxu0 0.0
        %1344 = vmatmul.mubr.f32.gmra.mrb[0].mxu0 %v1270
        %v1345 = vpop.f32.mrb[0].mxu0
        %v1346 = vadd.f32 0.0, %v1345
        %v1347 = vpop.f32.mrb[0].mxu0
        %v1348 = vadd.f32 0.0, %v1347
        %1349 = vdwg.mxu0
        %1350 = vmatprep.subr.mxu0 0.0
        %1351 = vmatpush1.msra.mxu0 %v1277
        %1352 = vmatprep.subr.mxu0 0.0
        %1353 = vmatpush1.msra.mxu0 0.0
        %1354 = vmatprep.subr.mxu0 0.0
        %1355 = vmatpush1.msra.mxu0 0.0
        %1356 = vmatprep.subr.mxu0 0.0
        %1357 = vmatpush1.msra.mxu0 0.0
        %1358 = vmatprep.subr.mxu0 0.0
        %1359 = vmatpush1.msra.mxu0 0.0
        %1360 = vmatprep.subr.mxu0 0.0
        %1361 = vmatpush1.msra.mxu0 0.0
        %1362 = vmatprep.subr.mxu0 0.0
        %1363 = vmatpush1.msra.mxu0 0.0
        %1364 = vmatprep.subr.mxu0 0.0
        %1365 = vmatpush1.msra.mxu0 0.0
        %1366 = vmatprep.subr.mxu0 0.0
        %1367 = vmatpush1.msra.mxu0 0.0
        %1368 = vmatprep.subr.mxu0 0.0
        %1369 = vmatpush1.msra.mxu0 0.0
        %1370 = vmatprep.subr.mxu0 0.0
        %1371 = vmatpush1.msra.mxu0 0.0
        %1372 = vmatprep.subr.mxu0 0.0
        %1373 = vmatpush1.msra.mxu0 0.0
        %1374 = vmatprep.subr.mxu0 0.0
        %1375 = vmatpush1.msra.mxu0 0.0
        %1376 = vmatprep.subr.mxu0 0.0
        %1377 = vmatpush1.msra.mxu0 0.0
        %1378 = vmatprep.subr.mxu0 0.0
        %1379 = vmatpush1.msra.mxu0 0.0
        %1380 = vmatprep.subr.mxu0 0.0
        %1381 = vmatpush1.msra.mxu0 0.0
        %1382 = vmatprep.subr.mxu0 0.0
        %1383 = vmatpush1.msra.mxu0 0.0
        %1384 = vmatprep.subr.mxu0 0.0
        %1385 = vmatpush1.msra.mxu0 0.0
        %1386 = vmatprep.subr.mxu0 0.0
        %1387 = vmatpush1.msra.mxu0 0.0
        %1388 = vmatprep.subr.mxu0 0.0
        %1389 = vmatpush1.msra.mxu0 0.0
        %1390 = vmatprep.subr.mxu0 0.0
        %1391 = vmatpush1.msra.mxu0 0.0
        %1392 = vmatprep.subr.mxu0 0.0
        %1393 = vmatpush1.msra.mxu0 0.0
        %1394 = vmatprep.subr.mxu0 0.0
        %1395 = vmatpush1.msra.mxu0 0.0
        %1396 = vmatprep.subr.mxu0 0.0
        %1397 = vmatpush1.msra.mxu0 0.0
        %1398 = vmatprep.subr.mxu0 0.0
        %1399 = vmatpush1.msra.mxu0 0.0
        %1400 = vmatprep.subr.mxu0 0.0
        %1401 = vmatpush1.msra.mxu0 0.0
        %1402 = vmatprep.subr.mxu0 0.0
        %1403 = vmatpush1.msra.mxu0 0.0
        %1404 = vmatprep.subr.mxu0 0.0
        %1405 = vmatpush1.msra.mxu0 0.0
        %1406 = vmatprep.subr.mxu0 0.0
        %1407 = vmatpush1.msra.mxu0 0.0
        %1408 = vmatprep.subr.mxu0 0.0
        %1409 = vmatpush1.msra.mxu0 0.0
        %1410 = vmatprep.subr.mxu0 0.0
        %1411 = vmatpush1.msra.mxu0 0.0
        %1412 = vmatprep.subr.mxu0 0.0
        %1413 = vmatpush1.msra.mxu0 0.0
        %1414 = vmatprep.mubr.f32.mxu0 0.0
        %1415 = vmatmul.mubr.f32.gmra.mrb[0].mxu0 %v1270
        %v1416 = vpop.f32.mrb[0].mxu0
        %v1417 = vadd.f32 0.0, %v1416
        %v1418 = vpop.f32.mrb[0].mxu0
        %1419 = vdwg.mxu0
        %v1420 = vadd.f32 %v1252, %v1346
        %v1421 = vadd.f32 %v1253, %v1348
        %v1422 = vadd.f32 %v1254, %v1417
        %1423 = vrot.lane.b32.xlu0 %v256, 110
        %v1424 = vpop.permute.xlu0 %1423
        %1425 = vrot.lane.b32.xlu0 %v267, 110
        %v1426 = vpop.permute.xlu0 %1425
        %1427 = vrot.lane.b32.xlu0 %v257, 110
        %v1428 = vpop.permute.xlu0 %1427
        %vm1429 = vcmask 900096
        %v1430 = vsel %vm1429, %v1424, %v1426
        %v1431 = vsel %vm1429, %v1426, %v1428
        %v1434 = vsel %vm1429, %v1428, %v1424
        %s1435 = scalar_lea.vmem [#allocation7], 28
        %v1436 = vld [vmem:[%s1435] sm:$0xf]
        %v1438 = vsel %vm292, %v1436, 0
        %v1440 = vsel %vm296, %v1430, 0
        %v1442 = vsel %vm296, %v1431, 0
        %v1445 = vsel %vm296, %v1434, 0
        %1447 = vmatprep.subr.mxu0 %v1442
        %1448 = vmatpush1.msra.mxu0 %v1440
        %1449 = vmatprep.subr.mxu0 0.0
        %1450 = vmatpush1.msra.mxu0 0.0
        %1451 = vmatprep.subr.mxu0 0.0
        %1452 = vmatpush1.msra.mxu0 0.0
        %1453 = vmatprep.subr.mxu0 0.0
        %1454 = vmatpush1.msra.mxu0 0.0
        %1455 = vmatprep.subr.mxu0 0.0
        %1456 = vmatpush1.msra.mxu0 0.0
        %1457 = vmatprep.subr.mxu0 0.0
        %1458 = vmatpush1.msra.mxu0 0.0
        %1459 = vmatprep.subr.mxu0 0.0
        %1460 = vmatpush1.msra.mxu0 0.0
        %1461 = vmatprep.subr.mxu0 0.0
        %1462 = vmatpush1.msra.mxu0 0.0
        %1463 = vmatprep.subr.mxu0 0.0
        %1464 = vmatpush1.msra.mxu0 0.0
        %1465 = vmatprep.subr.mxu0 0.0
        %1466 = vmatpush1.msra.mxu0 0.0
        %1467 = vmatprep.subr.mxu0 0.0
        %1468 = vmatpush1.msra.mxu0 0.0
        %1469 = vmatprep.subr.mxu0 0.0
        %1470 = vmatpush1.msra.mxu0 0.0
        %1471 = vmatprep.subr.mxu0 0.0
        %1472 = vmatpush1.msra.mxu0 0.0
        %1473 = vmatprep.subr.mxu0 0.0
        %1474 = vmatpush1.msra.mxu0 0.0
        %1475 = vmatprep.subr.mxu0 0.0
        %1476 = vmatpush1.msra.mxu0 0.0
        %1477 = vmatprep.subr.mxu0 0.0
        %1478 = vmatpush1.msra.mxu0 0.0
        %1479 = vmatprep.subr.mxu0 0.0
        %1480 = vmatpush1.msra.mxu0 0.0
        %1481 = vmatprep.subr.mxu0 0.0
        %1482 = vmatpush1.msra.mxu0 0.0
        %1483 = vmatprep.subr.mxu0 0.0
        %1484 = vmatpush1.msra.mxu0 0.0
        %1485 = vmatprep.subr.mxu0 0.0
        %1486 = vmatpush1.msra.mxu0 0.0
        %1487 = vmatprep.subr.mxu0 0.0
        %1488 = vmatpush1.msra.mxu0 0.0
        %1489 = vmatprep.subr.mxu0 0.0
        %1490 = vmatpush1.msra.mxu0 0.0
        %1491 = vmatprep.subr.mxu0 0.0
        %1492 = vmatpush1.msra.mxu0 0.0
        %1493 = vmatprep.subr.mxu0 0.0
        %1494 = vmatpush1.msra.mxu0 0.0
        %1495 = vmatprep.subr.mxu0 0.0
        %1496 = vmatpush1.msra.mxu0 0.0
        %1497 = vmatprep.subr.mxu0 0.0
        %1498 = vmatpush1.msra.mxu0 0.0
        %1499 = vmatprep.subr.mxu0 0.0
        %1500 = vmatpush1.msra.mxu0 0.0
        %1501 = vmatprep.subr.mxu0 0.0
        %1502 = vmatpush1.msra.mxu0 0.0
        %1503 = vmatprep.subr.mxu0 0.0
        %1504 = vmatpush1.msra.mxu0 0.0
        %1505 = vmatprep.subr.mxu0 0.0
        %1506 = vmatpush1.msra.mxu0 0.0
        %1507 = vmatprep.subr.mxu0 0.0
        %1508 = vmatpush1.msra.mxu0 0.0
        %1509 = vmatprep.subr.mxu0 0.0
        %1510 = vmatpush1.msra.mxu0 0.0
        %1511 = vmatprep.mubr.f32.mxu0 0.0
        %1512 = vmatmul.mubr.f32.gmra.mrb[0].mxu0 %v1438
        %v1513 = vpop.f32.mrb[0].mxu0
        %v1514 = vadd.f32 0.0, %v1513
        %v1515 = vpop.f32.mrb[0].mxu0
        %v1516 = vadd.f32 0.0, %v1515
        %1517 = vdwg.mxu0
        %1518 = vmatprep.subr.mxu0 0.0
        %1519 = vmatpush1.msra.mxu0 %v1445
        %1520 = vmatprep.subr.mxu0 0.0
        %1521 = vmatpush1.msra.mxu0 0.0
        %1522 = vmatprep.subr.mxu0 0.0
        %1523 = vmatpush1.msra.mxu0 0.0
        %1524 = vmatprep.subr.mxu0 0.0
        %1525 = vmatpush1.msra.mxu0 0.0
        %1526 = vmatprep.subr.mxu0 0.0
        %1527 = vmatpush1.msra.mxu0 0.0
        %1528 = vmatprep.subr.mxu0 0.0
        %1529 = vmatpush1.msra.mxu0 0.0
        %1530 = vmatprep.subr.mxu0 0.0
        %1531 = vmatpush1.msra.mxu0 0.0
        %1532 = vmatprep.subr.mxu0 0.0
        %1533 = vmatpush1.msra.mxu0 0.0
        %1534 = vmatprep.subr.mxu0 0.0
        %1535 = vmatpush1.msra.mxu0 0.0
        %1536 = vmatprep.subr.mxu0 0.0
        %1537 = vmatpush1.msra.mxu0 0.0
        %1538 = vmatprep.subr.mxu0 0.0
        %1539 = vmatpush1.msra.mxu0 0.0
        %1540 = vmatprep.subr.mxu0 0.0
        %1541 = vmatpush1.msra.mxu0 0.0
        %1542 = vmatprep.subr.mxu0 0.0
        %1543 = vmatpush1.msra.mxu0 0.0
        %1544 = vmatprep.subr.mxu0 0.0
        %1545 = vmatpush1.msra.mxu0 0.0
        %1546 = vmatprep.subr.mxu0 0.0
        %1547 = vmatpush1.msra.mxu0 0.0
        %1548 = vmatprep.subr.mxu0 0.0
        %1549 = vmatpush1.msra.mxu0 0.0
        %1550 = vmatprep.subr.mxu0 0.0
        %1551 = vmatpush1.msra.mxu0 0.0
        %1552 = vmatprep.subr.mxu0 0.0
        %1553 = vmatpush1.msra.mxu0 0.0
        %1554 = vmatprep.subr.mxu0 0.0
        %1555 = vmatpush1.msra.mxu0 0.0
        %1556 = vmatprep.subr.mxu0 0.0
        %1557 = vmatpush1.msra.mxu0 0.0
        %1558 = vmatprep.subr.mxu0 0.0
        %1559 = vmatpush1.msra.mxu0 0.0
        %1560 = vmatprep.subr.mxu0 0.0
        %1561 = vmatpush1.msra.mxu0 0.0
        %1562 = vmatprep.subr.mxu0 0.0
        %1563 = vmatpush1.msra.mxu0 0.0
        %1564 = vmatprep.subr.mxu0 0.0
        %1565 = vmatpush1.msra.mxu0 0.0
        %1566 = vmatprep.subr.mxu0 0.0
        %1567 = vmatpush1.msra.mxu0 0.0
        %1568 = vmatprep.subr.mxu0 0.0
        %1569 = vmatpush1.msra.mxu0 0.0
        %1570 = vmatprep.subr.mxu0 0.0
        %1571 = vmatpush1.msra.mxu0 0.0
        %1572 = vmatprep.subr.mxu0 0.0
        %1573 = vmatpush1.msra.mxu0 0.0
        %1574 = vmatprep.subr.mxu0 0.0
        %1575 = vmatpush1.msra.mxu0 0.0
        %1576 = vmatprep.subr.mxu0 0.0
        %1577 = vmatpush1.msra.mxu0 0.0
        %1578 = vmatprep.subr.mxu0 0.0
        %1579 = vmatpush1.msra.mxu0 0.0
        %1580 = vmatprep.subr.mxu0 0.0
        %1581 = vmatpush1.msra.mxu0 0.0
        %1582 = vmatprep.mubr.f32.mxu0 0.0
        %1583 = vmatmul.mubr.f32.gmra.mrb[0].mxu0 %v1438
        %v1584 = vpop.f32.mrb[0].mxu0
        %v1585 = vadd.f32 0.0, %v1584
        %v1586 = vpop.f32.mrb[0].mxu0
        %1587 = vdwg.mxu0
        %v1588 = vadd.f32 %v1420, %v1514
        %v1589 = vadd.f32 %v1421, %v1516
        %v1590 = vadd.f32 %v1422, %v1585
        %1591 = vrot.lane.b32.xlu0 %v256, 109
        %v1592 = vpop.permute.xlu0 %1591
        %1593 = vrot.lane.b32.xlu0 %v267, 109
        %v1594 = vpop.permute.xlu0 %1593
        %1595 = vrot.lane.b32.xlu0 %v257, 109
        %v1596 = vpop.permute.xlu0 %1595
        %vm1597 = vcmask 891904
        %v1598 = vsel %vm1597, %v1592, %v1594
        %v1599 = vsel %vm1597, %v1594, %v1596
        %v1602 = vsel %vm1597, %v1596, %v1592
        %s1603 = scalar_lea.vmem [#allocation7], 32
        %v1604 = vld [vmem:[%s1603] sm:$0xf]
        %v1606 = vsel %vm292, %v1604, 0
        %v1608 = vsel %vm296, %v1598, 0
        %v1610 = vsel %vm296, %v1599, 0
        %v1613 = vsel %vm296, %v1602, 0
        %1615 = vmatprep.subr.mxu0 %v1610
        %1616 = vmatpush1.msra.mxu0 %v1608
        %1617 = vmatprep.subr.mxu0 0.0
        %1618 = vmatpush1.msra.mxu0 0.0
        %1619 = vmatprep.subr.mxu0 0.0
        %1620 = vmatpush1.msra.mxu0 0.0
        %1621 = vmatprep.subr.mxu0 0.0
        %1622 = vmatpush1.msra.mxu0 0.0
        %1623 = vmatprep.subr.mxu0 0.0
        %1624 = vmatpush1.msra.mxu0 0.0
        %1625 = vmatprep.subr.mxu0 0.0
        %1626 = vmatpush1.msra.mxu0 0.0
        %1627 = vmatprep.subr.mxu0 0.0
        %1628 = vmatpush1.msra.mxu0 0.0
        %1629 = vmatprep.subr.mxu0 0.0
        %1630 = vmatpush1.msra.mxu0 0.0
        %1631 = vmatprep.subr.mxu0 0.0
        %1632 = vmatpush1.msra.mxu0 0.0
        %1633 = vmatprep.subr.mxu0 0.0
        %1634 = vmatpush1.msra.mxu0 0.0
        %1635 = vmatprep.subr.mxu0 0.0
        %1636 = vmatpush1.msra.mxu0 0.0
        %1637 = vmatprep.subr.mxu0 0.0
        %1638 = vmatpush1.msra.mxu0 0.0
        %1639 = vmatprep.subr.mxu0 0.0
        %1640 = vmatpush1.msra.mxu0 0.0
        %1641 = vmatprep.subr.mxu0 0.0
        %1642 = vmatpush1.msra.mxu0 0.0
        %1643 = vmatprep.subr.mxu0 0.0
        %1644 = vmatpush1.msra.mxu0 0.0
        %1645 = vmatprep.subr.mxu0 0.0
        %1646 = vmatpush1.msra.mxu0 0.0
        %1647 = vmatprep.subr.mxu0 0.0
        %1648 = vmatpush1.msra.mxu0 0.0
        %1649 = vmatprep.subr.mxu0 0.0
        %1650 = vmatpush1.msra.mxu0 0.0
        %1651 = vmatprep.subr.mxu0 0.0
        %1652 = vmatpush1.msra.mxu0 0.0
        %1653 = vmatprep.subr.mxu0 0.0
        %1654 = vmatpush1.msra.mxu0 0.0
        %1655 = vmatprep.subr.mxu0 0.0
        %1656 = vmatpush1.msra.mxu0 0.0
        %1657 = vmatprep.subr.mxu0 0.0
        %1658 = vmatpush1.msra.mxu0 0.0
        %1659 = vmatprep.subr.mxu0 0.0
        %1660 = vmatpush1.msra.mxu0 0.0
        %1661 = vmatprep.subr.mxu0 0.0
        %1662 = vmatpush1.msra.mxu0 0.0
        %1663 = vmatprep.subr.mxu0 0.0
        %1664 = vmatpush1.msra.mxu0 0.0
        %1665 = vmatprep.subr.mxu0 0.0
        %1666 = vmatpush1.msra.mxu0 0.0
        %1667 = vmatprep.subr.mxu0 0.0
        %1668 = vmatpush1.msra.mxu0 0.0
        %1669 = vmatprep.subr.mxu0 0.0
        %1670 = vmatpush1.msra.mxu0 0.0
        %1671 = vmatprep.subr.mxu0 0.0
        %1672 = vmatpush1.msra.mxu0 0.0
        %1673 = vmatprep.subr.mxu0 0.0
        %1674 = vmatpush1.msra.mxu0 0.0
        %1675 = vmatprep.subr.mxu0 0.0
        %1676 = vmatpush1.msra.mxu0 0.0
        %1677 = vmatprep.subr.mxu0 0.0
        %1678 = vmatpush1.msra.mxu0 0.0
        %1679 = vmatprep.mubr.f32.mxu0 0.0
        %1680 = vmatmul.mubr.f32.gmra.mrb[0].mxu0 %v1606
        %v1681 = vpop.f32.mrb[0].mxu0
        %v1682 = vadd.f32 0.0, %v1681
        %v1683 = vpop.f32.mrb[0].mxu0
        %v1684 = vadd.f32 0.0, %v1683
        %1685 = vdwg.mxu0
        %1686 = vmatprep.subr.mxu0 0.0
        %1687 = vmatpush1.msra.mxu0 %v1613
        %1688 = vmatprep.subr.mxu0 0.0
        %1689 = vmatpush1.msra.mxu0 0.0
        %1690 = vmatprep.subr.mxu0 0.0
        %1691 = vmatpush1.msra.mxu0 0.0
        %1692 = vmatprep.subr.mxu0 0.0
        %1693 = vmatpush1.msra.mxu0 0.0
        %1694 = vmatprep.subr.mxu0 0.0
        %1695 = vmatpush1.msra.mxu0 0.0
        %1696 = vmatprep.subr.mxu0 0.0
        %1697 = vmatpush1.msra.mxu0 0.0
        %1698 = vmatprep.subr.mxu0 0.0
        %1699 = vmatpush1.msra.mxu0 0.0
        %1700 = vmatprep.subr.mxu0 0.0
        %1701 = vmatpush1.msra.mxu0 0.0
        %1702 = vmatprep.subr.mxu0 0.0
        %1703 = vmatpush1.msra.mxu0 0.0
        %1704 = vmatprep.subr.mxu0 0.0
        %1705 = vmatpush1.msra.mxu0 0.0
        %1706 = vmatprep.subr.mxu0 0.0
        %1707 = vmatpush1.msra.mxu0 0.0
        %1708 = vmatprep.subr.mxu0 0.0
        %1709 = vmatpush1.msra.mxu0 0.0
        %1710 = vmatprep.subr.mxu0 0.0
        %1711 = vmatpush1.msra.mxu0 0.0
        %1712 = vmatprep.subr.mxu0 0.0
        %1713 = vmatpush1.msra.mxu0 0.0
        %1714 = vmatprep.subr.mxu0 0.0
        %1715 = vmatpush1.msra.mxu0 0.0
        %1716 = vmatprep.subr.mxu0 0.0
        %1717 = vmatpush1.msra.mxu0 0.0
        %1718 = vmatprep.subr.mxu0 0.0
        %1719 = vmatpush1.msra.mxu0 0.0
        %1720 = vmatprep.subr.mxu0 0.0
        %1721 = vmatpush1.msra.mxu0 0.0
        %1722 = vmatprep.subr.mxu0 0.0
        %1723 = vmatpush1.msra.mxu0 0.0
        %1724 = vmatprep.subr.mxu0 0.0
        %1725 = vmatpush1.msra.mxu0 0.0
        %1726 = vmatprep.subr.mxu0 0.0
        %1727 = vmatpush1.msra.mxu0 0.0
        %1728 = vmatprep.subr.mxu0 0.0
        %1729 = vmatpush1.msra.mxu0 0.0
        %1730 = vmatprep.subr.mxu0 0.0
        %1731 = vmatpush1.msra.mxu0 0.0
        %1732 = vmatprep.subr.mxu0 0.0
        %1733 = vmatpush1.msra.mxu0 0.0
        %1734 = vmatprep.subr.mxu0 0.0
        %1735 = vmatpush1.msra.mxu0 0.0
        %1736 = vmatprep.subr.mxu0 0.0
        %1737 = vmatpush1.msra.mxu0 0.0
        %1738 = vmatprep.subr.mxu0 0.0
        %1739 = vmatpush1.msra.mxu0 0.0
        %1740 = vmatprep.subr.mxu0 0.0
        %1741 = vmatpush1.msra.mxu0 0.0
        %1742 = vmatprep.subr.mxu0 0.0
        %1743 = vmatpush1.msra.mxu0 0.0
        %1744 = vmatprep.subr.mxu0 0.0
        %1745 = vmatpush1.msra.mxu0 0.0
        %1746 = vmatprep.subr.mxu0 0.0
        %1747 = vmatpush1.msra.mxu0 0.0
        %1748 = vmatprep.subr.mxu0 0.0
        %1749 = vmatpush1.msra.mxu0 0.0
        %1750 = vmatprep.mubr.f32.mxu0 0.0
        %1751 = vmatmul.mubr.f32.gmra.mrb[0].mxu0 %v1606
        %v1752 = vpop.f32.mrb[0].mxu0
        %v1753 = vadd.f32 0.0, %v1752
        %v1754 = vpop.f32.mrb[0].mxu0
        %1755 = vdwg.mxu0
        %v1756 = vadd.f32 %v1588, %v1682
        %v1757 = vadd.f32 %v1589, %v1684
        %v1758 = vadd.f32 %v1590, %v1753
        %v1760 = vlaneseq
        %v1761 = vshrl.u32 %v1760, 7
        %v1762 = vsub.s32 0, %v1761
        %v1763 = vrot.slane %v261, %v1762
        %v1764 = vlaneseq
        %v1765 = vshrl.u32 %v1764, 7
        %v1766 = vsub.s32 1, %v1765
        %v1767 = vrot.slane %v261, %v1766
        %v1768 = vlaneseq
        %v1769 = vshrl.u32 %v1768, 7
        %v1770 = vsub.s32 2, %v1769
        %v1771 = vrot.slane %v261, %v1770
        %v1775 = vmul.f32 %v1756, %v1763
        %v1776 = vmul.f32 %v1757, %v1767
        %v1777 = vmul.f32 %v1758, %v1771
        %v1778 = vsel %vm296, %v1775, 0.0
        %v1779 = vsel %vm296, %v1776, 0.0
        %v1780 = vadd.f32 %v1778, %v1779
        %v1781 = vsel %vm296, %v1777, 0.0
        %v1782 = vadd.f32 %v1780, %v1781
        %1783 = vadd.xlane.f32.xlu0 %v1782
        %v1784 = vpop.xlane.xlu0 %1783
        %v1785 = vmul.f32 %v1756, %v1756
        %v1786 = vmul.f32 %v1757, %v1757
        %v1787 = vmul.f32 %v1758, %v1758
        %v1788 = vmul.f32 %v1785, %v1763
        %v1789 = vmul.f32 %v1786, %v1767
        %v1790 = vmul.f32 %v1787, %v1771
        %v1791 = vsel %vm296, %v1788, 0.0
        %v1792 = vsel %vm296, %v1789, 0.0
        %v1793 = vadd.f32 %v1791, %v1792
        %v1794 = vsel %vm296, %v1790, 0.0
        %v1795 = vadd.f32 %v1793, %v1794
        %1796 = vadd.xlane.f32.xlu0 %v1795
        %v1797 = vpop.xlane.xlu0 %1796
        %v1798 = vmul.f32 %v1784, 0.00390625
        %v1799 = vmul.f32 %v1797, 0.00390625
        %v1800 = vmul.f32 %v1798, %v1798
        %v1801 = vsub.f32 %v1799, %v1800
        %v1802 = vsub.f32 %v1756, %v1798
        %v1803 = vsub.f32 %v1757, %v1798
        %v1804 = vsub.f32 %v1758, %v1798
        %v1805 = vadd.f32 %v1801, 1e-05
        %v1806 = vrsqrt.pop %v1805
        %v1807 = vmul.f32 %v1802, %v1806
        %v1808 = vmul.f32 %v1803, %v1806
        %v1809 = vmul.f32 %v1804, %v1806
        %v1810 = vmax.f32 %v1807, 0.0
        %v1811 = vmax.f32 %v1808, 0.0
        %v1812 = vmax.f32 %v1809, 0.0
        %vm1813 = vcmp.eq.s32.totalorder %v258, 2
        %1817 = vrot.lane.b32.xlu0 %v1810, 92
        %v1818 = vpop.permute.xlu0 %1817
        %1819 = vrot.lane.b32.xlu0 %v1811, 92
        %v1820 = vpop.permute.xlu0 %1819
        %1821 = vrot.lane.b32.xlu0 %v1812, 92
        %v1822 = vpop.permute.xlu0 %1821
        %vm1823 = vcmask 752640
        %v1824 = vsel %vm1823, %v1818, %v1820
        %v1825 = vsel %vm1823, %v1820, %v1822
        %v1830 = vsel %vm1823, %v1822, %v1818
        %v1831 = vsel %vm1813, 1, 0
        %v1832 = vlaneseq
        %v1833 = vshrl.u32 %v1832, 7
        %v1834 = vsub.s32 0, %v1833
        %v1835 = vrot.slane %v1831, %v1834
        %v1836 = vlaneseq
        %v1837 = vshrl.u32 %v1836, 7
        %v1838 = vsub.s32 1, %v1837
        %v1839 = vrot.slane %v1831, %v1838
        %v1840 = vlaneseq
        %v1841 = vshrl.u32 %v1840, 7
        %v1842 = vsub.s32 2, %v1841
        %v1843 = vrot.slane %v1831, %v1842
        %vm1844 = vcmp.eq.s32.totalorder %v1835, 1
        %vm1845 = vcmp.eq.s32.totalorder %v1839, 1
        %vm1846 = vcmp.eq.s32.totalorder %v1843, 1
        %v1847 = vsel %vm1844, %v1824, %v1810
        %v1848 = vsel %vm1845, %v1825, %v1811
        %v1849 = vsel %vm1846, %v1830, %v1812
        %vm1850 = vcmp.eq.s32.totalorder %v258, 3
        %1852 = vrot.lane.b32.xlu0 %v1849, 36
        %v1853 = vpop.permute.xlu0 %1852
        %1857 = vrot.lane.b32.xlu0 %v1847, 36
        %v1858 = vpop.permute.xlu0 %1857
        %1859 = vrot.lane.b32.xlu0 %v1848, 36
        %v1860 = vpop.permute.xlu0 %1859
        %vm1861 = vcmask 293888
        %v1862 = vsel %vm1861, %v1858, %v1860
        %v1863 = vsel %vm1861, %v1860, %v1853
        %v1867 = vsel %vm1861, %v1853, %v1858
        %v1868 = vsel %vm1850, 1, 0
        %v1869 = vlaneseq
        %v1870 = vshrl.u32 %v1869, 7
        %v1871 = vsub.s32 0, %v1870
        %v1872 = vrot.slane %v1868, %v1871
        %v1873 = vlaneseq
        %v1874 = vshrl.u32 %v1873, 7
        %v1875 = vsub.s32 1, %v1874
        %v1876 = vrot.slane %v1868, %v1875
        %v1877 = vlaneseq
        %v1878 = vshrl.u32 %v1877, 7
        %v1879 = vsub.s32 2, %v1878
        %v1880 = vrot.slane %v1868, %v1879
        %vm1881 = vcmp.eq.s32.totalorder %v1872, 1
        %vm1882 = vcmp.eq.s32.totalorder %v1876, 1
        %vm1883 = vcmp.eq.s32.totalorder %v1880, 1
        %v1884 = vsel %vm1881, %v1867, %v1847
        %v1885 = vsel %vm1882, %v1862, %v1848
        %v1886 = vsel %vm1883, %v1863, %v1849
        %vm1887 = vcmp.eq.s32.totalorder %v258, 4
        %1891 = vrot.lane.b32.xlu0 %v1884, 126
        %v1892 = vpop.permute.xlu0 %1891
        %1893 = vrot.lane.b32.xlu0 %v1885, 126
        %v1894 = vpop.permute.xlu0 %1893
        %1895 = vrot.lane.b32.xlu0 %v1886, 126
        %v1896 = vpop.permute.xlu0 %1895
        %vm1897 = vcmask 1031168
        %v1898 = vsel %vm1897, %v1892, %v1894
        %v1899 = vsel %vm1897, %v1894, %v1896
        %v1904 = vsel %vm1897, %v1896, %v1892
        %v1905 = vsel %vm1887, 1, 0
        %v1906 = vlaneseq
        %v1907 = vshrl.u32 %v1906, 7
        %v1908 = vsub.s32 0, %v1907
        %v1909 = vrot.slane %v1905, %v1908
        %v1910 = vlaneseq
        %v1911 = vshrl.u32 %v1910, 7
        %v1912 = vsub.s32 1, %v1911
        %v1913 = vrot.slane %v1905, %v1912
        %v1914 = vlaneseq
        %v1915 = vshrl.u32 %v1914, 7
        %v1916 = vsub.s32 2, %v1915
        %v1917 = vrot.slane %v1905, %v1916
        %vm1918 = vcmp.eq.s32.totalorder %v1909, 1
        %vm1919 = vcmp.eq.s32.totalorder %v1913, 1
        %vm1920 = vcmp.eq.s32.totalorder %v1917, 1
        %v1921 = vsel %vm1918, %v1898, %v1884
        %v1922 = vsel %vm1919, %v1899, %v1885
        %v1923 = vsel %vm1920, %v1904, %v1886
        %vm1924 = vcmp.eq.s32.totalorder %v258, 5
        %1926 = vrot.lane.b32.xlu0 %v1923, 2
        %v1927 = vpop.permute.xlu0 %1926
        %1931 = vrot.lane.b32.xlu0 %v1921, 2
        %v1932 = vpop.permute.xlu0 %1931
        %1933 = vrot.lane.b32.xlu0 %v1922, 2
        %v1934 = vpop.permute.xlu0 %1933
        %vm1935 = vcmask 15360
        %v1936 = vsel %vm1935, %v1932, %v1934
        %v1937 = vsel %vm1935, %v1934, %v1927
        %v1941 = vsel %vm1935, %v1927, %v1932
        %v1942 = vsel %vm1924, 1, 0
        %v1943 = vlaneseq
        %v1944 = vshrl.u32 %v1943, 7
        %v1945 = vsub.s32 0, %v1944
        %v1946 = vrot.slane %v1942, %v1945
        %v1947 = vlaneseq
        %v1948 = vshrl.u32 %v1947, 7
        %v1949 = vsub.s32 1, %v1948
        %v1950 = vrot.slane %v1942, %v1949
        %v1951 = vlaneseq
        %v1952 = vshrl.u32 %v1951, 7
        %v1953 = vsub.s32 2, %v1952
        %v1954 = vrot.slane %v1942, %v1953
        %vm1955 = vcmp.eq.s32.totalorder %v1946, 1
        %vm1956 = vcmp.eq.s32.totalorder %v1950, 1
        %vm1957 = vcmp.eq.s32.totalorder %v1954, 1
        %v1958 = vsel %vm1955, %v1941, %v1921
        %v1959 = vsel %vm1956, %v1936, %v1922
        %v1960 = vsel %vm1957, %v1937, %v1923
        %1962 = vrot.lane.b32.xlu0 %v1960, 19
        %v1963 = vpop.permute.xlu0 %1962
        %1967 = vrot.lane.b32.xlu0 %v1958, 19
        %v1968 = vpop.permute.xlu0 %1967
        %1969 = vrot.lane.b32.xlu0 %v1959, 19
        %v1970 = vpop.permute.xlu0 %1969
        %v1971 = vsel %vm272, %v1968, %v1970
        %v1972 = vsel %vm272, %v1970, %v1963
        %v1974 = vsel %vm272, %v1963, %v1968
        %v1975 = vld [vmem:[#allocation8] sm:$0xf]
        %1976 = vrot.lane.b32.xlu0 %v1960, 18
        %v1977 = vpop.permute.xlu0 %1976
        %1979 = vrot.lane.b32.xlu0 %v1958, 18
        %v1980 = vpop.permute.xlu0 %1979
        %1981 = vrot.lane.b32.xlu0 %v1959, 18
        %v1982 = vpop.permute.xlu0 %1981
        %v1983 = vsel %vm285, %v1980, %v1982
        %v1984 = vsel %vm285, %v1982, %v1977
        %v1986 = vsel %vm285, %v1977, %v1980
        %s1987 = scalar_lea.vmem [#allocation8], 4
        %v1988 = vld [vmem:[%s1987] sm:$0xf]
        %v1990 = vsel %vm292, %v1988, 0
        %v1993 = vsel %vm296, %v1986, 0
        %v1995 = vsel %vm296, %v1983, 0
        %v1997 = vsel %vm296, %v1984, 0
        %1999 = vmatprep.subr.mxu0 %v1995
        %2000 = vmatpush1.msra.mxu0 %v1993
        %2001 = vmatprep.subr.mxu0 0.0
        %2002 = vmatpush1.msra.mxu0 0.0
        %2003 = vmatprep.subr.mxu0 0.0
        %2004 = vmatpush1.msra.mxu0 0.0
        %2005 = vmatprep.subr.mxu0 0.0
        %2006 = vmatpush1.msra.mxu0 0.0
        %2007 = vmatprep.subr.mxu0 0.0
        %2008 = vmatpush1.msra.mxu0 0.0
        %2009 = vmatprep.subr.mxu0 0.0
        %2010 = vmatpush1.msra.mxu0 0.0
        %2011 = vmatprep.subr.mxu0 0.0
        %2012 = vmatpush1.msra.mxu0 0.0
        %2013 = vmatprep.subr.mxu0 0.0
        %2014 = vmatpush1.msra.mxu0 0.0
        %2015 = vmatprep.subr.mxu0 0.0
        %2016 = vmatpush1.msra.mxu0 0.0
        %2017 = vmatprep.subr.mxu0 0.0
        %2018 = vmatpush1.msra.mxu0 0.0
        %2019 = vmatprep.subr.mxu0 0.0
        %2020 = vmatpush1.msra.mxu0 0.0
        %2021 = vmatprep.subr.mxu0 0.0
        %2022 = vmatpush1.msra.mxu0 0.0
        %2023 = vmatprep.subr.mxu0 0.0
        %2024 = vmatpush1.msra.mxu0 0.0
        %2025 = vmatprep.subr.mxu0 0.0
        %2026 = vmatpush1.msra.mxu0 0.0
        %2027 = vmatprep.subr.mxu0 0.0
        %2028 = vmatpush1.msra.mxu0 0.0
        %2029 = vmatprep.subr.mxu0 0.0
        %2030 = vmatpush1.msra.mxu0 0.0
        %2031 = vmatprep.subr.mxu0 0.0
        %2032 = vmatpush1.msra.mxu0 0.0
        %2033 = vmatprep.subr.mxu0 0.0
        %2034 = vmatpush1.msra.mxu0 0.0
        %2035 = vmatprep.subr.mxu0 0.0
        %2036 = vmatpush1.msra.mxu0 0.0
        %2037 = vmatprep.subr.mxu0 0.0
        %2038 = vmatpush1.msra.mxu0 0.0
        %2039 = vmatprep.subr.mxu0 0.0
        %2040 = vmatpush1.msra.mxu0 0.0
        %2041 = vmatprep.subr.mxu0 0.0
        %2042 = vmatpush1.msra.mxu0 0.0
        %2043 = vmatprep.subr.mxu0 0.0
        %2044 = vmatpush1.msra.mxu0 0.0
        %2045 = vmatprep.subr.mxu0 0.0
        %2046 = vmatpush1.msra.mxu0 0.0
        %2047 = vmatprep.subr.mxu0 0.0
        %2048 = vmatpush1.msra.mxu0 0.0
        %2049 = vmatprep.subr.mxu0 0.0
        %2050 = vmatpush1.msra.mxu0 0.0
        %2051 = vmatprep.subr.mxu0 0.0
        %2052 = vmatpush1.msra.mxu0 0.0
        %2053 = vmatprep.subr.mxu0 0.0
        %2054 = vmatpush1.msra.mxu0 0.0
        %2055 = vmatprep.subr.mxu0 0.0
        %2056 = vmatpush1.msra.mxu0 0.0
        %2057 = vmatprep.subr.mxu0 0.0
        %2058 = vmatpush1.msra.mxu0 0.0
        %2059 = vmatprep.subr.mxu0 0.0
        %2060 = vmatpush1.msra.mxu0 0.0
        %2061 = vmatprep.subr.mxu0 0.0
        %2062 = vmatpush1.msra.mxu0 0.0
        %2063 = vmatprep.mubr.f32.mxu0 0.0
        %2064 = vmatmul.mubr.f32.gmra.mrb[0].mxu0 %v1990
        %v2065 = vpop.f32.mrb[0].mxu0
        %v2066 = vadd.f32 0.0, %v2065
        %v2067 = vpop.f32.mrb[0].mxu0
        %v2068 = vadd.f32 0.0, %v2067
        %2069 = vdwg.mxu0
        %2070 = vmatprep.subr.mxu0 0.0
        %2071 = vmatpush1.msra.mxu0 %v1997
        %2072 = vmatprep.subr.mxu0 0.0
        %2073 = vmatpush1.msra.mxu0 0.0
        %2074 = vmatprep.subr.mxu0 0.0
        %2075 = vmatpush1.msra.mxu0 0.0
        %2076 = vmatprep.subr.mxu0 0.0
        %2077 = vmatpush1.msra.mxu0 0.0
        %2078 = vmatprep.subr.mxu0 0.0
        %2079 = vmatpush1.msra.mxu0 0.0
        %2080 = vmatprep.subr.mxu0 0.0
        %2081 = vmatpush1.msra.mxu0 0.0
        %2082 = vmatprep.subr.mxu0 0.0
        %2083 = vmatpush1.msra.mxu0 0.0
        %2084 = vmatprep.subr.mxu0 0.0
        %2085 = vmatpush1.msra.mxu0 0.0
        %2086 = vmatprep.subr.mxu0 0.0
        %2087 = vmatpush1.msra.mxu0 0.0
        %2088 = vmatprep.subr.mxu0 0.0
        %2089 = vmatpush1.msra.mxu0 0.0
        %2090 = vmatprep.subr.mxu0 0.0
        %2091 = vmatpush1.msra.mxu0 0.0
        %2092 = vmatprep.subr.mxu0 0.0
        %2093 = vmatpush1.msra.mxu0 0.0
        %2094 = vmatprep.subr.mxu0 0.0
        %2095 = vmatpush1.msra.mxu0 0.0
        %2096 = vmatprep.subr.mxu0 0.0
        %2097 = vmatpush1.msra.mxu0 0.0
        %2098 = vmatprep.subr.mxu0 0.0
        %2099 = vmatpush1.msra.mxu0 0.0
        %2100 = vmatprep.subr.mxu0 0.0
        %2101 = vmatpush1.msra.mxu0 0.0
        %2102 = vmatprep.subr.mxu0 0.0
        %2103 = vmatpush1.msra.mxu0 0.0
        %2104 = vmatprep.subr.mxu0 0.0
        %2105 = vmatpush1.msra.mxu0 0.0
        %2106 = vmatprep.subr.mxu0 0.0
        %2107 = vmatpush1.msra.mxu0 0.0
        %2108 = vmatprep.subr.mxu0 0.0
        %2109 = vmatpush1.msra.mxu0 0.0
        %2110 = vmatprep.subr.mxu0 0.0
        %2111 = vmatpush1.msra.mxu0 0.0
        %2112 = vmatprep.subr.mxu0 0.0
        %2113 = vmatpush1.msra.mxu0 0.0
        %2114 = vmatprep.subr.mxu0 0.0
        %2115 = vmatpush1.msra.mxu0 0.0
        %2116 = vmatprep.subr.mxu0 0.0
        %2117 = vmatpush1.msra.mxu0 0.0
        %2118 = vmatprep.subr.mxu0 0.0
        %2119 = vmatpush1.msra.mxu0 0.0
        %2120 = vmatprep.subr.mxu0 0.0
        %2121 = vmatpush1.msra.mxu0 0.0
        %2122 = vmatprep.subr.mxu0 0.0
        %2123 = vmatpush1.msra.mxu0 0.0
        %2124 = vmatprep.subr.mxu0 0.0
        %2125 = vmatpush1.msra.mxu0 0.0
        %2126 = vmatprep.subr.mxu0 0.0
        %2127 = vmatpush1.msra.mxu0 0.0
        %2128 = vmatprep.subr.mxu0 0.0
        %2129 = vmatpush1.msra.mxu0 0.0
        %2130 = vmatprep.subr.mxu0 0.0
        %2131 = vmatpush1.msra.mxu0 0.0
        %2132 = vmatprep.subr.mxu0 0.0
        %2133 = vmatpush1.msra.mxu0 0.0
        %2134 = vmatprep.mubr.f32.mxu0 0.0
        %2135 = vmatmul.mubr.f32.gmra.mrb[0].mxu0 %v1990
        %v2136 = vpop.f32.mrb[0].mxu0
        %v2137 = vadd.f32 0.0, %v2136
        %v2138 = vpop.f32.mrb[0].mxu0
        %2139 = vdwg.mxu0
        %v2141 = vsel %vm292, %v1975, 0
        %v2144 = vsel %vm296, %v1974, 0
        %v2146 = vsel %vm296, %v1971, 0
        %v2148 = vsel %vm296, %v1972, 0
        %2150 = vmatprep.subr.mxu0 %v2146
        %2151 = vmatpush1.msra.mxu0 %v2144
        %2152 = vmatprep.subr.mxu0 0.0
        %2153 = vmatpush1.msra.mxu0 0.0
        %2154 = vmatprep.subr.mxu0 0.0
        %2155 = vmatpush1.msra.mxu0 0.0
        %2156 = vmatprep.subr.mxu0 0.0
        %2157 = vmatpush1.msra.mxu0 0.0
        %2158 = vmatprep.subr.mxu0 0.0
        %2159 = vmatpush1.msra.mxu0 0.0
        %2160 = vmatprep.subr.mxu0 0.0
        %2161 = vmatpush1.msra.mxu0 0.0
        %2162 = vmatprep.subr.mxu0 0.0
        %2163 = vmatpush1.msra.mxu0 0.0
        %2164 = vmatprep.subr.mxu0 0.0
        %2165 = vmatpush1.msra.mxu0 0.0
        %2166 = vmatprep.subr.mxu0 0.0
        %2167 = vmatpush1.msra.mxu0 0.0
        %2168 = vmatprep.subr.mxu0 0.0
        %2169 = vmatpush1.msra.mxu0 0.0
        %2170 = vmatprep.subr.mxu0 0.0
        %2171 = vmatpush1.msra.mxu0 0.0
        %2172 = vmatprep.subr.mxu0 0.0
        %2173 = vmatpush1.msra.mxu0 0.0
        %2174 = vmatprep.subr.mxu0 0.0
        %2175 = vmatpush1.msra.mxu0 0.0
        %2176 = vmatprep.subr.mxu0 0.0
        %2177 = vmatpush1.msra.mxu0 0.0
        %2178 = vmatprep.subr.mxu0 0.0
        %2179 = vmatpush1.msra.mxu0 0.0
        %2180 = vmatprep.subr.mxu0 0.0
        %2181 = vmatpush1.msra.mxu0 0.0
        %2182 = vmatprep.subr.mxu0 0.0
        %2183 = vmatpush1.msra.mxu0 0.0
        %2184 = vmatprep.subr.mxu0 0.0
        %2185 = vmatpush1.msra.mxu0 0.0
        %2186 = vmatprep.subr.mxu0 0.0
        %2187 = vmatpush1.msra.mxu0 0.0
        %2188 = vmatprep.subr.mxu0 0.0
        %2189 = vmatpush1.msra.mxu0 0.0
        %2190 = vmatprep.subr.mxu0 0.0
        %2191 = vmatpush1.msra.mxu0 0.0
        %2192 = vmatprep.subr.mxu0 0.0
        %2193 = vmatpush1.msra.mxu0 0.0
        %2194 = vmatprep.subr.mxu0 0.0
        %2195 = vmatpush1.msra.mxu0 0.0
        %2196 = vmatprep.subr.mxu0 0.0
        %2197 = vmatpush1.msra.mxu0 0.0
        %2198 = vmatprep.subr.mxu0 0.0
        %2199 = vmatpush1.msra.mxu0 0.0
        %2200 = vmatprep.subr.mxu0 0.0
        %2201 = vmatpush1.msra.mxu0 0.0
        %2202 = vmatprep.subr.mxu0 0.0
        %2203 = vmatpush1.msra.mxu0 0.0
        %2204 = vmatprep.subr.mxu0 0.0
        %2205 = vmatpush1.msra.mxu0 0.0
        %2206 = vmatprep.subr.mxu0 0.0
        %2207 = vmatpush1.msra.mxu0 0.0
        %2208 = vmatprep.subr.mxu0 0.0
        %2209 = vmatpush1.msra.mxu0 0.0
        %2210 = vmatprep.subr.mxu0 0.0
        %2211 = vmatpush1.msra.mxu0 0.0
        %2212 = vmatprep.subr.mxu0 0.0
        %2213 = vmatpush1.msra.mxu0 0.0
        %2214 = vmatprep.mubr.f32.mxu0 0.0
        %2215 = vmatmul.mubr.f32.gmra.mrb[0].mxu0 %v2141
        %v2216 = vpop.f32.mrb[0].mxu0
        %v2217 = vadd.f32 %v2066, %v2216
        %v2218 = vpop.f32.mrb[0].mxu0
        %v2219 = vadd.f32 %v2068, %v2218
        %2220 = vdwg.mxu0
        %2221 = vmatprep.subr.mxu0 0.0
        %2222 = vmatpush1.msra.mxu0 %v2148
        %2223 = vmatprep.subr.mxu0 0.0
        %2224 = vmatpush1.msra.mxu0 0.0
        %2225 = vmatprep.subr.mxu0 0.0
        %2226 = vmatpush1.msra.mxu0 0.0
        %2227 = vmatprep.subr.mxu0 0.0
        %2228 = vmatpush1.msra.mxu0 0.0
        %2229 = vmatprep.subr.mxu0 0.0
        %2230 = vmatpush1.msra.mxu0 0.0
        %2231 = vmatprep.subr.mxu0 0.0
        %2232 = vmatpush1.msra.mxu0 0.0
        %2233 = vmatprep.subr.mxu0 0.0
        %2234 = vmatpush1.msra.mxu0 0.0
        %2235 = vmatprep.subr.mxu0 0.0
        %2236 = vmatpush1.msra.mxu0 0.0
        %2237 = vmatprep.subr.mxu0 0.0
        %2238 = vmatpush1.msra.mxu0 0.0
        %2239 = vmatprep.subr.mxu0 0.0
        %2240 = vmatpush1.msra.mxu0 0.0
        %2241 = vmatprep.subr.mxu0 0.0
        %2242 = vmatpush1.msra.mxu0 0.0
        %2243 = vmatprep.subr.mxu0 0.0
        %2244 = vmatpush1.msra.mxu0 0.0
        %2245 = vmatprep.subr.mxu0 0.0
        %2246 = vmatpush1.msra.mxu0 0.0
        %2247 = vmatprep.subr.mxu0 0.0
        %2248 = vmatpush1.msra.mxu0 0.0
        %2249 = vmatprep.subr.mxu0 0.0
        %2250 = vmatpush1.msra.mxu0 0.0
        %2251 = vmatprep.subr.mxu0 0.0
        %2252 = vmatpush1.msra.mxu0 0.0
        %2253 = vmatprep.subr.mxu0 0.0
        %2254 = vmatpush1.msra.mxu0 0.0
        %2255 = vmatprep.subr.mxu0 0.0
        %2256 = vmatpush1.msra.mxu0 0.0
        %2257 = vmatprep.subr.mxu0 0.0
        %2258 = vmatpush1.msra.mxu0 0.0
        %2259 = vmatprep.subr.mxu0 0.0
        %2260 = vmatpush1.msra.mxu0 0.0
        %2261 = vmatprep.subr.mxu0 0.0
        %2262 = vmatpush1.msra.mxu0 0.0
        %2263 = vmatprep.subr.mxu0 0.0
        %2264 = vmatpush1.msra.mxu0 0.0
        %2265 = vmatprep.subr.mxu0 0.0
        %2266 = vmatpush1.msra.mxu0 0.0
        %2267 = vmatprep.subr.mxu0 0.0
        %2268 = vmatpush1.msra.mxu0 0.0
        %2269 = vmatprep.subr.mxu0 0.0
        %2270 = vmatpush1.msra.mxu0 0.0
        %2271 = vmatprep.subr.mxu0 0.0
        %2272 = vmatpush1.msra.mxu0 0.0
        %2273 = vmatprep.subr.mxu0 0.0
        %2274 = vmatpush1.msra.mxu0 0.0
        %2275 = vmatprep.subr.mxu0 0.0
        %2276 = vmatpush1.msra.mxu0 0.0
        %2277 = vmatprep.subr.mxu0 0.0
        %2278 = vmatpush1.msra.mxu0 0.0
        %2279 = vmatprep.subr.mxu0 0.0
        %2280 = vmatpush1.msra.mxu0 0.0
        %2281 = vmatprep.subr.mxu0 0.0
        %2282 = vmatpush1.msra.mxu0 0.0
        %2283 = vmatprep.subr.mxu0 0.0
        %2284 = vmatpush1.msra.mxu0 0.0
        %2285 = vmatprep.mubr.f32.mxu0 0.0
        %2286 = vmatmul.mubr.f32.gmra.mrb[0].mxu0 %v2141
        %v2287 = vpop.f32.mrb[0].mxu0
        %v2288 = vadd.f32 %v2137, %v2287
        %v2289 = vpop.f32.mrb[0].mxu0
        %2290 = vdwg.mxu0
        %2291 = vrot.lane.b32.xlu0 %v1960, 17
        %v2292 = vpop.permute.xlu0 %2291
        %2294 = vrot.lane.b32.xlu0 %v1958, 17
        %v2295 = vpop.permute.xlu0 %2294
        %2296 = vrot.lane.b32.xlu0 %v1959, 17
        %v2297 = vpop.permute.xlu0 %2296
        %v2298 = vsel %vm603, %v2295, %v2297
        %v2299 = vsel %vm603, %v2297, %v2292
        %v2301 = vsel %vm603, %v2292, %v2295
        %s2302 = scalar_lea.vmem [#allocation8], 8
        %v2303 = vld [vmem:[%s2302] sm:$0xf]
        %v2305 = vsel %vm292, %v2303, 0
        %v2308 = vsel %vm296, %v2301, 0
        %v2310 = vsel %vm296, %v2298, 0
        %v2312 = vsel %vm296, %v2299, 0
        %2314 = vmatprep.subr.mxu0 %v2310
        %2315 = vmatpush1.msra.mxu0 %v2308
        %2316 = vmatprep.subr.mxu0 0.0
        %2317 = vmatpush1.msra.mxu0 0.0
        %2318 = vmatprep.subr.mxu0 0.0
        %2319 = vmatpush1.msra.mxu0 0.0
        %2320 = vmatprep.subr.mxu0 0.0
        %2321 = vmatpush1.msra.mxu0 0.0
        %2322 = vmatprep.subr.mxu0 0.0
        %2323 = vmatpush1.msra.mxu0 0.0
        %2324 = vmatprep.subr.mxu0 0.0
        %2325 = vmatpush1.msra.mxu0 0.0
        %2326 = vmatprep.subr.mxu0 0.0
        %2327 = vmatpush1.msra.mxu0 0.0
        %2328 = vmatprep.subr.mxu0 0.0
        %2329 = vmatpush1.msra.mxu0 0.0
        %2330 = vmatprep.subr.mxu0 0.0
        %2331 = vmatpush1.msra.mxu0 0.0
        %2332 = vmatprep.subr.mxu0 0.0
        %2333 = vmatpush1.msra.mxu0 0.0
        %2334 = vmatprep.subr.mxu0 0.0
        %2335 = vmatpush1.msra.mxu0 0.0
        %2336 = vmatprep.subr.mxu0 0.0
        %2337 = vmatpush1.msra.mxu0 0.0
        %2338 = vmatprep.subr.mxu0 0.0
        %2339 = vmatpush1.msra.mxu0 0.0
        %2340 = vmatprep.subr.mxu0 0.0
        %2341 = vmatpush1.msra.mxu0 0.0
        %2342 = vmatprep.subr.mxu0 0.0
        %2343 = vmatpush1.msra.mxu0 0.0
        %2344 = vmatprep.subr.mxu0 0.0
        %2345 = vmatpush1.msra.mxu0 0.0
        %2346 = vmatprep.subr.mxu0 0.0
        %2347 = vmatpush1.msra.mxu0 0.0
        %2348 = vmatprep.subr.mxu0 0.0
        %2349 = vmatpush1.msra.mxu0 0.0
        %2350 = vmatprep.subr.mxu0 0.0
        %2351 = vmatpush1.msra.mxu0 0.0
        %2352 = vmatprep.subr.mxu0 0.0
        %2353 = vmatpush1.msra.mxu0 0.0
        %2354 = vmatprep.subr.mxu0 0.0
        %2355 = vmatpush1.msra.mxu0 0.0
        %2356 = vmatprep.subr.mxu0 0.0
        %2357 = vmatpush1.msra.mxu0 0.0
        %2358 = vmatprep.subr.mxu0 0.0
        %2359 = vmatpush1.msra.mxu0 0.0
        %2360 = vmatprep.subr.mxu0 0.0
        %2361 = vmatpush1.msra.mxu0 0.0
        %2362 = vmatprep.subr.mxu0 0.0
        %2363 = vmatpush1.msra.mxu0 0.0
        %2364 = vmatprep.subr.mxu0 0.0
        %2365 = vmatpush1.msra.mxu0 0.0
        %2366 = vmatprep.subr.mxu0 0.0
        %2367 = vmatpush1.msra.mxu0 0.0
        %2368 = vmatprep.subr.mxu0 0.0
        %2369 = vmatpush1.msra.mxu0 0.0
        %2370 = vmatprep.subr.mxu0 0.0
        %2371 = vmatpush1.msra.mxu0 0.0
        %2372 = vmatprep.subr.mxu0 0.0
        %2373 = vmatpush1.msra.mxu0 0.0
        %2374 = vmatprep.subr.mxu0 0.0
        %2375 = vmatpush1.msra.mxu0 0.0
        %2376 = vmatprep.subr.mxu0 0.0
        %2377 = vmatpush1.msra.mxu0 0.0
        %2378 = vmatprep.mubr.f32.mxu0 0.0
        %2379 = vmatmul.mubr.f32.gmra.mrb[0].mxu0 %v2305
        %v2380 = vpop.f32.mrb[0].mxu0
        %v2381 = vadd.f32 0.0, %v2380
        %v2382 = vpop.f32.mrb[0].mxu0
        %v2383 = vadd.f32 0.0, %v2382
        %2384 = vdwg.mxu0
        %2385 = vmatprep.subr.mxu0 0.0
        %2386 = vmatpush1.msra.mxu0 %v2312
        %2387 = vmatprep.subr.mxu0 0.0
        %2388 = vmatpush1.msra.mxu0 0.0
        %2389 = vmatprep.subr.mxu0 0.0
        %2390 = vmatpush1.msra.mxu0 0.0
        %2391 = vmatprep.subr.mxu0 0.0
        %2392 = vmatpush1.msra.mxu0 0.0
        %2393 = vmatprep.subr.mxu0 0.0
        %2394 = vmatpush1.msra.mxu0 0.0
        %2395 = vmatprep.subr.mxu0 0.0
        %2396 = vmatpush1.msra.mxu0 0.0
        %2397 = vmatprep.subr.mxu0 0.0
        %2398 = vmatpush1.msra.mxu0 0.0
        %2399 = vmatprep.subr.mxu0 0.0
        %2400 = vmatpush1.msra.mxu0 0.0
        %2401 = vmatprep.subr.mxu0 0.0
        %2402 = vmatpush1.msra.mxu0 0.0
        %2403 = vmatprep.subr.mxu0 0.0
        %2404 = vmatpush1.msra.mxu0 0.0
        %2405 = vmatprep.subr.mxu0 0.0
        %2406 = vmatpush1.msra.mxu0 0.0
        %2407 = vmatprep.subr.mxu0 0.0
        %2408 = vmatpush1.msra.mxu0 0.0
        %2409 = vmatprep.subr.mxu0 0.0
        %2410 = vmatpush1.msra.mxu0 0.0
        %2411 = vmatprep.subr.mxu0 0.0
        %2412 = vmatpush1.msra.mxu0 0.0
        %2413 = vmatprep.subr.mxu0 0.0
        %2414 = vmatpush1.msra.mxu0 0.0
        %2415 = vmatprep.subr.mxu0 0.0
        %2416 = vmatpush1.msra.mxu0 0.0
        %2417 = vmatprep.subr.mxu0 0.0
        %2418 = vmatpush1.msra.mxu0 0.0
        %2419 = vmatprep.subr.mxu0 0.0
        %2420 = vmatpush1.msra.mxu0 0.0
        %2421 = vmatprep.subr.mxu0 0.0
        %2422 = vmatpush1.msra.mxu0 0.0
        %2423 = vmatprep.subr.mxu0 0.0
        %2424 = vmatpush1.msra.mxu0 0.0
        %2425 = vmatprep.subr.mxu0 0.0
        %2426 = vmatpush1.msra.mxu0 0.0
        %2427 = vmatprep.subr.mxu0 0.0
        %2428 = vmatpush1.msra.mxu0 0.0
        %2429 = vmatprep.subr.mxu0 0.0
        %2430 = vmatpush1.msra.mxu0 0.0
        %2431 = vmatprep.subr.mxu0 0.0
        %2432 = vmatpush1.msra.mxu0 0.0
        %2433 = vmatprep.subr.mxu0 0.0
        %2434 = vmatpush1.msra.mxu0 0.0
        %2435 = vmatprep.subr.mxu0 0.0
        %2436 = vmatpush1.msra.mxu0 0.0
        %2437 = vmatprep.subr.mxu0 0.0
        %2438 = vmatpush1.msra.mxu0 0.0
        %2439 = vmatprep.subr.mxu0 0.0
        %2440 = vmatpush1.msra.mxu0 0.0
        %2441 = vmatprep.subr.mxu0 0.0
        %2442 = vmatpush1.msra.mxu0 0.0
        %2443 = vmatprep.subr.mxu0 0.0
        %2444 = vmatpush1.msra.mxu0 0.0
        %2445 = vmatprep.subr.mxu0 0.0
        %2446 = vmatpush1.msra.mxu0 0.0
        %2447 = vmatprep.subr.mxu0 0.0
        %2448 = vmatpush1.msra.mxu0 0.0
        %2449 = vmatprep.mubr.f32.mxu0 0.0
        %2450 = vmatmul.mubr.f32.gmra.mrb[0].mxu0 %v2305
        %v2451 = vpop.f32.mrb[0].mxu0
        %v2452 = vadd.f32 0.0, %v2451
        %v2453 = vpop.f32.mrb[0].mxu0
        %2454 = vdwg.mxu0
        %v2455 = vadd.f32 %v2217, %v2381
        %v2456 = vadd.f32 %v2219, %v2383
        %v2457 = vadd.f32 %v2288, %v2452
        %2458 = vrot.lane.b32.xlu0 %v1960, 1
        %v2459 = vpop.permute.xlu0 %2458
        %2461 = vrot.lane.b32.xlu0 %v1958, 1
        %v2462 = vpop.permute.xlu0 %2461
        %2463 = vrot.lane.b32.xlu0 %v1959, 1
        %v2464 = vpop.permute.xlu0 %2463
        %v2465 = vsel %vm771, %v2462, %v2464
        %v2466 = vsel %vm771, %v2464, %v2459
        %v2468 = vsel %vm771, %v2459, %v2462
        %s2469 = scalar_lea.vmem [#allocation8], 12
        %v2470 = vld [vmem:[%s2469] sm:$0xf]
        %v2472 = vsel %vm292, %v2470, 0
        %v2475 = vsel %vm296, %v2468, 0
        %v2477 = vsel %vm296, %v2465, 0
        %v2479 = vsel %vm296, %v2466, 0
        %2481 = vmatprep.subr.mxu0 %v2477
        %2482 = vmatpush1.msra.mxu0 %v2475
        %2483 = vmatprep.subr.mxu0 0.0
        %2484 = vmatpush1.msra.mxu0 0.0
        %2485 = vmatprep.subr.mxu0 0.0
        %2486 = vmatpush1.msra.mxu0 0.0
        %2487 = vmatprep.subr.mxu0 0.0
        %2488 = vmatpush1.msra.mxu0 0.0
        %2489 = vmatprep.subr.mxu0 0.0
        %2490 = vmatpush1.msra.mxu0 0.0
        %2491 = vmatprep.subr.mxu0 0.0
        %2492 = vmatpush1.msra.mxu0 0.0
        %2493 = vmatprep.subr.mxu0 0.0
        %2494 = vmatpush1.msra.mxu0 0.0
        %2495 = vmatprep.subr.mxu0 0.0
        %2496 = vmatpush1.msra.mxu0 0.0
        %2497 = vmatprep.subr.mxu0 0.0
        %2498 = vmatpush1.msra.mxu0 0.0
        %2499 = vmatprep.subr.mxu0 0.0
        %2500 = vmatpush1.msra.mxu0 0.0
        %2501 = vmatprep.subr.mxu0 0.0
        %2502 = vmatpush1.msra.mxu0 0.0
        %2503 = vmatprep.subr.mxu0 0.0
        %2504 = vmatpush1.msra.mxu0 0.0
        %2505 = vmatprep.subr.mxu0 0.0
        %2506 = vmatpush1.msra.mxu0 0.0
        %2507 = vmatprep.subr.mxu0 0.0
        %2508 = vmatpush1.msra.mxu0 0.0
        %2509 = vmatprep.subr.mxu0 0.0
        %2510 = vmatpush1.msra.mxu0 0.0
        %2511 = vmatprep.subr.mxu0 0.0
        %2512 = vmatpush1.msra.mxu0 0.0
        %2513 = vmatprep.subr.mxu0 0.0
        %2514 = vmatpush1.msra.mxu0 0.0
        %2515 = vmatprep.subr.mxu0 0.0
        %2516 = vmatpush1.msra.mxu0 0.0
        %2517 = vmatprep.subr.mxu0 0.0
        %2518 = vmatpush1.msra.mxu0 0.0
        %2519 = vmatprep.subr.mxu0 0.0
        %2520 = vmatpush1.msra.mxu0 0.0
        %2521 = vmatprep.subr.mxu0 0.0
        %2522 = vmatpush1.msra.mxu0 0.0
        %2523 = vmatprep.subr.mxu0 0.0
        %2524 = vmatpush1.msra.mxu0 0.0
        %2525 = vmatprep.subr.mxu0 0.0
        %2526 = vmatpush1.msra.mxu0 0.0
        %2527 = vmatprep.subr.mxu0 0.0
        %2528 = vmatpush1.msra.mxu0 0.0
        %2529 = vmatprep.subr.mxu0 0.0
        %2530 = vmatpush1.msra.mxu0 0.0
        %2531 = vmatprep.subr.mxu0 0.0
        %2532 = vmatpush1.msra.mxu0 0.0
        %2533 = vmatprep.subr.mxu0 0.0
        %2534 = vmatpush1.msra.mxu0 0.0
        %2535 = vmatprep.subr.mxu0 0.0
        %2536 = vmatpush1.msra.mxu0 0.0
        %2537 = vmatprep.subr.mxu0 0.0
        %2538 = vmatpush1.msra.mxu0 0.0
        %2539 = vmatprep.subr.mxu0 0.0
        %2540 = vmatpush1.msra.mxu0 0.0
        %2541 = vmatprep.subr.mxu0 0.0
        %2542 = vmatpush1.msra.mxu0 0.0
        %2543 = vmatprep.subr.mxu0 0.0
        %2544 = vmatpush1.msra.mxu0 0.0
        %2545 = vmatprep.mubr.f32.mxu0 0.0
        %2546 = vmatmul.mubr.f32.gmra.mrb[0].mxu0 %v2472
        %v2547 = vpop.f32.mrb[0].mxu0
        %v2548 = vadd.f32 0.0, %v2547
        %v2549 = vpop.f32.mrb[0].mxu0
        %v2550 = vadd.f32 0.0, %v2549
        %2551 = vdwg.mxu0
        %2552 = vmatprep.subr.mxu0 0.0
        %2553 = vmatpush1.msra.mxu0 %v2479
        %2554 = vmatprep.subr.mxu0 0.0
        %2555 = vmatpush1.msra.mxu0 0.0
        %2556 = vmatprep.subr.mxu0 0.0
        %2557 = vmatpush1.msra.mxu0 0.0
        %2558 = vmatprep.subr.mxu0 0.0
        %2559 = vmatpush1.msra.mxu0 0.0
        %2560 = vmatprep.subr.mxu0 0.0
        %2561 = vmatpush1.msra.mxu0 0.0
        %2562 = vmatprep.subr.mxu0 0.0
        %2563 = vmatpush1.msra.mxu0 0.0
        %2564 = vmatprep.subr.mxu0 0.0
        %2565 = vmatpush1.msra.mxu0 0.0
        %2566 = vmatprep.subr.mxu0 0.0
        %2567 = vmatpush1.msra.mxu0 0.0
        %2568 = vmatprep.subr.mxu0 0.0
        %2569 = vmatpush1.msra.mxu0 0.0
        %2570 = vmatprep.subr.mxu0 0.0
        %2571 = vmatpush1.msra.mxu0 0.0
        %2572 = vmatprep.subr.mxu0 0.0
        %2573 = vmatpush1.msra.mxu0 0.0
        %2574 = vmatprep.subr.mxu0 0.0
        %2575 = vmatpush1.msra.mxu0 0.0
        %2576 = vmatprep.subr.mxu0 0.0
        %2577 = vmatpush1.msra.mxu0 0.0
        %2578 = vmatprep.subr.mxu0 0.0
        %2579 = vmatpush1.msra.mxu0 0.0
        %2580 = vmatprep.subr.mxu0 0.0
        %2581 = vmatpush1.msra.mxu0 0.0
        %2582 = vmatprep.subr.mxu0 0.0
        %2583 = vmatpush1.msra.mxu0 0.0
        %2584 = vmatprep.subr.mxu0 0.0
        %2585 = vmatpush1.msra.mxu0 0.0
        %2586 = vmatprep.subr.mxu0 0.0
        %2587 = vmatpush1.msra.mxu0 0.0
        %2588 = vmatprep.subr.mxu0 0.0
        %2589 = vmatpush1.msra.mxu0 0.0
        %2590 = vmatprep.subr.mxu0 0.0
        %2591 = vmatpush1.msra.mxu0 0.0
        %2592 = vmatprep.subr.mxu0 0.0
        %2593 = vmatpush1.msra.mxu0 0.0
        %2594 = vmatprep.subr.mxu0 0.0
        %2595 = vmatpush1.msra.mxu0 0.0
        %2596 = vmatprep.subr.mxu0 0.0
        %2597 = vmatpush1.msra.mxu0 0.0
        %2598 = vmatprep.subr.mxu0 0.0
        %2599 = vmatpush1.msra.mxu0 0.0
        %2600 = vmatprep.subr.mxu0 0.0
        %2601 = vmatpush1.msra.mxu0 0.0
        %2602 = vmatprep.subr.mxu0 0.0
        %2603 = vmatpush1.msra.mxu0 0.0
        %2604 = vmatprep.subr.mxu0 0.0
        %2605 = vmatpush1.msra.mxu0 0.0
        %2606 = vmatprep.subr.mxu0 0.0
        %2607 = vmatpush1.msra.mxu0 0.0
        %2608 = vmatprep.subr.mxu0 0.0
        %2609 = vmatpush1.msra.mxu0 0.0
        %2610 = vmatprep.subr.mxu0 0.0
        %2611 = vmatpush1.msra.mxu0 0.0
        %2612 = vmatprep.subr.mxu0 0.0
        %2613 = vmatpush1.msra.mxu0 0.0
        %2614 = vmatprep.subr.mxu0 0.0
        %2615 = vmatpush1.msra.mxu0 0.0
        %2616 = vmatprep.mubr.f32.mxu0 0.0
        %2617 = vmatmul.mubr.f32.gmra.mrb[0].mxu0 %v2472
        %v2618 = vpop.f32.mrb[0].mxu0
        %v2619 = vadd.f32 0.0, %v2618
        %v2620 = vpop.f32.mrb[0].mxu0
        %2621 = vdwg.mxu0
        %v2622 = vadd.f32 %v2455, %v2548
        %v2623 = vadd.f32 %v2456, %v2550
        %v2624 = vadd.f32 %v2457, %v2619
        %s2625 = scalar_lea.vmem [#allocation8], 16
        %v2626 = vld [vmem:[%s2625] sm:$0xf]
        %v2628 = vsel %vm292, %v2626, 0
        %v2630 = vsel %vm296, %v1958, 0
        %v2632 = vsel %vm296, %v1959, 0
        %v2634 = vsel %vm296, %v1960, 0
        %2636 = vmatprep.subr.mxu0 %v2632
        %2637 = vmatpush1.msra.mxu0 %v2630
        %2638 = vmatprep.subr.mxu0 0.0
        %2639 = vmatpush1.msra.mxu0 0.0
        %2640 = vmatprep.subr.mxu0 0.0
        %2641 = vmatpush1.msra.mxu0 0.0
        %2642 = vmatprep.subr.mxu0 0.0
        %2643 = vmatpush1.msra.mxu0 0.0
        %2644 = vmatprep.subr.mxu0 0.0
        %2645 = vmatpush1.msra.mxu0 0.0
        %2646 = vmatprep.subr.mxu0 0.0
        %2647 = vmatpush1.msra.mxu0 0.0
        %2648 = vmatprep.subr.mxu0 0.0
        %2649 = vmatpush1.msra.mxu0 0.0
        %2650 = vmatprep.subr.mxu0 0.0
        %2651 = vmatpush1.msra.mxu0 0.0
        %2652 = vmatprep.subr.mxu0 0.0
        %2653 = vmatpush1.msra.mxu0 0.0
        %2654 = vmatprep.subr.mxu0 0.0
        %2655 = vmatpush1.msra.mxu0 0.0
        %2656 = vmatprep.subr.mxu0 0.0
        %2657 = vmatpush1.msra.mxu0 0.0
        %2658 = vmatprep.subr.mxu0 0.0
        %2659 = vmatpush1.msra.mxu0 0.0
        %2660 = vmatprep.subr.mxu0 0.0
        %2661 = vmatpush1.msra.mxu0 0.0
        %2662 = vmatprep.subr.mxu0 0.0
        %2663 = vmatpush1.msra.mxu0 0.0
        %2664 = vmatprep.subr.mxu0 0.0
        %2665 = vmatpush1.msra.mxu0 0.0
        %2666 = vmatprep.subr.mxu0 0.0
        %2667 = vmatpush1.msra.mxu0 0.0
        %2668 = vmatprep.subr.mxu0 0.0
        %2669 = vmatpush1.msra.mxu0 0.0
        %2670 = vmatprep.subr.mxu0 0.0
        %2671 = vmatpush1.msra.mxu0 0.0
        %2672 = vmatprep.subr.mxu0 0.0
        %2673 = vmatpush1.msra.mxu0 0.0
        %2674 = vmatprep.subr.mxu0 0.0
        %2675 = vmatpush1.msra.mxu0 0.0
        %2676 = vmatprep.subr.mxu0 0.0
        %2677 = vmatpush1.msra.mxu0 0.0
        %2678 = vmatprep.subr.mxu0 0.0
        %2679 = vmatpush1.msra.mxu0 0.0
        %2680 = vmatprep.subr.mxu0 0.0
        %2681 = vmatpush1.msra.mxu0 0.0
        %2682 = vmatprep.subr.mxu0 0.0
        %2683 = vmatpush1.msra.mxu0 0.0
        %2684 = vmatprep.subr.mxu0 0.0
        %2685 = vmatpush1.msra.mxu0 0.0
        %2686 = vmatprep.subr.mxu0 0.0
        %2687 = vmatpush1.msra.mxu0 0.0
        %2688 = vmatprep.subr.mxu0 0.0
        %2689 = vmatpush1.msra.mxu0 0.0
        %2690 = vmatprep.subr.mxu0 0.0
        %2691 = vmatpush1.msra.mxu0 0.0
        %2692 = vmatprep.subr.mxu0 0.0
        %2693 = vmatpush1.msra.mxu0 0.0
        %2694 = vmatprep.subr.mxu0 0.0
        %2695 = vmatpush1.msra.mxu0 0.0
        %2696 = vmatprep.subr.mxu0 0.0
        %2697 = vmatpush1.msra.mxu0 0.0
        %2698 = vmatprep.subr.mxu0 0.0
        %2699 = vmatpush1.msra.mxu0 0.0
        %2700 = vmatprep.mubr.f32.mxu0 0.0
        %2701 = vmatmul.mubr.f32.gmra.mrb[0].mxu0 %v2628
        %v2702 = vpop.f32.mrb[0].mxu0
        %v2703 = vadd.f32 0.0, %v2702
        %v2704 = vpop.f32.mrb[0].mxu0
        %v2705 = vadd.f32 0.0, %v2704
        %2706 = vdwg.mxu0
        %2707 = vmatprep.subr.mxu0 0.0
        %2708 = vmatpush1.msra.mxu0 %v2634
        %2709 = vmatprep.subr.mxu0 0.0
        %2710 = vmatpush1.msra.mxu0 0.0
        %2711 = vmatprep.subr.mxu0 0.0
        %2712 = vmatpush1.msra.mxu0 0.0
        %2713 = vmatprep.subr.mxu0 0.0
        %2714 = vmatpush1.msra.mxu0 0.0
        %2715 = vmatprep.subr.mxu0 0.0
        %2716 = vmatpush1.msra.mxu0 0.0
        %2717 = vmatprep.subr.mxu0 0.0
        %2718 = vmatpush1.msra.mxu0 0.0
        %2719 = vmatprep.subr.mxu0 0.0
        %2720 = vmatpush1.msra.mxu0 0.0
        %2721 = vmatprep.subr.mxu0 0.0
        %2722 = vmatpush1.msra.mxu0 0.0
        %2723 = vmatprep.subr.mxu0 0.0
        %2724 = vmatpush1.msra.mxu0 0.0
        %2725 = vmatprep.subr.mxu0 0.0
        %2726 = vmatpush1.msra.mxu0 0.0
        %2727 = vmatprep.subr.mxu0 0.0
        %2728 = vmatpush1.msra.mxu0 0.0
        %2729 = vmatprep.subr.mxu0 0.0
        %2730 = vmatpush1.msra.mxu0 0.0
        %2731 = vmatprep.subr.mxu0 0.0
        %2732 = vmatpush1.msra.mxu0 0.0
        %2733 = vmatprep.subr.mxu0 0.0
        %2734 = vmatpush1.msra.mxu0 0.0
        %2735 = vmatprep.subr.mxu0 0.0
        %2736 = vmatpush1.msra.mxu0 0.0
        %2737 = vmatprep.subr.mxu0 0.0
        %2738 = vmatpush1.msra.mxu0 0.0
        %2739 = vmatprep.subr.mxu0 0.0
        %2740 = vmatpush1.msra.mxu0 0.0
        %2741 = vmatprep.subr.mxu0 0.0
        %2742 = vmatpush1.msra.mxu0 0.0
        %2743 = vmatprep.subr.mxu0 0.0
        %2744 = vmatpush1.msra.mxu0 0.0
        %2745 = vmatprep.subr.mxu0 0.0
        %2746 = vmatpush1.msra.mxu0 0.0
        %2747 = vmatprep.subr.mxu0 0.0
        %2748 = vmatpush1.msra.mxu0 0.0
        %2749 = vmatprep.subr.mxu0 0.0
        %2750 = vmatpush1.msra.mxu0 0.0
        %2751 = vmatprep.subr.mxu0 0.0
        %2752 = vmatpush1.msra.mxu0 0.0
        %2753 = vmatprep.subr.mxu0 0.0
        %2754 = vmatpush1.msra.mxu0 0.0
        %2755 = vmatprep.subr.mxu0 0.0
        %2756 = vmatpush1.msra.mxu0 0.0
        %2757 = vmatprep.subr.mxu0 0.0
        %2758 = vmatpush1.msra.mxu0 0.0
        %2759 = vmatprep.subr.mxu0 0.0
        %2760 = vmatpush1.msra.mxu0 0.0
        %2761 = vmatprep.subr.mxu0 0.0
        %2762 = vmatpush1.msra.mxu0 0.0
        %2763 = vmatprep.subr.mxu0 0.0
        %2764 = vmatpush1.msra.mxu0 0.0
        %2765 = vmatprep.subr.mxu0 0.0
        %2766 = vmatpush1.msra.mxu0 0.0
        %2767 = vmatprep.subr.mxu0 0.0
        %2768 = vmatpush1.msra.mxu0 0.0
        %2769 = vmatprep.subr.mxu0 0.0
        %2770 = vmatpush1.msra.mxu0 0.0
        %2771 = vmatprep.mubr.f32.mxu0 0.0
        %2772 = vmatmul.mubr.f32.gmra.mrb[0].mxu0 %v2628
        %v2773 = vpop.f32.mrb[0].mxu0
        %v2774 = vadd.f32 0.0, %v2773
        %v2775 = vpop.f32.mrb[0].mxu0
        %2776 = vdwg.mxu0
        %v2777 = vadd.f32 %v2622, %v2703
        %v2778 = vadd.f32 %v2623, %v2705
        %v2779 = vadd.f32 %v2624, %v2774
        %2780 = vrot.lane.b32.xlu0 %v1958, 127
        %v2781 = vpop.permute.xlu0 %2780
        %2782 = vrot.lane.b32.xlu0 %v1959, 127
        %v2783 = vpop.permute.xlu0 %2782
        %2784 = vrot.lane.b32.xlu0 %v1960, 127
        %v2785 = vpop.permute.xlu0 %2784
        %v2786 = vsel %vm1093, %v2781, %v2783
        %v2787 = vsel %vm1093, %v2783, %v2785
        %v2790 = vsel %vm1093, %v2785, %v2781
        %s2791 = scalar_lea.vmem [#allocation8], 20
        %v2792 = vld [vmem:[%s2791] sm:$0xf]
        %v2794 = vsel %vm292, %v2792, 0
        %v2796 = vsel %vm296, %v2786, 0
        %v2798 = vsel %vm296, %v2787, 0
        %v2801 = vsel %vm296, %v2790, 0
        %2803 = vmatprep.subr.mxu0 %v2798
        %2804 = vmatpush1.msra.mxu0 %v2796
        %2805 = vmatprep.subr.mxu0 0.0
        %2806 = vmatpush1.msra.mxu0 0.0
        %2807 = vmatprep.subr.mxu0 0.0
        %2808 = vmatpush1.msra.mxu0 0.0
        %2809 = vmatprep.subr.mxu0 0.0
        %2810 = vmatpush1.msra.mxu0 0.0
        %2811 = vmatprep.subr.mxu0 0.0
        %2812 = vmatpush1.msra.mxu0 0.0
        %2813 = vmatprep.subr.mxu0 0.0
        %2814 = vmatpush1.msra.mxu0 0.0
        %2815 = vmatprep.subr.mxu0 0.0
        %2816 = vmatpush1.msra.mxu0 0.0
        %2817 = vmatprep.subr.mxu0 0.0
        %2818 = vmatpush1.msra.mxu0 0.0
        %2819 = vmatprep.subr.mxu0 0.0
        %2820 = vmatpush1.msra.mxu0 0.0
        %2821 = vmatprep.subr.mxu0 0.0
        %2822 = vmatpush1.msra.mxu0 0.0
        %2823 = vmatprep.subr.mxu0 0.0
        %2824 = vmatpush1.msra.mxu0 0.0
        %2825 = vmatprep.subr.mxu0 0.0
        %2826 = vmatpush1.msra.mxu0 0.0
        %2827 = vmatprep.subr.mxu0 0.0
        %2828 = vmatpush1.msra.mxu0 0.0
        %2829 = vmatprep.subr.mxu0 0.0
        %2830 = vmatpush1.msra.mxu0 0.0
        %2831 = vmatprep.subr.mxu0 0.0
        %2832 = vmatpush1.msra.mxu0 0.0
        %2833 = vmatprep.subr.mxu0 0.0
        %2834 = vmatpush1.msra.mxu0 0.0
        %2835 = vmatprep.subr.mxu0 0.0
        %2836 = vmatpush1.msra.mxu0 0.0
        %2837 = vmatprep.subr.mxu0 0.0
        %2838 = vmatpush1.msra.mxu0 0.0
        %2839 = vmatprep.subr.mxu0 0.0
        %2840 = vmatpush1.msra.mxu0 0.0
        %2841 = vmatprep.subr.mxu0 0.0
        %2842 = vmatpush1.msra.mxu0 0.0
        %2843 = vmatprep.subr.mxu0 0.0
        %2844 = vmatpush1.msra.mxu0 0.0
        %2845 = vmatprep.subr.mxu0 0.0
        %2846 = vmatpush1.msra.mxu0 0.0
        %2847 = vmatprep.subr.mxu0 0.0
        %2848 = vmatpush1.msra.mxu0 0.0
        %2849 = vmatprep.subr.mxu0 0.0
        %2850 = vmatpush1.msra.mxu0 0.0
        %2851 = vmatprep.subr.mxu0 0.0
        %2852 = vmatpush1.msra.mxu0 0.0
        %2853 = vmatprep.subr.mxu0 0.0
        %2854 = vmatpush1.msra.mxu0 0.0
        %2855 = vmatprep.subr.mxu0 0.0
        %2856 = vmatpush1.msra.mxu0 0.0
        %2857 = vmatprep.subr.mxu0 0.0
        %2858 = vmatpush1.msra.mxu0 0.0
        %2859 = vmatprep.subr.mxu0 0.0
        %2860 = vmatpush1.msra.mxu0 0.0
        %2861 = vmatprep.subr.mxu0 0.0
        %2862 = vmatpush1.msra.mxu0 0.0
        %2863 = vmatprep.subr.mxu0 0.0
        %2864 = vmatpush1.msra.mxu0 0.0
        %2865 = vmatprep.subr.mxu0 0.0
        %2866 = vmatpush1.msra.mxu0 0.0
        %2867 = vmatprep.mubr.f32.mxu0 0.0
        %2868 = vmatmul.mubr.f32.gmra.mrb[0].mxu0 %v2794
        %v2869 = vpop.f32.mrb[0].mxu0
        %v2870 = vadd.f32 0.0, %v2869
        %v2871 = vpop.f32.mrb[0].mxu0
        %v2872 = vadd.f32 0.0, %v2871
        %2873 = vdwg.mxu0
        %2874 = vmatprep.subr.mxu0 0.0
        %2875 = vmatpush1.msra.mxu0 %v2801
        %2876 = vmatprep.subr.mxu0 0.0
        %2877 = vmatpush1.msra.mxu0 0.0
        %2878 = vmatprep.subr.mxu0 0.0
        %2879 = vmatpush1.msra.mxu0 0.0
        %2880 = vmatprep.subr.mxu0 0.0
        %2881 = vmatpush1.msra.mxu0 0.0
        %2882 = vmatprep.subr.mxu0 0.0
        %2883 = vmatpush1.msra.mxu0 0.0
        %2884 = vmatprep.subr.mxu0 0.0
        %2885 = vmatpush1.msra.mxu0 0.0
        %2886 = vmatprep.subr.mxu0 0.0
        %2887 = vmatpush1.msra.mxu0 0.0
        %2888 = vmatprep.subr.mxu0 0.0
        %2889 = vmatpush1.msra.mxu0 0.0
        %2890 = vmatprep.subr.mxu0 0.0
        %2891 = vmatpush1.msra.mxu0 0.0
        %2892 = vmatprep.subr.mxu0 0.0
        %2893 = vmatpush1.msra.mxu0 0.0
        %2894 = vmatprep.subr.mxu0 0.0
        %2895 = vmatpush1.msra.mxu0 0.0
        %2896 = vmatprep.subr.mxu0 0.0
        %2897 = vmatpush1.msra.mxu0 0.0
        %2898 = vmatprep.subr.mxu0 0.0
        %2899 = vmatpush1.msra.mxu0 0.0
        %2900 = vmatprep.subr.mxu0 0.0
        %2901 = vmatpush1.msra.mxu0 0.0
        %2902 = vmatprep.subr.mxu0 0.0
        %2903 = vmatpush1.msra.mxu0 0.0
        %2904 = vmatprep.subr.mxu0 0.0
        %2905 = vmatpush1.msra.mxu0 0.0
        %2906 = vmatprep.subr.mxu0 0.0
        %2907 = vmatpush1.msra.mxu0 0.0
        %2908 = vmatprep.subr.mxu0 0.0
        %2909 = vmatpush1.msra.mxu0 0.0
        %2910 = vmatprep.subr.mxu0 0.0
        %2911 = vmatpush1.msra.mxu0 0.0
        %2912 = vmatprep.subr.mxu0 0.0
        %2913 = vmatpush1.msra.mxu0 0.0
        %2914 = vmatprep.subr.mxu0 0.0
        %2915 = vmatpush1.msra.mxu0 0.0
        %2916 = vmatprep.subr.mxu0 0.0
        %2917 = vmatpush1.msra.mxu0 0.0
        %2918 = vmatprep.subr.mxu0 0.0
        %2919 = vmatpush1.msra.mxu0 0.0
        %2920 = vmatprep.subr.mxu0 0.0
        %2921 = vmatpush1.msra.mxu0 0.0
        %2922 = vmatprep.subr.mxu0 0.0
        %2923 = vmatpush1.msra.mxu0 0.0
        %2924 = vmatprep.subr.mxu0 0.0
        %2925 = vmatpush1.msra.mxu0 0.0
        %2926 = vmatprep.subr.mxu0 0.0
        %2927 = vmatpush1.msra.mxu0 0.0
        %2928 = vmatprep.subr.mxu0 0.0
        %2929 = vmatpush1.msra.mxu0 0.0
        %2930 = vmatprep.subr.mxu0 0.0
        %2931 = vmatpush1.msra.mxu0 0.0
        %2932 = vmatprep.subr.mxu0 0.0
        %2933 = vmatpush1.msra.mxu0 0.0
        %2934 = vmatprep.subr.mxu0 0.0
        %2935 = vmatpush1.msra.mxu0 0.0
        %2936 = vmatprep.subr.mxu0 0.0
        %2937 = vmatpush1.msra.mxu0 0.0
        %2938 = vmatprep.mubr.f32.mxu0 0.0
        %2939 = vmatmul.mubr.f32.gmra.mrb[0].mxu0 %v2794
        %v2940 = vpop.f32.mrb[0].mxu0
        %v2941 = vadd.f32 0.0, %v2940
        %v2942 = vpop.f32.mrb[0].mxu0
        %2943 = vdwg.mxu0
        %v2944 = vadd.f32 %v2777, %v2870
        %v2945 = vadd.f32 %v2778, %v2872
        %v2946 = vadd.f32 %v2779, %v2941
        %2947 = vrot.lane.b32.xlu0 %v1958, 111
        %v2948 = vpop.permute.xlu0 %2947
        %2949 = vrot.lane.b32.xlu0 %v1959, 111
        %v2950 = vpop.permute.xlu0 %2949
        %2951 = vrot.lane.b32.xlu0 %v1960, 111
        %v2952 = vpop.permute.xlu0 %2951
        %v2953 = vsel %vm1261, %v2948, %v2950
        %v2954 = vsel %vm1261, %v2950, %v2952
        %v2957 = vsel %vm1261, %v2952, %v2948
        %s2958 = scalar_lea.vmem [#allocation8], 24
        %v2959 = vld [vmem:[%s2958] sm:$0xf]
        %v2961 = vsel %vm292, %v2959, 0
        %v2963 = vsel %vm296, %v2953, 0
        %v2965 = vsel %vm296, %v2954, 0
        %v2968 = vsel %vm296, %v2957, 0
        %2970 = vmatprep.subr.mxu0 %v2965
        %2971 = vmatpush1.msra.mxu0 %v2963
        %2972 = vmatprep.subr.mxu0 0.0
        %2973 = vmatpush1.msra.mxu0 0.0
        %2974 = vmatprep.subr.mxu0 0.0
        %2975 = vmatpush1.msra.mxu0 0.0
        %2976 = vmatprep.subr.mxu0 0.0
        %2977 = vmatpush1.msra.mxu0 0.0
        %2978 = vmatprep.subr.mxu0 0.0
        %2979 = vmatpush1.msra.mxu0 0.0
        %2980 = vmatprep.subr.mxu0 0.0
        %2981 = vmatpush1.msra.mxu0 0.0
        %2982 = vmatprep.subr.mxu0 0.0
        %2983 = vmatpush1.msra.mxu0 0.0
        %2984 = vmatprep.subr.mxu0 0.0
        %2985 = vmatpush1.msra.mxu0 0.0
        %2986 = vmatprep.subr.mxu0 0.0
        %2987 = vmatpush1.msra.mxu0 0.0
        %2988 = vmatprep.subr.mxu0 0.0
        %2989 = vmatpush1.msra.mxu0 0.0
        %2990 = vmatprep.subr.mxu0 0.0
        %2991 = vmatpush1.msra.mxu0 0.0
        %2992 = vmatprep.subr.mxu0 0.0
        %2993 = vmatpush1.msra.mxu0 0.0
        %2994 = vmatprep.subr.mxu0 0.0
        %2995 = vmatpush1.msra.mxu0 0.0
        %2996 = vmatprep.subr.mxu0 0.0
        %2997 = vmatpush1.msra.mxu0 0.0
        %2998 = vmatprep.subr.mxu0 0.0
        %2999 = vmatpush1.msra.mxu0 0.0
        %3000 = vmatprep.subr.mxu0 0.0
        %3001 = vmatpush1.msra.mxu0 0.0
        %3002 = vmatprep.subr.mxu0 0.0
        %3003 = vmatpush1.msra.mxu0 0.0
        %3004 = vmatprep.subr.mxu0 0.0
        %3005 = vmatpush1.msra.mxu0 0.0
        %3006 = vmatprep.subr.mxu0 0.0
        %3007 = vmatpush1.msra.mxu0 0.0
        %3008 = vmatprep.subr.mxu0 0.0
        %3009 = vmatpush1.msra.mxu0 0.0
        %3010 = vmatprep.subr.mxu0 0.0
        %3011 = vmatpush1.msra.mxu0 0.0
        %3012 = vmatprep.subr.mxu0 0.0
        %3013 = vmatpush1.msra.mxu0 0.0
        %3014 = vmatprep.subr.mxu0 0.0
        %3015 = vmatpush1.msra.mxu0 0.0
        %3016 = vmatprep.subr.mxu0 0.0
        %3017 = vmatpush1.msra.mxu0 0.0
        %3018 = vmatprep.subr.mxu0 0.0
        %3019 = vmatpush1.msra.mxu0 0.0
        %3020 = vmatprep.subr.mxu0 0.0
        %3021 = vmatpush1.msra.mxu0 0.0
        %3022 = vmatprep.subr.mxu0 0.0
        %3023 = vmatpush1.msra.mxu0 0.0
        %3024 = vmatprep.subr.mxu0 0.0
        %3025 = vmatpush1.msra.mxu0 0.0
        %3026 = vmatprep.subr.mxu0 0.0
        %3027 = vmatpush1.msra.mxu0 0.0
        %3028 = vmatprep.subr.mxu0 0.0
        %3029 = vmatpush1.msra.mxu0 0.0
        %3030 = vmatprep.subr.mxu0 0.0
        %3031 = vmatpush1.msra.mxu0 0.0
        %3032 = vmatprep.subr.mxu0 0.0
        %3033 = vmatpush1.msra.mxu0 0.0
        %3034 = vmatprep.mubr.f32.mxu0 0.0
        %3035 = vmatmul.mubr.f32.gmra.mrb[0].mxu0 %v2961
        %v3036 = vpop.f32.mrb[0].mxu0
        %v3037 = vadd.f32 0.0, %v3036
        %v3038 = vpop.f32.mrb[0].mxu0
        %v3039 = vadd.f32 0.0, %v3038
        %3040 = vdwg.mxu0
        %3041 = vmatprep.subr.mxu0 0.0
        %3042 = vmatpush1.msra.mxu0 %v2968
        %3043 = vmatprep.subr.mxu0 0.0
        %3044 = vmatpush1.msra.mxu0 0.0
        %3045 = vmatprep.subr.mxu0 0.0
        %3046 = vmatpush1.msra.mxu0 0.0
        %3047 = vmatprep.subr.mxu0 0.0
        %3048 = vmatpush1.msra.mxu0 0.0
        %3049 = vmatprep.subr.mxu0 0.0
        %3050 = vmatpush1.msra.mxu0 0.0
        %3051 = vmatprep.subr.mxu0 0.0
        %3052 = vmatpush1.msra.mxu0 0.0
        %3053 = vmatprep.subr.mxu0 0.0
        %3054 = vmatpush1.msra.mxu0 0.0
        %3055 = vmatprep.subr.mxu0 0.0
        %3056 = vmatpush1.msra.mxu0 0.0
        %3057 = vmatprep.subr.mxu0 0.0
        %3058 = vmatpush1.msra.mxu0 0.0
        %3059 = vmatprep.subr.mxu0 0.0
        %3060 = vmatpush1.msra.mxu0 0.0
        %3061 = vmatprep.subr.mxu0 0.0
        %3062 = vmatpush1.msra.mxu0 0.0
        %3063 = vmatprep.subr.mxu0 0.0
        %3064 = vmatpush1.msra.mxu0 0.0
        %3065 = vmatprep.subr.mxu0 0.0
        %3066 = vmatpush1.msra.mxu0 0.0
        %3067 = vmatprep.subr.mxu0 0.0
        %3068 = vmatpush1.msra.mxu0 0.0
        %3069 = vmatprep.subr.mxu0 0.0
        %3070 = vmatpush1.msra.mxu0 0.0
        %3071 = vmatprep.subr.mxu0 0.0
        %3072 = vmatpush1.msra.mxu0 0.0
        %3073 = vmatprep.subr.mxu0 0.0
        %3074 = vmatpush1.msra.mxu0 0.0
        %3075 = vmatprep.subr.mxu0 0.0
        %3076 = vmatpush1.msra.mxu0 0.0
        %3077 = vmatprep.subr.mxu0 0.0
        %3078 = vmatpush1.msra.mxu0 0.0
        %3079 = vmatprep.subr.mxu0 0.0
        %3080 = vmatpush1.msra.mxu0 0.0
        %3081 = vmatprep.subr.mxu0 0.0
        %3082 = vmatpush1.msra.mxu0 0.0
        %3083 = vmatprep.subr.mxu0 0.0
        %3084 = vmatpush1.msra.mxu0 0.0
        %3085 = vmatprep.subr.mxu0 0.0
        %3086 = vmatpush1.msra.mxu0 0.0
        %3087 = vmatprep.subr.mxu0 0.0
        %3088 = vmatpush1.msra.mxu0 0.0
        %3089 = vmatprep.subr.mxu0 0.0
        %3090 = vmatpush1.msra.mxu0 0.0
        %3091 = vmatprep.subr.mxu0 0.0
        %3092 = vmatpush1.msra.mxu0 0.0
        %3093 = vmatprep.subr.mxu0 0.0
        %3094 = vmatpush1.msra.mxu0 0.0
        %3095 = vmatprep.subr.mxu0 0.0
        %3096 = vmatpush1.msra.mxu0 0.0
        %3097 = vmatprep.subr.mxu0 0.0
        %3098 = vmatpush1.msra.mxu0 0.0
        %3099 = vmatprep.subr.mxu0 0.0
        %3100 = vmatpush1.msra.mxu0 0.0
        %3101 = vmatprep.subr.mxu0 0.0
        %3102 = vmatpush1.msra.mxu0 0.0
        %3103 = vmatprep.subr.mxu0 0.0
        %3104 = vmatpush1.msra.mxu0 0.0
        %3105 = vmatprep.mubr.f32.mxu0 0.0
        %3106 = vmatmul.mubr.f32.gmra.mrb[0].mxu0 %v2961
        %v3107 = vpop.f32.mrb[0].mxu0
        %v3108 = vadd.f32 0.0, %v3107
        %v3109 = vpop.f32.mrb[0].mxu0
        %3110 = vdwg.mxu0
        %v3111 = vadd.f32 %v2944, %v3037
        %v3112 = vadd.f32 %v2945, %v3039
        %v3113 = vadd.f32 %v2946, %v3108
        %3114 = vrot.lane.b32.xlu0 %v1958, 110
        %v3115 = vpop.permute.xlu0 %3114
        %3116 = vrot.lane.b32.xlu0 %v1959, 110
        %v3117 = vpop.permute.xlu0 %3116
        %3118 = vrot.lane.b32.xlu0 %v1960, 110
        %v3119 = vpop.permute.xlu0 %3118
        %v3120 = vsel %vm1429, %v3115, %v3117
        %v3121 = vsel %vm1429, %v3117, %v3119
        %v3124 = vsel %vm1429, %v3119, %v3115
        %s3125 = scalar_lea.vmem [#allocation8], 28
        %v3126 = vld [vmem:[%s3125] sm:$0xf]
        %v3128 = vsel %vm292, %v3126, 0
        %v3130 = vsel %vm296, %v3120, 0
        %v3132 = vsel %vm296, %v3121, 0
        %v3135 = vsel %vm296, %v3124, 0
        %3137 = vmatprep.subr.mxu0 %v3132
        %3138 = vmatpush1.msra.mxu0 %v3130
        %3139 = vmatprep.subr.mxu0 0.0
        %3140 = vmatpush1.msra.mxu0 0.0
        %3141 = vmatprep.subr.mxu0 0.0
        %3142 = vmatpush1.msra.mxu0 0.0
        %3143 = vmatprep.subr.mxu0 0.0
        %3144 = vmatpush1.msra.mxu0 0.0
        %3145 = vmatprep.subr.mxu0 0.0
        %3146 = vmatpush1.msra.mxu0 0.0
        %3147 = vmatprep.subr.mxu0 0.0
        %3148 = vmatpush1.msra.mxu0 0.0
        %3149 = vmatprep.subr.mxu0 0.0
        %3150 = vmatpush1.msra.mxu0 0.0
        %3151 = vmatprep.subr.mxu0 0.0
        %3152 = vmatpush1.msra.mxu0 0.0
        %3153 = vmatprep.subr.mxu0 0.0
        %3154 = vmatpush1.msra.mxu0 0.0
        %3155 = vmatprep.subr.mxu0 0.0
        %3156 = vmatpush1.msra.mxu0 0.0
        %3157 = vmatprep.subr.mxu0 0.0
        %3158 = vmatpush1.msra.mxu0 0.0
        %3159 = vmatprep.subr.mxu0 0.0
        %3160 = vmatpush1.msra.mxu0 0.0
        %3161 = vmatprep.subr.mxu0 0.0
        %3162 = vmatpush1.msra.mxu0 0.0
        %3163 = vmatprep.subr.mxu0 0.0
        %3164 = vmatpush1.msra.mxu0 0.0
        %3165 = vmatprep.subr.mxu0 0.0
        %3166 = vmatpush1.msra.mxu0 0.0
        %3167 = vmatprep.subr.mxu0 0.0
        %3168 = vmatpush1.msra.mxu0 0.0
        %3169 = vmatprep.subr.mxu0 0.0
        %3170 = vmatpush1.msra.mxu0 0.0
        %3171 = vmatprep.subr.mxu0 0.0
        %3172 = vmatpush1.msra.mxu0 0.0
        %3173 = vmatprep.subr.mxu0 0.0
        %3174 = vmatpush1.msra.mxu0 0.0
        %3175 = vmatprep.subr.mxu0 0.0
        %3176 = vmatpush1.msra.mxu0 0.0
        %3177 = vmatprep.subr.mxu0 0.0
        %3178 = vmatpush1.msra.mxu0 0.0
        %3179 = vmatprep.subr.mxu0 0.0
        %3180 = vmatpush1.msra.mxu0 0.0
        %3181 = vmatprep.subr.mxu0 0.0
        %3182 = vmatpush1.msra.mxu0 0.0
        %3183 = vmatprep.subr.mxu0 0.0
        %3184 = vmatpush1.msra.mxu0 0.0
        %3185 = vmatprep.subr.mxu0 0.0
        %3186 = vmatpush1.msra.mxu0 0.0
        %3187 = vmatprep.subr.mxu0 0.0
        %3188 = vmatpush1.msra.mxu0 0.0
        %3189 = vmatprep.subr.mxu0 0.0
        %3190 = vmatpush1.msra.mxu0 0.0
        %3191 = vmatprep.subr.mxu0 0.0
        %3192 = vmatpush1.msra.mxu0 0.0
        %3193 = vmatprep.subr.mxu0 0.0
        %3194 = vmatpush1.msra.mxu0 0.0
        %3195 = vmatprep.subr.mxu0 0.0
        %3196 = vmatpush1.msra.mxu0 0.0
        %3197 = vmatprep.subr.mxu0 0.0
        %3198 = vmatpush1.msra.mxu0 0.0
        %3199 = vmatprep.subr.mxu0 0.0
        %3200 = vmatpush1.msra.mxu0 0.0
        %3201 = vmatprep.mubr.f32.mxu0 0.0
        %3202 = vmatmul.mubr.f32.gmra.mrb[0].mxu0 %v3128
        %v3203 = vpop.f32.mrb[0].mxu0
        %v3204 = vadd.f32 0.0, %v3203
        %v3205 = vpop.f32.mrb[0].mxu0
        %v3206 = vadd.f32 0.0, %v3205
        %3207 = vdwg.mxu0
        %3208 = vmatprep.subr.mxu0 0.0
        %3209 = vmatpush1.msra.mxu0 %v3135
        %3210 = vmatprep.subr.mxu0 0.0
        %3211 = vmatpush1.msra.mxu0 0.0
        %3212 = vmatprep.subr.mxu0 0.0
        %3213 = vmatpush1.msra.mxu0 0.0
        %3214 = vmatprep.subr.mxu0 0.0
        %3215 = vmatpush1.msra.mxu0 0.0
        %3216 = vmatprep.subr.mxu0 0.0
        %3217 = vmatpush1.msra.mxu0 0.0
        %3218 = vmatprep.subr.mxu0 0.0
        %3219 = vmatpush1.msra.mxu0 0.0
        %3220 = vmatprep.subr.mxu0 0.0
        %3221 = vmatpush1.msra.mxu0 0.0
        %3222 = vmatprep.subr.mxu0 0.0
        %3223 = vmatpush1.msra.mxu0 0.0
        %3224 = vmatprep.subr.mxu0 0.0
        %3225 = vmatpush1.msra.mxu0 0.0
        %3226 = vmatprep.subr.mxu0 0.0
        %3227 = vmatpush1.msra.mxu0 0.0
        %3228 = vmatprep.subr.mxu0 0.0
        %3229 = vmatpush1.msra.mxu0 0.0
        %3230 = vmatprep.subr.mxu0 0.0
        %3231 = vmatpush1.msra.mxu0 0.0
        %3232 = vmatprep.subr.mxu0 0.0
        %3233 = vmatpush1.msra.mxu0 0.0
        %3234 = vmatprep.subr.mxu0 0.0
        %3235 = vmatpush1.msra.mxu0 0.0
        %3236 = vmatprep.subr.mxu0 0.0
        %3237 = vmatpush1.msra.mxu0 0.0
        %3238 = vmatprep.subr.mxu0 0.0
        %3239 = vmatpush1.msra.mxu0 0.0
        %3240 = vmatprep.subr.mxu0 0.0
        %3241 = vmatpush1.msra.mxu0 0.0
        %3242 = vmatprep.subr.mxu0 0.0
        %3243 = vmatpush1.msra.mxu0 0.0
        %3244 = vmatprep.subr.mxu0 0.0
        %3245 = vmatpush1.msra.mxu0 0.0
        %3246 = vmatprep.subr.mxu0 0.0
        %3247 = vmatpush1.msra.mxu0 0.0
        %3248 = vmatprep.subr.mxu0 0.0
        %3249 = vmatpush1.msra.mxu0 0.0
        %3250 = vmatprep.subr.mxu0 0.0
        %3251 = vmatpush1.msra.mxu0 0.0
        %3252 = vmatprep.subr.mxu0 0.0
        %3253 = vmatpush1.msra.mxu0 0.0
        %3254 = vmatprep.subr.mxu0 0.0
        %3255 = vmatpush1.msra.mxu0 0.0
        %3256 = vmatprep.subr.mxu0 0.0
        %3257 = vmatpush1.msra.mxu0 0.0
        %3258 = vmatprep.subr.mxu0 0.0
        %3259 = vmatpush1.msra.mxu0 0.0
        %3260 = vmatprep.subr.mxu0 0.0
        %3261 = vmatpush1.msra.mxu0 0.0
        %3262 = vmatprep.subr.mxu0 0.0
        %3263 = vmatpush1.msra.mxu0 0.0
        %3264 = vmatprep.subr.mxu0 0.0
        %3265 = vmatpush1.msra.mxu0 0.0
        %3266 = vmatprep.subr.mxu0 0.0
        %3267 = vmatpush1.msra.mxu0 0.0
        %3268 = vmatprep.subr.mxu0 0.0
        %3269 = vmatpush1.msra.mxu0 0.0
        %3270 = vmatprep.subr.mxu0 0.0
        %3271 = vmatpush1.msra.mxu0 0.0
        %3272 = vmatprep.mubr.f32.mxu0 0.0
        %3273 = vmatmul.mubr.f32.gmra.mrb[0].mxu0 %v3128
        %v3274 = vpop.f32.mrb[0].mxu0
        %v3275 = vadd.f32 0.0, %v3274
        %v3276 = vpop.f32.mrb[0].mxu0
        %3277 = vdwg.mxu0
        %v3278 = vadd.f32 %v3111, %v3204
        %v3279 = vadd.f32 %v3112, %v3206
        %v3280 = vadd.f32 %v3113, %v3275
        %3281 = vrot.lane.b32.xlu0 %v1958, 109
        %v3282 = vpop.permute.xlu0 %3281
        %3283 = vrot.lane.b32.xlu0 %v1959, 109
        %v3284 = vpop.permute.xlu0 %3283
        %3285 = vrot.lane.b32.xlu0 %v1960, 109
        %v3286 = vpop.permute.xlu0 %3285
        %v3287 = vsel %vm1597, %v3282, %v3284
        %v3288 = vsel %vm1597, %v3284, %v3286
        %v3291 = vsel %vm1597, %v3286, %v3282
        %s3292 = scalar_lea.vmem [#allocation8], 32
        %v3293 = vld [vmem:[%s3292] sm:$0xf]
        %v3295 = vsel %vm292, %v3293, 0
        %v3297 = vsel %vm296, %v3287, 0
        %v3299 = vsel %vm296, %v3288, 0
        %v3302 = vsel %vm296, %v3291, 0
        %3304 = vmatprep.subr.mxu0 %v3299
        %3305 = vmatpush1.msra.mxu0 %v3297
        %3306 = vmatprep.subr.mxu0 0.0
        %3307 = vmatpush1.msra.mxu0 0.0
        %3308 = vmatprep.subr.mxu0 0.0
        %3309 = vmatpush1.msra.mxu0 0.0
        %3310 = vmatprep.subr.mxu0 0.0
        %3311 = vmatpush1.msra.mxu0 0.0
        %3312 = vmatprep.subr.mxu0 0.0
        %3313 = vmatpush1.msra.mxu0 0.0
        %3314 = vmatprep.subr.mxu0 0.0
        %3315 = vmatpush1.msra.mxu0 0.0
        %3316 = vmatprep.subr.mxu0 0.0
        %3317 = vmatpush1.msra.mxu0 0.0
        %3318 = vmatprep.subr.mxu0 0.0
        %3319 = vmatpush1.msra.mxu0 0.0
        %3320 = vmatprep.subr.mxu0 0.0
        %3321 = vmatpush1.msra.mxu0 0.0
        %3322 = vmatprep.subr.mxu0 0.0
        %3323 = vmatpush1.msra.mxu0 0.0
        %3324 = vmatprep.subr.mxu0 0.0
        %3325 = vmatpush1.msra.mxu0 0.0
        %3326 = vmatprep.subr.mxu0 0.0
        %3327 = vmatpush1.msra.mxu0 0.0
        %3328 = vmatprep.subr.mxu0 0.0
        %3329 = vmatpush1.msra.mxu0 0.0
        %3330 = vmatprep.subr.mxu0 0.0
        %3331 = vmatpush1.msra.mxu0 0.0
        %3332 = vmatprep.subr.mxu0 0.0
        %3333 = vmatpush1.msra.mxu0 0.0
        %3334 = vmatprep.subr.mxu0 0.0
        %3335 = vmatpush1.msra.mxu0 0.0
        %3336 = vmatprep.subr.mxu0 0.0
        %3337 = vmatpush1.msra.mxu0 0.0
        %3338 = vmatprep.subr.mxu0 0.0
        %3339 = vmatpush1.msra.mxu0 0.0
        %3340 = vmatprep.subr.mxu0 0.0
        %3341 = vmatpush1.msra.mxu0 0.0
        %3342 = vmatprep.subr.mxu0 0.0
        %3343 = vmatpush1.msra.mxu0 0.0
        %3344 = vmatprep.subr.mxu0 0.0
        %3345 = vmatpush1.msra.mxu0 0.0
        %3346 = vmatprep.subr.mxu0 0.0
        %3347 = vmatpush1.msra.mxu0 0.0
        %3348 = vmatprep.subr.mxu0 0.0
        %3349 = vmatpush1.msra.mxu0 0.0
        %3350 = vmatprep.subr.mxu0 0.0
        %3351 = vmatpush1.msra.mxu0 0.0
        %3352 = vmatprep.subr.mxu0 0.0
        %3353 = vmatpush1.msra.mxu0 0.0
        %3354 = vmatprep.subr.mxu0 0.0
        %3355 = vmatpush1.msra.mxu0 0.0
        %3356 = vmatprep.subr.mxu0 0.0
        %3357 = vmatpush1.msra.mxu0 0.0
        %3358 = vmatprep.subr.mxu0 0.0
        %3359 = vmatpush1.msra.mxu0 0.0
        %3360 = vmatprep.subr.mxu0 0.0
        %3361 = vmatpush1.msra.mxu0 0.0
        %3362 = vmatprep.subr.mxu0 0.0
        %3363 = vmatpush1.msra.mxu0 0.0
        %3364 = vmatprep.subr.mxu0 0.0
        %3365 = vmatpush1.msra.mxu0 0.0
        %3366 = vmatprep.subr.mxu0 0.0
        %3367 = vmatpush1.msra.mxu0 0.0
        %3368 = vmatprep.mubr.f32.mxu0 0.0
        %3369 = vmatmul.mubr.f32.gmra.mrb[0].mxu0 %v3295
        %v3370 = vpop.f32.mrb[0].mxu0
        %v3371 = vadd.f32 0.0, %v3370
        %v3372 = vpop.f32.mrb[0].mxu0
        %v3373 = vadd.f32 0.0, %v3372
        %3374 = vdwg.mxu0
        %3375 = vmatprep.subr.mxu0 0.0
        %3376 = vmatpush1.msra.mxu0 %v3302
        %3377 = vmatprep.subr.mxu0 0.0
        %3378 = vmatpush1.msra.mxu0 0.0
        %3379 = vmatprep.subr.mxu0 0.0
        %3380 = vmatpush1.msra.mxu0 0.0
        %3381 = vmatprep.subr.mxu0 0.0
        %3382 = vmatpush1.msra.mxu0 0.0
        %3383 = vmatprep.subr.mxu0 0.0
        %3384 = vmatpush1.msra.mxu0 0.0
        %3385 = vmatprep.subr.mxu0 0.0
        %3386 = vmatpush1.msra.mxu0 0.0
        %3387 = vmatprep.subr.mxu0 0.0
        %3388 = vmatpush1.msra.mxu0 0.0
        %3389 = vmatprep.subr.mxu0 0.0
        %3390 = vmatpush1.msra.mxu0 0.0
        %3391 = vmatprep.subr.mxu0 0.0
        %3392 = vmatpush1.msra.mxu0 0.0
        %3393 = vmatprep.subr.mxu0 0.0
        %3394 = vmatpush1.msra.mxu0 0.0
        %3395 = vmatprep.subr.mxu0 0.0
        %3396 = vmatpush1.msra.mxu0 0.0
        %3397 = vmatprep.subr.mxu0 0.0
        %3398 = vmatpush1.msra.mxu0 0.0
        %3399 = vmatprep.subr.mxu0 0.0
        %3400 = vmatpush1.msra.mxu0 0.0
        %3401 = vmatprep.subr.mxu0 0.0
        %3402 = vmatpush1.msra.mxu0 0.0
        %3403 = vmatprep.subr.mxu0 0.0
        %3404 = vmatpush1.msra.mxu0 0.0
        %3405 = vmatprep.subr.mxu0 0.0
        %3406 = vmatpush1.msra.mxu0 0.0
        %3407 = vmatprep.subr.mxu0 0.0
        %3408 = vmatpush1.msra.mxu0 0.0
        %3409 = vmatprep.subr.mxu0 0.0
        %3410 = vmatpush1.msra.mxu0 0.0
        %3411 = vmatprep.subr.mxu0 0.0
        %3412 = vmatpush1.msra.mxu0 0.0
        %3413 = vmatprep.subr.mxu0 0.0
        %3414 = vmatpush1.msra.mxu0 0.0
        %3415 = vmatprep.subr.mxu0 0.0
        %3416 = vmatpush1.msra.mxu0 0.0
        %3417 = vmatprep.subr.mxu0 0.0
        %3418 = vmatpush1.msra.mxu0 0.0
        %3419 = vmatprep.subr.mxu0 0.0
        %3420 = vmatpush1.msra.mxu0 0.0
        %3421 = vmatprep.subr.mxu0 0.0
        %3422 = vmatpush1.msra.mxu0 0.0
        %3423 = vmatprep.subr.mxu0 0.0
        %3424 = vmatpush1.msra.mxu0 0.0
        %3425 = vmatprep.subr.mxu0 0.0
        %3426 = vmatpush1.msra.mxu0 0.0
        %3427 = vmatprep.subr.mxu0 0.0
        %3428 = vmatpush1.msra.mxu0 0.0
        %3429 = vmatprep.subr.mxu0 0.0
        %3430 = vmatpush1.msra.mxu0 0.0
        %3431 = vmatprep.subr.mxu0 0.0
        %3432 = vmatpush1.msra.mxu0 0.0
        %3433 = vmatprep.subr.mxu0 0.0
        %3434 = vmatpush1.msra.mxu0 0.0
        %3435 = vmatprep.subr.mxu0 0.0
        %3436 = vmatpush1.msra.mxu0 0.0
        %3437 = vmatprep.subr.mxu0 0.0
        %3438 = vmatpush1.msra.mxu0 0.0
        %3439 = vmatprep.mubr.f32.mxu0 0.0
        %3440 = vmatmul.mubr.f32.gmra.mrb[0].mxu0 %v3295
        %v3441 = vpop.f32.mrb[0].mxu0
        %v3442 = vadd.f32 0.0, %v3441
        %v3443 = vpop.f32.mrb[0].mxu0
        %3444 = vdwg.mxu0
        %v3445 = vadd.f32 %v3278, %v3371
        %v3446 = vadd.f32 %v3279, %v3373
        %v3447 = vadd.f32 %v3280, %v3442
        %v3448 = vmul.f32 %v3445, %v1763
        %v3449 = vmul.f32 %v3446, %v1767
        %v3450 = vmul.f32 %v3447, %v1771
        %v3451 = vsel %vm296, %v3448, 0.0
        %v3452 = vsel %vm296, %v3449, 0.0
        %v3453 = vadd.f32 %v3451, %v3452
        %v3454 = vsel %vm296, %v3450, 0.0
        %v3455 = vadd.f32 %v3453, %v3454
        %3456 = vadd.xlane.f32.xlu0 %v3455
        %v3457 = vpop.xlane.xlu0 %3456
        %v3458 = vmul.f32 %v3445, %v3445
        %v3459 = vmul.f32 %v3446, %v3446
        %v3460 = vmul.f32 %v3447, %v3447
        %v3461 = vmul.f32 %v3458, %v1763
        %v3462 = vmul.f32 %v3459, %v1767
        %v3463 = vmul.f32 %v3460, %v1771
        %v3464 = vsel %vm296, %v3461, 0.0
        %v3465 = vsel %vm296, %v3462, 0.0
        %v3466 = vadd.f32 %v3464, %v3465
        %v3467 = vsel %vm296, %v3463, 0.0
        %v3468 = vadd.f32 %v3466, %v3467
        %3469 = vadd.xlane.f32.xlu0 %v3468
        %v3470 = vpop.xlane.xlu0 %3469
        %v3471 = vmul.f32 %v3457, 0.00390625
        %v3472 = vmul.f32 %v3470, 0.00390625
        %v3473 = vmul.f32 %v3471, %v3471
        %v3474 = vsub.f32 %v3472, %v3473
        %v3475 = vsub.f32 %v3445, %v3471
        %v3476 = vsub.f32 %v3446, %v3471
        %v3477 = vsub.f32 %v3447, %v3471
        %v3478 = vadd.f32 %v3474, 1e-05
        %v3479 = vrsqrt.pop %v3478
        %v3480 = vmul.f32 %v3475, %v3479
        %v3481 = vmul.f32 %v3476, %v3479
        %v3482 = vmul.f32 %v3477, %v3479
        %v3484 = vadd.f32 %v3480, %v256
        %v3485 = vadd.f32 %v3481, %v267
        %v3486 = vadd.f32 %v3482, %v257
        %v3489 = vcombine.low %v3484, %v3485
        %3491 = vst [vmem:[%s255] sm:$0xff] %v3489
        %3492 = vst [vmem:[%s255 + $0x8] sm:$0xf] %v3486
        %s3493 = sand.u32 %s120, 1
        %s3494 = scalar_lea.sflag [#allocation4], %s3493
        %s3495 = sand.u32 %s120, 1
        %s3496 = smul.addr %s3495, 12
        %s3497 = scalar_lea.vmem [#allocation10], %s3496
        // Predicated region
        $region53: #{tpu_custom_call.1} parent=35 // pred_check
          %p3498 = pneg %p130
        $region54: #{tpu_custom_call.1} parent=35 // pred_check_branch
          %3500 = sbr.rel (%p3498) target = $region56
        $region55: #{tpu_custom_call.1} parent=35 // pred_region
          %s3502 = ssub.s32 192, 192
          %3503 = vsyncadd %s3494, %s3502
          %s3504 = smul.addr %s23, 3
          %s3505 = smul.addr %s3504, 64
          %s3506 = scalar_lea.hbm %s4, %s3505
          %s3508 = sshll.u32 %s3497, 4
          %s3509 = int_to_ptr.vmem [resolvable:$true] %s3508
          %3511 = dma.vmem_to_hbm [thread:$0]  %s3509, 192, %s3506, %s3494
        $region56: #{tpu_custom_call.1} parent=35 // pred_fallthru
          _
      $region36: #{tpu_custom_call.1} parent=5 // pred_fallthru
        _
      %p3512 = scmp.le.s32.totalorder 2, %s18
      // Predicated region
      $region57: #{tpu_custom_call.1} parent=5 // pred_check
        %p3513 = pneg %p3512
      $region58: #{tpu_custom_call.1} parent=5 // pred_check_branch
        %3515 = sbr.rel (%p3513) target = $region60
      $region59: #{tpu_custom_call.1} parent=5 // pred_region
        %s3516 = ssub.s32 %s18, 2
        // Predicated region
        $region61: #{tpu_custom_call.1} parent=59 // pred_check
          %p3517 = pneg %p136
        $region62: #{tpu_custom_call.1} parent=59 // pred_check_branch
          %3519 = sbr.rel (%p3517) target = $region64
        $region63: #{tpu_custom_call.1} parent=59 // pred_region
          %s3520 = sand.u32 %s121, 1
          %s3521 = scalar_lea.sflag [#allocation4], %s3520
          %s3522 = sand.u32 %s121, 1
          %s3523 = smul.addr %s3522, 12
          %s3524 = scalar_lea.vmem [#allocation10], %s3523
          %3525 = dma.done %s3521, 192
        $region64: #{tpu_custom_call.1} parent=59 // pred_fallthru
          _
      $region60: #{tpu_custom_call.1} parent=5 // pred_fallthru
        _
    $region6: #{tpu_custom_call.1} parent=1 // loop_footer
      %s22 = sadd.s32 1, %s18
    $region7: #{tpu_custom_call.1} parent=1 // loop_footer_branch
      %17 = sbr.rel target = $region3
    $region8: #{tpu_custom_call.1} parent=1 // loop_exit
      _
    %3526 = vsyncpa [#allocation3], 1
    %s3527 = scalar_lea.sflag [#allocation3], 1
    %3528 = vsyncpa %s3527, 1
    %3529 = vsyncpa [#allocation6], 1
    %3530 = vsyncpa [#allocation9], 1
    %3531 = vsyncpa [#allocation4], 1
    %s3532 = scalar_lea.sflag [#allocation4], 1
    %3533 = vsyncpa %s3532, 1

</llo_original>
